<compile_context>
chip_gen: v7x
topology: tpu7x:2x2x1
jax: 0.10.0
libtpu: 0.0.40
codegen_flags: <defaults>
</compile_context>

<pallas_src>
import jax
import jax.numpy as jnp
from jax.experimental import pallas as pl
from jax.experimental.pallas import tpu as pltpu


def _upsample_kernel(x_ref, top_ref, bot_ref, w_ref, b_ref, o_ref):
    # x_ref  : (1, TH, W, C)  input rows [m*TH, m*TH + TH)
    # top_ref: (1, 1,  W, C)  input row  m*TH - 1  (clamped; zeroed when m == 0)
    # bot_ref: (1, 1,  W, C)  input row  m*TH + TH (clamped; zeroed when m == last)
    # w_ref  : (4, 4, C, C)   weights as (kh, kw, cin, cout)
    # b_ref  : (1, C)         bias, f32
    # o_ref  : (1, TH, 2, W, 2*C)  (row, row-phase, col, col-phase*C)
    TH = x_ref.shape[1]
    W = x_ref.shape[2]
    C = x_ref.shape[3]
    dt = x_ref.dtype
    m = pl.program_id(1)
    last = pl.num_programs(1) - 1

    xm = x_ref[0]                                   # (TH, W, C)
    top = top_ref[0] * (m > 0).astype(dt)           # zero pad-row above image
    bot = bot_ref[0] * (m < last).astype(dt)        # zero pad-row below image

    # (TH+2, W, C) row window: rows m*TH-1 .. m*TH+TH (edges already zeroed).
    win = jnp.concatenate([top, xm, bot], axis=0)

    # Column-shifted variants (zero at the image's left/right edge) built with
    # XLU rolls + masks instead of wrapper padding / patch concatenation.
    col = jax.lax.broadcasted_iota(jnp.int32, (TH + 2, W, C), 1)
    zero = jnp.zeros_like(win)
    win_m1 = jnp.where(col == 0, zero, pltpu.roll(win, 1, axis=1))      # col w-1
    win_p1 = jnp.where(col == W - 1, zero, pltpu.roll(win, W - 1, axis=1))  # col w+1
    src = {-1: win_m1, 0: win, 1: win_p1}

    bias = b_ref[...]                               # (1, C) f32

    for a in range(2):          # output row phase   (out row = 2*(m*TH+t) + a)
        for b in range(2):      # output column phase (out col = 2*w + b)
            acc = jnp.zeros((TH * W, C), jnp.float32)
            for i in range(2):
                for j in range(2):
                    # Tap (i, j): input row offset (a+i)-1, col offset (b+j)-1,
                    # kernel element (3-a-2i, 3-b-2j).
                    lhs = src[b + j - 1][a + i: a + i + TH].reshape(TH * W, C)
                    acc = acc + jnp.dot(
                        lhs, w_ref[3 - a - 2 * i, 3 - b - 2 * j],
                        preferred_element_type=jnp.float32)
            y = (acc + bias).reshape(TH, W, C).astype(o_ref.dtype)
            o_ref[0, :, a, :, b * C:(b + 1) * C] = y


def _pick_block_rows(H, W, C, itemsize, budget_bytes, prefer_grid_ge2=False):
    """Largest divisor of H whose per-step VMEM footprint fits the budget."""
    # Per block row: in block (x2 buffers) + out block (x2) + window & 2 shifted
    # copies + f32 accumulator slack.
    per_row = W * C * (13 * itemsize + 8)
    fixed = 2 * 16 * C * C * itemsize + 4 * W * C * itemsize + (1 << 20)
    cap = max(1, (budget_bytes - fixed) // per_row)
    best = 1
    for th in range(1, H + 1):
        if H % th != 0 or th > cap:
            continue
        if prefer_grid_ge2 and th == H and H > 1:
            continue  # keep >= 2 grid steps so both v7x TensorCores get work
        best = th
    return best


def upsample_nhwc(x, weight, bias, *, block_rows=None, compute_dtype=None,
                  vmem_budget_bytes=32 * 1024 * 1024):
    """ConvTranspose2d(C, C, k=4, s=2, p=1) forward, NHWC in / NHWC out.

    x:      (B, H, W, C)
    weight: (C, C, 4, 4)   PyTorch ConvTranspose2d layout (Cin, Cout, kH, kW)
    bias:   (C,)
    returns (B, 2H, 2W, C)
    """
    B, H, W, C = x.shape
    assert weight.shape == (C, C, 4, 4) and bias.shape == (C,)

    cdt = jnp.dtype(compute_dtype) if compute_dtype is not None else x.dtype
    x = x.astype(cdt)
    TH = block_rows if block_rows is not None else _pick_block_rows(
        H, W, C, x.dtype.itemsize, vmem_budget_bytes, prefer_grid_ge2=(B == 1))
    assert H % TH == 0, (H, TH)

    wt = jnp.transpose(weight, (2, 3, 0, 1)).astype(cdt)   # (kh, kw, cin, cout)
    b2 = bias.astype(jnp.float32).reshape(1, C)            # bias add stays f32

    out = pl.pallas_call(
        _upsample_kernel,
        out_shape=jax.ShapeDtypeStruct((B, H, 2, W, 2 * C), cdt),
        grid_spec=pltpu.PrefetchScalarGridSpec(
            num_scalar_prefetch=0,
            grid=(B, H // TH),
            in_specs=[
                # Main TH-row block of the (unpadded) input.
                pl.BlockSpec((1, TH, W, C), lambda n, m: (n, m, 0, 0)),
                # 1-row halos: row m*TH-1 and row m*TH+TH, clamped into range
                # (the out-of-image cases are zero-masked inside the kernel).
                pl.BlockSpec((1, 1, W, C),
                             lambda n, m: (n, jnp.maximum(m * TH - 1, 0), 0, 0)),
                pl.BlockSpec((1, 1, W, C),
                             lambda n, m: (n, jnp.minimum(m * TH + TH, H - 1), 0, 0)),
                # Grid-invariant weights and bias (fetched once).
                pl.BlockSpec((4, 4, C, C), lambda n, m: (0, 0, 0, 0)),
                pl.BlockSpec((1, C), lambda n, m: (0, 0)),
            ],
            out_specs=pl.BlockSpec((1, TH, 2, W, 2 * C),
                                   lambda n, m: (n, m, 0, 0, 0)),
        ),
        compiler_params=pltpu.CompilerParams(
            dimension_semantics=("parallel", "parallel"),
            vmem_limit_bytes=48 * 1024 * 1024),
    )(x, x, x, wt, b2)

    # (B, H, 2, W, 2C) -> (B, 2H, 2W, C) is a pure row-major reshape (free):
    # rows interleave as 2h+a, columns as 2w+b, channels stay minor.
    return out.reshape(B, 2 * H, 2 * W, C)


def upsample(x_nchw, weight, bias, **kwargs):
    """PyTorch-interface wrapper: NCHW in / NCHW out.

    The two transposes below are pure layout adapters around the NHWC kernel;
    in a fully-NHWC model they disappear (fuse into adjacent ops).
    """
    x = jnp.transpose(x_nchw, (0, 2, 3, 1))
    y = upsample_nhwc(x, weight, bias, **kwargs)
    return jnp.transpose(y, (0, 3, 1, 2))


def ref_conv_transpose(x_nchw, weight, bias):
    """Pure-JAX reference with PyTorch ConvTranspose2d semantics (NCHW)."""
    w_flip = weight[:, :, ::-1, ::-1]
    w_oihw = jnp.transpose(w_flip, (1, 0, 2, 3))
    y = jax.lax.conv_general_dilated(
        x_nchw, w_oihw,
        window_strides=(1, 1),
        padding=[(2, 2), (2, 2)],        # k - 1 - p = 2
        lhs_dilation=(2, 2),
        rhs_dilation=(1, 1),
        dimension_numbers=("NCHW", "OIHW", "NCHW"))
    return y + bias[None, :, None, None]


if __name__ == "__main__":
    key = jax.random.PRNGKey(0)
    k1, k2 = jax.random.split(key)

    # Config 1: spec-sized demo through the NCHW (PyTorch) interface, with
    # block_rows=8 so the row-halo path (grid=(2,2)) is exercised.
    B, C, H, W = 2, 4, 16, 16
    kx, kw_, kb = jax.random.split(k1, 3)
    x = jax.random.normal(kx, (B, C, H, W), dtype=jnp.float32)
    weight = jax.random.normal(kw_, (C, C, 4, 4), dtype=jnp.float32) * 0.1
    bias = jax.random.normal(kb, (C,), dtype=jnp.float32) * 0.1

    out = jax.block_until_ready(upsample(x, weight, bias, block_rows=8))
    ref = ref_conv_transpose(x, weight, bias)
    assert out.shape == (B, C, 2 * H, 2 * W), out.shape
    err = float(jnp.max(jnp.abs(out - ref)))
    assert jnp.allclose(out, ref, atol=1e-4, rtol=1e-4), err

    # Config 2: NHWC entry point (no layout adapters), B=1 with auto block-row
    # selection (picks TH=6 -> grid (1, 2)), rectangular spatial size.
    B2, C2, H2, W2 = 1, 8, 12, 24
    k2x, k2w, k2b = jax.random.split(k2, 3)
    x2 = jax.random.normal(k2x, (B2, H2, W2, C2), dtype=jnp.float32)
    w2 = jax.random.normal(k2w, (C2, C2, 4, 4), dtype=jnp.float32) * 0.1
    b2 = jax.random.normal(k2b, (C2,), dtype=jnp.float32) * 0.1

    out2 = jax.block_until_ready(upsample_nhwc(x2, w2, b2))
    ref2 = jnp.transpose(
        ref_conv_transpose(jnp.transpose(x2, (0, 3, 1, 2)), w2, b2),
        (0, 2, 3, 1))
    assert out2.shape == (B2, 2 * H2, 2 * W2, C2), out2.shape
    err2 = float(jnp.max(jnp.abs(out2 - ref2)))
    assert jnp.allclose(out2, ref2, atol=1e-4, rtol=1e-4), err2

    print("KERNEL_OK")
</pallas_src>

<mosaic_0001>
module attributes {stable_mosaic.version = 11 : i64} {
  func.func @_upsample_kernel(%arg0: i32, %arg1: i32, %arg2: memref<1x8x16x4xf32, #tpu.memory_space<vmem>>, %arg3: memref<1x1x16x4xf32, #tpu.memory_space<vmem>>, %arg4: memref<1x1x16x4xf32, #tpu.memory_space<vmem>>, %arg5: memref<4x4x4x4xf32, #tpu.memory_space<vmem>>, %arg6: memref<1x4xf32, #tpu.memory_space<vmem>>, %arg7: memref<1x8x2x16x8xf32, #tpu.memory_space<vmem>>) attributes {dimension_semantics = [#tpu.dimension_semantics<parallel>, #tpu.dimension_semantics<parallel>], iteration_bounds = array<i64: 2, 2>, scalar_prefetch = 0 : i64, scratch_operands = 0 : i64, tpu.core_type = #tpu.core_type<tc>, window_params = [{transform_indices = @transform_0, window_bounds = array<i64: 1, 8, 16, 4>}, {transform_indices = @transform_1, window_bounds = array<i64: 1, 1, 16, 4>}, {transform_indices = @transform_2, window_bounds = array<i64: 1, 1, 16, 4>}, {pipeline_mode = #tpu.pipeline_mode<synchronous>, transform_indices = @transform_3, window_bounds = array<i64: 4, 4, 4, 4>}, {pipeline_mode = #tpu.pipeline_mode<synchronous>, transform_indices = @transform_4, window_bounds = array<i64: 1, 4>}, {transform_indices = @transform_5, window_bounds = array<i64: 1, 8, 2, 16, 8>}]} {
    %c0 = arith.constant 0 : index
    %c0_0 = arith.constant 0 : index
    %c0_1 = arith.constant 0 : index
    %c0_2 = arith.constant 0 : index
    %0 = vector.load %arg2[%c0, %c0_0, %c0_1, %c0_2] : memref<1x8x16x4xf32, #tpu.memory_space<vmem>>, vector<1x8x16x4xf32>
    %1 = vector.shape_cast %0 : vector<1x8x16x4xf32> to vector<8x16x4xf32>
    %c0_3 = arith.constant 0 : index
    %c0_4 = arith.constant 0 : index
    %c0_5 = arith.constant 0 : index
    %c0_6 = arith.constant 0 : index
    %2 = vector.load %arg3[%c0_3, %c0_4, %c0_5, %c0_6] : memref<1x1x16x4xf32, #tpu.memory_space<vmem>>, vector<1x1x16x4xf32>
    %3 = vector.shape_cast %2 : vector<1x1x16x4xf32> to vector<1x16x4xf32>
    %c0_i32 = arith.constant 0 : i32
    %4 = arith.cmpi sgt, %arg1, %c0_i32 : i32
    %5 = arith.extui %4 : i1 to i32
    %6 = arith.sitofp %5 : i32 to f32
    %7 = vector.broadcast %6 : f32 to vector<1x16x4xf32>
    %8 = arith.mulf %3, %7 : vector<1x16x4xf32>
    %c0_7 = arith.constant 0 : index
    %c0_8 = arith.constant 0 : index
    %c0_9 = arith.constant 0 : index
    %c0_10 = arith.constant 0 : index
    %9 = vector.load %arg4[%c0_7, %c0_8, %c0_9, %c0_10] : memref<1x1x16x4xf32, #tpu.memory_space<vmem>>, vector<1x1x16x4xf32>
    %10 = vector.shape_cast %9 : vector<1x1x16x4xf32> to vector<1x16x4xf32>
    %c1_i32 = arith.constant 1 : i32
    %11 = arith.cmpi slt, %arg1, %c1_i32 : i32
    %12 = arith.extui %11 : i1 to i32
    %13 = arith.sitofp %12 : i32 to f32
    %14 = vector.broadcast %13 : f32 to vector<1x16x4xf32>
    %15 = arith.mulf %10, %14 : vector<1x16x4xf32>
    %16 = tpu.concatenate %8, %1, %15 in 0 : vector<1x16x4xf32>, vector<8x16x4xf32>, vector<1x16x4xf32> -> vector<10x16x4xf32>
    %17 = tpu.iota {dimensions = array<i32: 1>} : vector<10x16x4xi32>
    %cst = arith.constant 0.000000e+00 : f32
    %18 = vector.broadcast %cst : f32 to vector<10x16x4xf32>
    %c0_i32_11 = arith.constant 0 : i32
    %19 = vector.broadcast %c0_i32_11 : i32 to vector<10x16x4xi32>
    %20 = arith.cmpi eq, %17, %19 : vector<10x16x4xi32>
    %c1_i32_12 = arith.constant 1 : i32
    %21 = tpu.dynamic_rotate %16 by %c1_i32_12 dim 1 : vector<10x16x4xf32>, i32 -> vector<10x16x4xf32>
    %22 = arith.select %20, %18, %21 : vector<10x16x4xi1>, vector<10x16x4xf32>
    %c15_i32 = arith.constant 15 : i32
    %23 = vector.broadcast %c15_i32 : i32 to vector<10x16x4xi32>
    %24 = arith.cmpi eq, %17, %23 : vector<10x16x4xi32>
    %c15_i32_13 = arith.constant 15 : i32
    %25 = tpu.dynamic_rotate %16 by %c15_i32_13 dim 1 : vector<10x16x4xf32>, i32 -> vector<10x16x4xf32>
    %26 = arith.select %24, %18, %25 : vector<10x16x4xi1>, vector<10x16x4xf32>
    %c0_14 = arith.constant 0 : index
    %c0_15 = arith.constant 0 : index
    %27 = vector.load %arg6[%c0_14, %c0_15] : memref<1x4xf32, #tpu.memory_space<vmem>>, vector<1x4xf32>
    %cst_16 = arith.constant 0.000000e+00 : f32
    %28 = vector.broadcast %cst_16 : f32 to vector<128x4xf32>
    %29 = vector.extract_strided_slice %22 {offsets = [0, 0, 0], sizes = [8, 16, 4], strides = [1, 1, 1]} : vector<10x16x4xf32> to vector<8x16x4xf32>
    %30 = vector.shape_cast %29 : vector<8x16x4xf32> to vector<128x4xf32>
    %c3 = arith.constant 3 : index
    %c3_17 = arith.constant 3 : index
    %c0_18 = arith.constant 0 : index
    %c0_19 = arith.constant 0 : index
    %31 = vector.load %arg5[%c3, %c3_17, %c0_18, %c0_19] : memref<4x4x4x4xf32, #tpu.memory_space<vmem>>, vector<1x1x4x4xf32>
    %32 = vector.shape_cast %31 : vector<1x1x4x4xf32> to vector<4x4xf32>
    %cst_20 = arith.constant dense<0.000000e+00> : vector<128x4xf32>
    %33 = tpu.matmul %30, %32, %cst_20 {dimension_numbers = #tpu.dot_dimension_numbers<[1], [0], [0], [1], [0, 0, 1, 1], [], []>} : vector<128x4xf32>, vector<4x4xf32>, vector<128x4xf32> -> vector<128x4xf32>
    %34 = arith.addf %28, %33 : vector<128x4xf32>
    %35 = vector.extract_strided_slice %16 {offsets = [0, 0, 0], sizes = [8, 16, 4], strides = [1, 1, 1]} : vector<10x16x4xf32> to vector<8x16x4xf32>
    %36 = vector.shape_cast %35 : vector<8x16x4xf32> to vector<128x4xf32>
    %c3_21 = arith.constant 3 : index
    %c1 = arith.constant 1 : index
    %c0_22 = arith.constant 0 : index
    %c0_23 = arith.constant 0 : index
    %37 = vector.load %arg5[%c3_21, %c1, %c0_22, %c0_23] : memref<4x4x4x4xf32, #tpu.memory_space<vmem>>, vector<1x1x4x4xf32>
    %38 = vector.shape_cast %37 : vector<1x1x4x4xf32> to vector<4x4xf32>
    %cst_24 = arith.constant dense<0.000000e+00> : vector<128x4xf32>
    %39 = tpu.matmul %36, %38, %cst_24 {dimension_numbers = #tpu.dot_dimension_numbers<[1], [0], [0], [1], [0, 0, 1, 1], [], []>} : vector<128x4xf32>, vector<4x4xf32>, vector<128x4xf32> -> vector<128x4xf32>
    %40 = arith.addf %34, %39 : vector<128x4xf32>
    %41 = vector.extract_strided_slice %22 {offsets = [1, 0, 0], sizes = [8, 16, 4], strides = [1, 1, 1]} : vector<10x16x4xf32> to vector<8x16x4xf32>
    %42 = vector.shape_cast %41 : vector<8x16x4xf32> to vector<128x4xf32>
    %c1_25 = arith.constant 1 : index
    %c3_26 = arith.constant 3 : index
    %c0_27 = arith.constant 0 : index
    %c0_28 = arith.constant 0 : index
    %43 = vector.load %arg5[%c1_25, %c3_26, %c0_27, %c0_28] : memref<4x4x4x4xf32, #tpu.memory_space<vmem>>, vector<1x1x4x4xf32>
    %44 = vector.shape_cast %43 : vector<1x1x4x4xf32> to vector<4x4xf32>
    %cst_29 = arith.constant dense<0.000000e+00> : vector<128x4xf32>
    %45 = tpu.matmul %42, %44, %cst_29 {dimension_numbers = #tpu.dot_dimension_numbers<[1], [0], [0], [1], [0, 0, 1, 1], [], []>} : vector<128x4xf32>, vector<4x4xf32>, vector<128x4xf32> -> vector<128x4xf32>
    %46 = arith.addf %40, %45 : vector<128x4xf32>
    %47 = vector.extract_strided_slice %16 {offsets = [1, 0, 0], sizes = [8, 16, 4], strides = [1, 1, 1]} : vector<10x16x4xf32> to vector<8x16x4xf32>
    %48 = vector.shape_cast %47 : vector<8x16x4xf32> to vector<128x4xf32>
    %c1_30 = arith.constant 1 : index
    %c1_31 = arith.constant 1 : index
    %c0_32 = arith.constant 0 : index
    %c0_33 = arith.constant 0 : index
    %49 = vector.load %arg5[%c1_30, %c1_31, %c0_32, %c0_33] : memref<4x4x4x4xf32, #tpu.memory_space<vmem>>, vector<1x1x4x4xf32>
    %50 = vector.shape_cast %49 : vector<1x1x4x4xf32> to vector<4x4xf32>
    %cst_34 = arith.constant dense<0.000000e+00> : vector<128x4xf32>
    %51 = tpu.matmul %48, %50, %cst_34 {dimension_numbers = #tpu.dot_dimension_numbers<[1], [0], [0], [1], [0, 0, 1, 1], [], []>} : vector<128x4xf32>, vector<4x4xf32>, vector<128x4xf32> -> vector<128x4xf32>
    %52 = arith.addf %46, %51 : vector<128x4xf32>
    %53 = vector.broadcast %27 : vector<1x4xf32> to vector<128x4xf32>
    %54 = arith.addf %52, %53 : vector<128x4xf32>
    %55 = vector.shape_cast %54 : vector<128x4xf32> to vector<8x16x4xf32>
    %c0_35 = arith.constant 0 : index
    %c0_36 = arith.constant 0 : index
    %c0_37 = arith.constant 0 : index
    %c0_38 = arith.constant 0 : index
    %c0_39 = arith.constant 0 : index
    %56 = vector.load %arg7[%c0_35, %c0_36, %c0_37, %c0_38, %c0_39] : memref<1x8x2x16x8xf32, #tpu.memory_space<vmem>>, vector<1x8x1x16x4xf32>
    %57 = vector.shape_cast %56 : vector<1x8x1x16x4xf32> to vector<8x16x4xf32>
    %58 = vector.shape_cast %55 : vector<8x16x4xf32> to vector<1x8x1x16x4xf32>
    tpu.vector_store %arg7[%c0_35, %c0_36, %c0_37, %c0_38, %c0_39], %58 {strides = array<i32>} : memref<1x8x2x16x8xf32, #tpu.memory_space<vmem>>, vector<1x8x1x16x4xf32>,
    %cst_40 = arith.constant 0.000000e+00 : f32
    %59 = vector.broadcast %cst_40 : f32 to vector<128x4xf32>
    %60 = vector.extract_strided_slice %16 {offsets = [0, 0, 0], sizes = [8, 16, 4], strides = [1, 1, 1]} : vector<10x16x4xf32> to vector<8x16x4xf32>
    %61 = vector.shape_cast %60 : vector<8x16x4xf32> to vector<128x4xf32>
    %c3_41 = arith.constant 3 : index
    %c2 = arith.constant 2 : index
    %c0_42 = arith.constant 0 : index
    %c0_43 = arith.constant 0 : index
    %62 = vector.load %arg5[%c3_41, %c2, %c0_42, %c0_43] : memref<4x4x4x4xf32, #tpu.memory_space<vmem>>, vector<1x1x4x4xf32>
    %63 = vector.shape_cast %62 : vector<1x1x4x4xf32> to vector<4x4xf32>
    %cst_44 = arith.constant dense<0.000000e+00> : vector<128x4xf32>
    %64 = tpu.matmul %61, %63, %cst_44 {dimension_numbers = #tpu.dot_dimension_numbers<[1], [0], [0], [1], [0, 0, 1, 1], [], []>} : vector<128x4xf32>, vector<4x4xf32>, vector<128x4xf32> -> vector<128x4xf32>
    %65 = arith.addf %59, %64 : vector<128x4xf32>
    %66 = vector.extract_strided_slice %26 {offsets = [0, 0, 0], sizes = [8, 16, 4], strides = [1, 1, 1]} : vector<10x16x4xf32> to vector<8x16x4xf32>
    %67 = vector.shape_cast %66 : vector<8x16x4xf32> to vector<128x4xf32>
    %c3_45 = arith.constant 3 : index
    %c0_46 = arith.constant 0 : index
    %c0_47 = arith.constant 0 : index
    %c0_48 = arith.constant 0 : index
    %68 = vector.load %arg5[%c3_45, %c0_46, %c0_47, %c0_48] : memref<4x4x4x4xf32, #tpu.memory_space<vmem>>, vector<1x1x4x4xf32>
    %69 = vector.shape_cast %68 : vector<1x1x4x4xf32> to vector<4x4xf32>
    %cst_49 = arith.constant dense<0.000000e+00> : vector<128x4xf32>
    %70 = tpu.matmul %67, %69, %cst_49 {dimension_numbers = #tpu.dot_dimension_numbers<[1], [0], [0], [1], [0, 0, 1, 1], [], []>} : vector<128x4xf32>, vector<4x4xf32>, vector<128x4xf32> -> vector<128x4xf32>
    %71 = arith.addf %65, %70 : vector<128x4xf32>
    %72 = vector.extract_strided_slice %16 {offsets = [1, 0, 0], sizes = [8, 16, 4], strides = [1, 1, 1]} : vector<10x16x4xf32> to vector<8x16x4xf32>
    %73 = vector.shape_cast %72 : vector<8x16x4xf32> to vector<128x4xf32>
    %c1_50 = arith.constant 1 : index
    %c2_51 = arith.constant 2 : index
    %c0_52 = arith.constant 0 : index
    %c0_53 = arith.constant 0 : index
    %74 = vector.load %arg5[%c1_50, %c2_51, %c0_52, %c0_53] : memref<4x4x4x4xf32, #tpu.memory_space<vmem>>, vector<1x1x4x4xf32>
    %75 = vector.shape_cast %74 : vector<1x1x4x4xf32> to vector<4x4xf32>
    %cst_54 = arith.constant dense<0.000000e+00> : vector<128x4xf32>
    %76 = tpu.matmul %73, %75, %cst_54 {dimension_numbers = #tpu.dot_dimension_numbers<[1], [0], [0], [1], [0, 0, 1, 1], [], []>} : vector<128x4xf32>, vector<4x4xf32>, vector<128x4xf32> -> vector<128x4xf32>
    %77 = arith.addf %71, %76 : vector<128x4xf32>
    %78 = vector.extract_strided_slice %26 {offsets = [1, 0, 0], sizes = [8, 16, 4], strides = [1, 1, 1]} : vector<10x16x4xf32> to vector<8x16x4xf32>
    %79 = vector.shape_cast %78 : vector<8x16x4xf32> to vector<128x4xf32>
    %c1_55 = arith.constant 1 : index
    %c0_56 = arith.constant 0 : index
    %c0_57 = arith.constant 0 : index
    %c0_58 = arith.constant 0 : index
    %80 = vector.load %arg5[%c1_55, %c0_56, %c0_57, %c0_58] : memref<4x4x4x4xf32, #tpu.memory_space<vmem>>, vector<1x1x4x4xf32>
    %81 = vector.shape_cast %80 : vector<1x1x4x4xf32> to vector<4x4xf32>
    %cst_59 = arith.constant dense<0.000000e+00> : vector<128x4xf32>
    %82 = tpu.matmul %79, %81, %cst_59 {dimension_numbers = #tpu.dot_dimension_numbers<[1], [0], [0], [1], [0, 0, 1, 1], [], []>} : vector<128x4xf32>, vector<4x4xf32>, vector<128x4xf32> -> vector<128x4xf32>
    %83 = arith.addf %77, %82 : vector<128x4xf32>
    %84 = vector.broadcast %27 : vector<1x4xf32> to vector<128x4xf32>
    %85 = arith.addf %83, %84 : vector<128x4xf32>
    %86 = vector.shape_cast %85 : vector<128x4xf32> to vector<8x16x4xf32>
    %c0_60 = arith.constant 0 : index
    %c0_61 = arith.constant 0 : index
    %c0_62 = arith.constant 0 : index
    %c0_63 = arith.constant 0 : index
    %c4 = arith.constant 4 : index
    %87 = vector.load %arg7[%c0_60, %c0_61, %c0_62, %c0_63, %c4] : memref<1x8x2x16x8xf32, #tpu.memory_space<vmem>>, vector<1x8x1x16x4xf32>
    %88 = vector.shape_cast %87 : vector<1x8x1x16x4xf32> to vector<8x16x4xf32>
    %89 = vector.shape_cast %86 : vector<8x16x4xf32> to vector<1x8x1x16x4xf32>
    tpu.vector_store %arg7[%c0_60, %c0_61, %c0_62, %c0_63, %c4], %89 {strides = array<i32>} : memref<1x8x2x16x8xf32, #tpu.memory_space<vmem>>, vector<1x8x1x16x4xf32>,
    %cst_64 = arith.constant 0.000000e+00 : f32
    %90 = vector.broadcast %cst_64 : f32 to vector<128x4xf32>
    %91 = vector.extract_strided_slice %22 {offsets = [1, 0, 0], sizes = [8, 16, 4], strides = [1, 1, 1]} : vector<10x16x4xf32> to vector<8x16x4xf32>
    %92 = vector.shape_cast %91 : vector<8x16x4xf32> to vector<128x4xf32>
    %c2_65 = arith.constant 2 : index
    %c3_66 = arith.constant 3 : index
    %c0_67 = arith.constant 0 : index
    %c0_68 = arith.constant 0 : index
    %93 = vector.load %arg5[%c2_65, %c3_66, %c0_67, %c0_68] : memref<4x4x4x4xf32, #tpu.memory_space<vmem>>, vector<1x1x4x4xf32>
    %94 = vector.shape_cast %93 : vector<1x1x4x4xf32> to vector<4x4xf32>
    %cst_69 = arith.constant dense<0.000000e+00> : vector<128x4xf32>
    %95 = tpu.matmul %92, %94, %cst_69 {dimension_numbers = #tpu.dot_dimension_numbers<[1], [0], [0], [1], [0, 0, 1, 1], [], []>} : vector<128x4xf32>, vector<4x4xf32>, vector<128x4xf32> -> vector<128x4xf32>
    %96 = arith.addf %90, %95 : vector<128x4xf32>
    %97 = vector.extract_strided_slice %16 {offsets = [1, 0, 0], sizes = [8, 16, 4], strides = [1, 1, 1]} : vector<10x16x4xf32> to vector<8x16x4xf32>
    %98 = vector.shape_cast %97 : vector<8x16x4xf32> to vector<128x4xf32>
    %c2_70 = arith.constant 2 : index
    %c1_71 = arith.constant 1 : index
    %c0_72 = arith.constant 0 : index
    %c0_73 = arith.constant 0 : index
    %99 = vector.load %arg5[%c2_70, %c1_71, %c0_72, %c0_73] : memref<4x4x4x4xf32, #tpu.memory_space<vmem>>, vector<1x1x4x4xf32>
    %100 = vector.shape_cast %99 : vector<1x1x4x4xf32> to vector<4x4xf32>
    %cst_74 = arith.constant dense<0.000000e+00> : vector<128x4xf32>
    %101 = tpu.matmul %98, %100, %cst_74 {dimension_numbers = #tpu.dot_dimension_numbers<[1], [0], [0], [1], [0, 0, 1, 1], [], []>} : vector<128x4xf32>, vector<4x4xf32>, vector<128x4xf32> -> vector<128x4xf32>
    %102 = arith.addf %96, %101 : vector<128x4xf32>
    %103 = vector.extract_strided_slice %22 {offsets = [2, 0, 0], sizes = [8, 16, 4], strides = [1, 1, 1]} : vector<10x16x4xf32> to vector<8x16x4xf32>
    %104 = vector.shape_cast %103 : vector<8x16x4xf32> to vector<128x4xf32>
    %c0_75 = arith.constant 0 : index
    %c3_76 = arith.constant 3 : index
    %c0_77 = arith.constant 0 : index
    %c0_78 = arith.constant 0 : index
    %105 = vector.load %arg5[%c0_75, %c3_76, %c0_77, %c0_78] : memref<4x4x4x4xf32, #tpu.memory_space<vmem>>, vector<1x1x4x4xf32>
    %106 = vector.shape_cast %105 : vector<1x1x4x4xf32> to vector<4x4xf32>
    %cst_79 = arith.constant dense<0.000000e+00> : vector<128x4xf32>
    %107 = tpu.matmul %104, %106, %cst_79 {dimension_numbers = #tpu.dot_dimension_numbers<[1], [0], [0], [1], [0, 0, 1, 1], [], []>} : vector<128x4xf32>, vector<4x4xf32>, vector<128x4xf32> -> vector<128x4xf32>
    %108 = arith.addf %102, %107 : vector<128x4xf32>
    %109 = vector.extract_strided_slice %16 {offsets = [2, 0, 0], sizes = [8, 16, 4], strides = [1, 1, 1]} : vector<10x16x4xf32> to vector<8x16x4xf32>
    %110 = vector.shape_cast %109 : vector<8x16x4xf32> to vector<128x4xf32>
    %c0_80 = arith.constant 0 : index
    %c1_81 = arith.constant 1 : index
    %c0_82 = arith.constant 0 : index
    %c0_83 = arith.constant 0 : index
    %111 = vector.load %arg5[%c0_80, %c1_81, %c0_82, %c0_83] : memref<4x4x4x4xf32, #tpu.memory_space<vmem>>, vector<1x1x4x4xf32>
    %112 = vector.shape_cast %111 : vector<1x1x4x4xf32> to vector<4x4xf32>
    %cst_84 = arith.constant dense<0.000000e+00> : vector<128x4xf32>
    %113 = tpu.matmul %110, %112, %cst_84 {dimension_numbers = #tpu.dot_dimension_numbers<[1], [0], [0], [1], [0, 0, 1, 1], [], []>} : vector<128x4xf32>, vector<4x4xf32>, vector<128x4xf32> -> vector<128x4xf32>
    %114 = arith.addf %108, %113 : vector<128x4xf32>
    %115 = vector.broadcast %27 : vector<1x4xf32> to vector<128x4xf32>
    %116 = arith.addf %114, %115 : vector<128x4xf32>
    %117 = vector.shape_cast %116 : vector<128x4xf32> to vector<8x16x4xf32>
    %c0_85 = arith.constant 0 : index
    %c0_86 = arith.constant 0 : index
    %c1_87 = arith.constant 1 : index
    %c0_88 = arith.constant 0 : index
    %c0_89 = arith.constant 0 : index
    %118 = vector.load %arg7[%c0_85, %c0_86, %c1_87, %c0_88, %c0_89] : memref<1x8x2x16x8xf32, #tpu.memory_space<vmem>>, vector<1x8x1x16x4xf32>
    %119 = vector.shape_cast %118 : vector<1x8x1x16x4xf32> to vector<8x16x4xf32>
    %120 = vector.shape_cast %117 : vector<8x16x4xf32> to vector<1x8x1x16x4xf32>
    tpu.vector_store %arg7[%c0_85, %c0_86, %c1_87, %c0_88, %c0_89], %120 {strides = array<i32>} : memref<1x8x2x16x8xf32, #tpu.memory_space<vmem>>, vector<1x8x1x16x4xf32>,
    %cst_90 = arith.constant 0.000000e+00 : f32
    %121 = vector.broadcast %cst_90 : f32 to vector<128x4xf32>
    %122 = vector.extract_strided_slice %16 {offsets = [1, 0, 0], sizes = [8, 16, 4], strides = [1, 1, 1]} : vector<10x16x4xf32> to vector<8x16x4xf32>
    %123 = vector.shape_cast %122 : vector<8x16x4xf32> to vector<128x4xf32>
    %c2_91 = arith.constant 2 : index
    %c2_92 = arith.constant 2 : index
    %c0_93 = arith.constant 0 : index
    %c0_94 = arith.constant 0 : index
    %124 = vector.load %arg5[%c2_91, %c2_92, %c0_93, %c0_94] : memref<4x4x4x4xf32, #tpu.memory_space<vmem>>, vector<1x1x4x4xf32>
    %125 = vector.shape_cast %124 : vector<1x1x4x4xf32> to vector<4x4xf32>
    %cst_95 = arith.constant dense<0.000000e+00> : vector<128x4xf32>
    %126 = tpu.matmul %123, %125, %cst_95 {dimension_numbers = #tpu.dot_dimension_numbers<[1], [0], [0], [1], [0, 0, 1, 1], [], []>} : vector<128x4xf32>, vector<4x4xf32>, vector<128x4xf32> -> vector<128x4xf32>
    %127 = arith.addf %121, %126 : vector<128x4xf32>
    %128 = vector.extract_strided_slice %26 {offsets = [1, 0, 0], sizes = [8, 16, 4], strides = [1, 1, 1]} : vector<10x16x4xf32> to vector<8x16x4xf32>
    %129 = vector.shape_cast %128 : vector<8x16x4xf32> to vector<128x4xf32>
    %c2_96 = arith.constant 2 : index
    %c0_97 = arith.constant 0 : index
    %c0_98 = arith.constant 0 : index
    %c0_99 = arith.constant 0 : index
    %130 = vector.load %arg5[%c2_96, %c0_97, %c0_98, %c0_99] : memref<4x4x4x4xf32, #tpu.memory_space<vmem>>, vector<1x1x4x4xf32>
    %131 = vector.shape_cast %130 : vector<1x1x4x4xf32> to vector<4x4xf32>
    %cst_100 = arith.constant dense<0.000000e+00> : vector<128x4xf32>
    %132 = tpu.matmul %129, %131, %cst_100 {dimension_numbers = #tpu.dot_dimension_numbers<[1], [0], [0], [1], [0, 0, 1, 1], [], []>} : vector<128x4xf32>, vector<4x4xf32>, vector<128x4xf32> -> vector<128x4xf32>
    %133 = arith.addf %127, %132 : vector<128x4xf32>
    %134 = vector.extract_strided_slice %16 {offsets = [2, 0, 0], sizes = [8, 16, 4], strides = [1, 1, 1]} : vector<10x16x4xf32> to vector<8x16x4xf32>
    %135 = vector.shape_cast %134 : vector<8x16x4xf32> to vector<128x4xf32>
    %c0_101 = arith.constant 0 : index
    %c2_102 = arith.constant 2 : index
    %c0_103 = arith.constant 0 : index
    %c0_104 = arith.constant 0 : index
    %136 = vector.load %arg5[%c0_101, %c2_102, %c0_103, %c0_104] : memref<4x4x4x4xf32, #tpu.memory_space<vmem>>, vector<1x1x4x4xf32>
    %137 = vector.shape_cast %136 : vector<1x1x4x4xf32> to vector<4x4xf32>
    %cst_105 = arith.constant dense<0.000000e+00> : vector<128x4xf32>
    %138 = tpu.matmul %135, %137, %cst_105 {dimension_numbers = #tpu.dot_dimension_numbers<[1], [0], [0], [1], [0, 0, 1, 1], [], []>} : vector<128x4xf32>, vector<4x4xf32>, vector<128x4xf32> -> vector<128x4xf32>
    %139 = arith.addf %133, %138 : vector<128x4xf32>
    %140 = vector.extract_strided_slice %26 {offsets = [2, 0, 0], sizes = [8, 16, 4], strides = [1, 1, 1]} : vector<10x16x4xf32> to vector<8x16x4xf32>
    %141 = vector.shape_cast %140 : vector<8x16x4xf32> to vector<128x4xf32>
    %c0_106 = arith.constant 0 : index
    %c0_107 = arith.constant 0 : index
    %c0_108 = arith.constant 0 : index
    %c0_109 = arith.constant 0 : index
    %142 = vector.load %arg5[%c0_106, %c0_107, %c0_108, %c0_109] : memref<4x4x4x4xf32, #tpu.memory_space<vmem>>, vector<1x1x4x4xf32>
    %143 = vector.shape_cast %142 : vector<1x1x4x4xf32> to vector<4x4xf32>
    %cst_110 = arith.constant dense<0.000000e+00> : vector<128x4xf32>
    %144 = tpu.matmul %141, %143, %cst_110 {dimension_numbers = #tpu.dot_dimension_numbers<[1], [0], [0], [1], [0, 0, 1, 1], [], []>} : vector<128x4xf32>, vector<4x4xf32>, vector<128x4xf32> -> vector<128x4xf32>
    %145 = arith.addf %139, %144 : vector<128x4xf32>
    %146 = vector.broadcast %27 : vector<1x4xf32> to vector<128x4xf32>
    %147 = arith.addf %145, %146 : vector<128x4xf32>
    %148 = vector.shape_cast %147 : vector<128x4xf32> to vector<8x16x4xf32>
    %c0_111 = arith.constant 0 : index
    %c0_112 = arith.constant 0 : index
    %c1_113 = arith.constant 1 : index
    %c0_114 = arith.constant 0 : index
    %c4_115 = arith.constant 4 : index
    %149 = vector.load %arg7[%c0_111, %c0_112, %c1_113, %c0_114, %c4_115] : memref<1x8x2x16x8xf32, #tpu.memory_space<vmem>>, vector<1x8x1x16x4xf32>
    %150 = vector.shape_cast %149 : vector<1x8x1x16x4xf32> to vector<8x16x4xf32>
    %151 = vector.shape_cast %148 : vector<8x16x4xf32> to vector<1x8x1x16x4xf32>
    tpu.vector_store %arg7[%c0_111, %c0_112, %c1_113, %c0_114, %c4_115], %151 {strides = array<i32>} : memref<1x8x2x16x8xf32, #tpu.memory_space<vmem>>, vector<1x8x1x16x4xf32>,
    return
  }
  func.func @transform_0(%arg0: i32, %arg1: i32) -> (i32, i32, i32, i32) {
    %c0_i32 = arith.constant 0 : i32
    %c0_i32_0 = arith.constant 0 : i32
    %c0_i32_1 = arith.constant 0 : i32
    return %arg0, %arg1, %c0_i32, %c0_i32_0 : i32, i32, i32, i32
  }
  func.func @transform_1(%arg0: i32, %arg1: i32) -> (i32, i32, i32, i32) {
    %c8_i32 = arith.constant 8 : i32
    %0 = arith.muli %arg1, %c8_i32 : i32
    %c1_i32 = arith.constant 1 : i32
    %1 = arith.subi %0, %c1_i32 : i32
    %c0_i32 = arith.constant 0 : i32
    %2 = arith.maxsi %1, %c0_i32 : i32
    %c0_i32_0 = arith.constant 0 : i32
    %c0_i32_1 = arith.constant 0 : i32
    %c0_i32_2 = arith.constant 0 : i32
    return %arg0, %2, %c0_i32_0, %c0_i32_1 : i32, i32, i32, i32
  }
  func.func @transform_2(%arg0: i32, %arg1: i32) -> (i32, i32, i32, i32) {
    %c8_i32 = arith.constant 8 : i32
    %0 = arith.muli %arg1, %c8_i32 : i32
    %c8_i32_0 = arith.constant 8 : i32
    %1 = arith.addi %0, %c8_i32_0 : i32
    %c15_i32 = arith.constant 15 : i32
    %2 = arith.minsi %1, %c15_i32 : i32
    %c0_i32 = arith.constant 0 : i32
    %c0_i32_1 = arith.constant 0 : i32
    %c0_i32_2 = arith.constant 0 : i32
    return %arg0, %2, %c0_i32, %c0_i32_1 : i32, i32, i32, i32
  }
  func.func @transform_3(%arg0: i32, %arg1: i32) -> (i32, i32, i32, i32) {
    %c0_i32 = arith.constant 0 : i32
    %c0_i32_0 = arith.constant 0 : i32
    %c0_i32_1 = arith.constant 0 : i32
    %c0_i32_2 = arith.constant 0 : i32
    %c0_i32_3 = arith.constant 0 : i32
    return %c0_i32, %c0_i32_0, %c0_i32_1, %c0_i32_2 : i32, i32, i32, i32
  }
  func.func @transform_4(%arg0: i32, %arg1: i32) -> (i32, i32) {
    %c0_i32 = arith.constant 0 : i32
    %c0_i32_0 = arith.constant 0 : i32
    %c0_i32_1 = arith.constant 0 : i32
    return %c0_i32, %c0_i32_0 : i32, i32
  }
  func.func @transform_5(%arg0: i32, %arg1: i32) -> (i32, i32, i32, i32, i32) {
    %c0_i32 = arith.constant 0 : i32
    %c0_i32_0 = arith.constant 0 : i32
    %c0_i32_1 = arith.constant 0 : i32
    %c0_i32_2 = arith.constant 0 : i32
    return %arg0, %arg1, %c0_i32, %c0_i32_0, %c0_i32_1 : i32, i32, i32, i32, i32
  }
}

</mosaic_0001>

<llo_original>
// kernel: tpu_custom_call.1
$region0: #{tpu_custom_call.1}
  #allocation0 [shape = 'u32[]', space=smem, size = 0x4, offset = 0x4, fixed_abs, tag = 'smem constant byte address 0x4 - core index']
  #allocation1 [shape = 'u32[144,128]{1,0:T(1,128)}', space=vmem, size = 0x12000, scoped, tag = 'internal scratch']
  %s0 = inlined_call_operand.vmem [shape: f32[2,16,16,4], index: 0, kind: input, shape index: {}]
  %s1 = inlined_call_operand.vmem [shape: f32[2,16,16,4], index: 1, kind: input, shape index: {}]
  %s2 = inlined_call_operand.vmem [shape: f32[2,16,16,4], index: 2, kind: input, shape index: {}]
  %s3 = inlined_call_operand.vmem [shape: f32[4,4,4,4], index: 3, kind: input, shape index: {}]
  %s4 = inlined_call_operand.vmem [shape: f32[1,4], index: 4, kind: input, shape index: {}]
  %s5 = inlined_call_operand.vmem [shape: f32[2,16,2,16,8], index: 5, kind: output, shape index: {}]
  %s6 = sld [smem:[#allocation0]]
  $region53: #{tpu_custom_call.1} parent=0
    _
  %s8 = ssub.s32 1, %s6
  %s9 = scalar_select 0, %s8, %s6
  loop: start=0, step=1, limit=6
  $region2: #{tpu_custom_call.1} parent=0 // loop_pre_header
    _
  $region3: #{tpu_custom_call.1} parent=0 // loop_header
    %s11 = sphi 0, %s15
    %p12 = scmp.ge.s32.totalorder %s11, 6
    %s18 = sphi 0, %s30
    %s19 = sphi 0, %s26
    %s20 = sphi 0, %s18
    %s21 = sphi 0, %s19
    %s22 = sphi 0, %s20
    %s23 = sphi 0, %s21
    %s35 = sphi 0, %s37
    %s38 = sphi 0, %s35
    %s39 = sphi 0, %s38
    %s55 = sphi 0, %s39
    %s71 = sphi 0, %s73
    %s74 = sphi 0, %s71
    %s75 = sphi 0, %s74
    %s91 = sphi 0, %s75
    %s107 = sphi 0, %s109
    %s110 = sphi 0, %s107
    %s111 = sphi 0, %s110
    %s127 = sphi 0, %s111
    %s131 = sphi 0, %s131
    %s133 = sphi 0, %s131
    %s134 = sphi 0, %s133
    %s148 = sphi 0, %s134
    %s152 = sphi 0, %s152
    %s154 = sphi 0, %s152
    %s155 = sphi 0, %s154
    %s169 = sphi 0, %s155
    %s177 = sphi 0, %s179
    %s180 = sphi 0, %s177
    %s181 = sphi 0, %s180
    %s197 = sphi 0, %s181
  $region4: #{tpu_custom_call.1} parent=0 // loop_header_branch
    %14 = sbr.rel (%p12) target = $region8
  $region5: #{tpu_custom_call.1} parent=0 // loop_body
    %s16 = ssub.s32 %s11, 1
    %s17 = ssub.s32 %s11, 2
    %s24 = sadd.s32 1, %s19
    %p25 = scmp.ge.s32.totalorder %s24, 2
    %s26 = scalar_select %p25, 0, %s24
    %s27 = sadd.s32 1, %s18
    %s28 = scalar_select %p25, %s27, %s18
    %p29 = scmp.ge.s32.totalorder %s28, 2
    %s30 = scalar_select %p29, 0, %s28
    %s31 = ssub.s32 %s18, %s30
    %s32 = ssub.s32 %s19, %s26
    %s33 = sor.u32 %s31, %s32
    %p34 = scmp.eq.s32.totalorder %s33, 0
    %s36 = sadd.s32 %s35, 1
    %s37 = scalar_select %p34, %s35, %s36
    %p40 = pneg %p34
    %p41 = scmp.eq.s32.totalorder %s11, 3
    %p42 = por %p40, %p41
    %p43 = scmp.ne.s32.totalorder %s35, %s38
    %p44 = scmp.eq.s32.totalorder %s11, 0
    %p45 = por %p43, %p44
    %p46 = scmp.ne.s32.totalorder %s35, %s38
    %p47 = scmp.eq.s32.totalorder %s16, 3
    %p48 = por %p46, %p47
    %p49 = scmp.ne.s32.totalorder %s38, %s39
    %p50 = scmp.eq.s32.totalorder %s16, 0
    %p51 = por %p49, %p50
    %p52 = scmp.ne.s32.totalorder %s38, %s39
    %p53 = scmp.eq.s32.totalorder %s17, 3
    %p54 = por %p52, %p53
    %p56 = scmp.ne.s32.totalorder %s39, %s55
    %p57 = scmp.eq.s32.totalorder %s17, 0
    %p58 = por %p56, %p57
    %s59 = smul.u32 %s19, 8
    %s60 = ssub.s32 %s59, 1
    %p61 = scmp.gt.s32.totalorder %s60, 0
    %s62 = scalar_select %p61, %s60, 0
    %s63 = smul.u32 %s26, 8
    %s64 = ssub.s32 %s63, 1
    %p65 = scmp.gt.s32.totalorder %s64, 0
    %s66 = scalar_select %p65, %s64, 0
    %s67 = ssub.s32 %s18, %s30
    %s68 = ssub.s32 %s62, %s66
    %s69 = sor.u32 %s67, %s68
    %p70 = scmp.eq.s32.totalorder %s69, 0
    %s72 = sadd.s32 %s71, 1
    %s73 = scalar_select %p70, %s71, %s72
    %p76 = pneg %p70
    %p77 = scmp.eq.s32.totalorder %s11, 3
    %p78 = por %p76, %p77
    %p79 = scmp.ne.s32.totalorder %s71, %s74
    %p80 = scmp.eq.s32.totalorder %s11, 0
    %p81 = por %p79, %p80
    %p82 = scmp.ne.s32.totalorder %s71, %s74
    %p83 = scmp.eq.s32.totalorder %s16, 3
    %p84 = por %p82, %p83
    %p85 = scmp.ne.s32.totalorder %s74, %s75
    %p86 = scmp.eq.s32.totalorder %s16, 0
    %p87 = por %p85, %p86
    %p88 = scmp.ne.s32.totalorder %s74, %s75
    %p89 = scmp.eq.s32.totalorder %s17, 3
    %p90 = por %p88, %p89
    %p92 = scmp.ne.s32.totalorder %s75, %s91
    %p93 = scmp.eq.s32.totalorder %s17, 0
    %p94 = por %p92, %p93
    %s95 = smul.u32 %s19, 8
    %s96 = sadd.s32 %s95, 8
    %p97 = scmp.lt.s32.totalorder %s96, 15
    %s98 = scalar_select %p97, %s96, 15
    %s99 = smul.u32 %s26, 8
    %s100 = sadd.s32 %s99, 8
    %p101 = scmp.lt.s32.totalorder %s100, 15
    %s102 = scalar_select %p101, %s100, 15
    %s103 = ssub.s32 %s18, %s30
    %s104 = ssub.s32 %s98, %s102
    %s105 = sor.u32 %s103, %s104
    %p106 = scmp.eq.s32.totalorder %s105, 0
    %s108 = sadd.s32 %s107, 1
    %s109 = scalar_select %p106, %s107, %s108
    %p112 = pneg %p106
    %p113 = scmp.eq.s32.totalorder %s11, 3
    %p114 = por %p112, %p113
    %p115 = scmp.ne.s32.totalorder %s107, %s110
    %p116 = scmp.eq.s32.totalorder %s11, 0
    %p117 = por %p115, %p116
    %p118 = scmp.ne.s32.totalorder %s107, %s110
    %p119 = scmp.eq.s32.totalorder %s16, 3
    %p120 = por %p118, %p119
    %p121 = scmp.ne.s32.totalorder %s110, %s111
    %p122 = scmp.eq.s32.totalorder %s16, 0
    %p123 = por %p121, %p122
    %p124 = scmp.ne.s32.totalorder %s110, %s111
    %p125 = scmp.eq.s32.totalorder %s17, 3
    %p126 = por %p124, %p125
    %p128 = scmp.ne.s32.totalorder %s111, %s127
    %p129 = scmp.eq.s32.totalorder %s17, 0
    %p130 = por %p128, %p129
    %s132 = sadd.s32 %s131, 1
    %p135 = scmp.eq.s32.totalorder %s11, 3
    %p136 = scmp.ne.s32.totalorder %s131, %s133
    %p137 = scmp.eq.s32.totalorder %s11, 0
    %p138 = por %p136, %p137
    %p139 = scmp.ne.s32.totalorder %s131, %s133
    %p140 = scmp.eq.s32.totalorder %s16, 3
    %p141 = por %p139, %p140
    %p142 = scmp.ne.s32.totalorder %s133, %s134
    %p143 = scmp.eq.s32.totalorder %s16, 0
    %p144 = por %p142, %p143
    %p145 = scmp.ne.s32.totalorder %s133, %s134
    %p146 = scmp.eq.s32.totalorder %s17, 3
    %p147 = por %p145, %p146
    %p149 = scmp.ne.s32.totalorder %s134, %s148
    %p150 = scmp.eq.s32.totalorder %s17, 0
    %p151 = por %p149, %p150
    %s153 = sadd.s32 %s152, 1
    %p156 = scmp.eq.s32.totalorder %s11, 3
    %p157 = scmp.ne.s32.totalorder %s152, %s154
    %p158 = scmp.eq.s32.totalorder %s11, 0
    %p159 = por %p157, %p158
    %p160 = scmp.ne.s32.totalorder %s152, %s154
    %p161 = scmp.eq.s32.totalorder %s16, 3
    %p162 = por %p160, %p161
    %p163 = scmp.ne.s32.totalorder %s154, %s155
    %p164 = scmp.eq.s32.totalorder %s16, 0
    %p165 = por %p163, %p164
    %p166 = scmp.ne.s32.totalorder %s154, %s155
    %p167 = scmp.eq.s32.totalorder %s17, 3
    %p168 = por %p166, %p167
    %p170 = scmp.ne.s32.totalorder %s155, %s169
    %p171 = scmp.eq.s32.totalorder %s17, 0
    %p172 = por %p170, %p171
    %s173 = ssub.s32 %s18, %s30
    %s174 = ssub.s32 %s19, %s26
    %s175 = sor.u32 %s173, %s174
    %p176 = scmp.eq.s32.totalorder %s175, 0
    %s178 = sadd.s32 %s177, 1
    %s179 = scalar_select %p176, %s177, %s178
    %p182 = pneg %p176
    %p183 = scmp.eq.s32.totalorder %s11, 3
    %p184 = por %p182, %p183
    %p185 = scmp.ne.s32.totalorder %s177, %s180
    %p186 = scmp.eq.s32.totalorder %s11, 0
    %p187 = por %p185, %p186
    %p188 = scmp.ne.s32.totalorder %s177, %s180
    %p189 = scmp.eq.s32.totalorder %s16, 3
    %p190 = por %p188, %p189
    %p191 = scmp.ne.s32.totalorder %s180, %s181
    %p192 = scmp.eq.s32.totalorder %s16, 0
    %p193 = por %p191, %p192
    %p194 = scmp.ne.s32.totalorder %s180, %s181
    %p195 = scmp.eq.s32.totalorder %s17, 3
    %p196 = por %p194, %p195
    %p198 = scmp.ne.s32.totalorder %s181, %s197
    %p199 = scmp.eq.s32.totalorder %s17, 0
    %p200 = por %p198, %p199
    %p201 = scmp.le.s32.totalorder 1, %s11
    %p202 = scmp.lt.s32.totalorder %s11, 5
    %p203 = pnand %p201, %p202
    %p204 = pneg %p203
    // Predicated region
    $region9: #{tpu_custom_call.1} parent=5 // pred_check
      _
    $region10: #{tpu_custom_call.1} parent=5 // pred_check_branch
      %206 = sbr.rel (%p203) target = $region12
    $region11: #{tpu_custom_call.1} parent=5 // pred_region
      %s207 = ssub.s32 %s11, 1
      // Predicated region
      $region13: #{tpu_custom_call.1} parent=11 // pred_check
        %p208 = pneg %p144
      $region14: #{tpu_custom_call.1} parent=11 // pred_check_branch
        %210 = sbr.rel (%p208) target = $region16
      $region15: #{tpu_custom_call.1} parent=11 // pred_region
        _
      $region16: #{tpu_custom_call.1} parent=11 // pred_fallthru
        _
      // Predicated region
      $region17: #{tpu_custom_call.1} parent=11 // pred_check
        %p211 = pneg %p165
      $region18: #{tpu_custom_call.1} parent=11 // pred_check_branch
        %213 = sbr.rel (%p211) target = $region20
      $region19: #{tpu_custom_call.1} parent=11 // pred_region
        _
      $region20: #{tpu_custom_call.1} parent=11 // pred_fallthru
        _
    $region12: #{tpu_custom_call.1} parent=5 // pred_fallthru
      _
    %p214 = scmp.lt.s32.totalorder %s11, 4
    // Predicated region
    $region21: #{tpu_custom_call.1} parent=5 // pred_check
      %p215 = pneg %p214
    $region22: #{tpu_custom_call.1} parent=5 // pred_check_branch
      %217 = sbr.rel (%p215) target = $region24
    $region23: #{tpu_custom_call.1} parent=5 // pred_region
      // Predicated region
      $region25: #{tpu_custom_call.1} parent=23 // pred_check
        %p218 = pneg %p45
      $region26: #{tpu_custom_call.1} parent=23 // pred_check_branch
        %220 = sbr.rel (%p218) target = $region28
      $region27: #{tpu_custom_call.1} parent=23 // pred_region
        %s221 = smul.u32 8, %s19
        %p222 = scmp.lt.s32.totalorder %s18, 1
        %s223 = scalar_select %p222, %s18, 1
        %p224 = scmp.lt.s32.totalorder %s221, 15
        %s225 = scalar_select %p224, %s221, 15
        %s226 = smul.addr %s225, 2
        %s227 = smul.addr %s223, 32
        %s228 = sadd.s32 %s226, %s227
        %s229 = smul.addr %s228, 8
        %s230 = scalar_lea.vmem %s0, %s229
        %s231 = smul.u32 8, %s19
      $region28: #{tpu_custom_call.1} parent=23 // pred_fallthru
        _
      // Predicated region
      $region29: #{tpu_custom_call.1} parent=23 // pred_check
        %p232 = pneg %p81
      $region30: #{tpu_custom_call.1} parent=23 // pred_check_branch
        %234 = sbr.rel (%p232) target = $region32
      $region31: #{tpu_custom_call.1} parent=23 // pred_region
        %s235 = smul.u32 %s19, 8
        %s236 = ssub.s32 %s235, 1
        %p237 = scmp.gt.s32.totalorder %s236, 0
        %s238 = scalar_select %p237, %s236, 0
        %p239 = scmp.lt.s32.totalorder %s18, 1
        %s240 = scalar_select %p239, %s18, 1
        %p241 = scmp.lt.s32.totalorder %s238, 15
        %s242 = scalar_select %p241, %s238, 15
        %s243 = smul.addr %s242, 2
        %s244 = smul.addr %s240, 32
        %s245 = sadd.s32 %s243, %s244
        %s246 = smul.addr %s245, 8
        %s247 = scalar_lea.vmem %s1, %s246
        %s248 = smul.u32 %s19, 8
        %s249 = ssub.s32 %s248, 1
        %p250 = scmp.gt.s32.totalorder %s249, 0
        %s251 = scalar_select %p250, %s249, 0
      $region32: #{tpu_custom_call.1} parent=23 // pred_fallthru
        _
      // Predicated region
      $region33: #{tpu_custom_call.1} parent=23 // pred_check
        %p252 = pneg %p117
      $region34: #{tpu_custom_call.1} parent=23 // pred_check_branch
        %254 = sbr.rel (%p252) target = $region36
      $region35: #{tpu_custom_call.1} parent=23 // pred_region
        %s255 = smul.u32 %s19, 8
        %s256 = sadd.s32 %s255, 8
        %p257 = scmp.lt.s32.totalorder %s256, 15
        %s258 = scalar_select %p257, %s256, 15
        %p259 = scmp.lt.s32.totalorder %s18, 1
        %s260 = scalar_select %p259, %s18, 1
        %p261 = scmp.lt.s32.totalorder %s258, 15
        %s262 = scalar_select %p261, %s258, 15
        %s263 = smul.addr %s262, 2
        %s264 = smul.addr %s260, 32
        %s265 = sadd.s32 %s263, %s264
        %s266 = smul.addr %s265, 8
        %s267 = scalar_lea.vmem %s2, %s266
        %s268 = smul.u32 %s19, 8
        %s269 = sadd.s32 %s268, 8
        %p270 = scmp.lt.s32.totalorder %s269, 15
        %s271 = scalar_select %p270, %s269, 15
      $region36: #{tpu_custom_call.1} parent=23 // pred_fallthru
        _
    $region24: #{tpu_custom_call.1} parent=5 // pred_fallthru
      _
    %p272 = scmp.le.s32.totalorder 1, %s11
    %p273 = scmp.lt.s32.totalorder %s11, 5
    %p274 = pnand %p272, %p273
    %p275 = pneg %p274
    // Predicated region
    $region37: #{tpu_custom_call.1} parent=5 // pred_check
      _
    $region38: #{tpu_custom_call.1} parent=5 // pred_check_branch
      %277 = sbr.rel (%p274) target = $region40
    $region39: #{tpu_custom_call.1} parent=5 // pred_region
      %s278 = ssub.s32 %s11, 1
      %s279 = smul.u32 8, %s21
      %p280 = scmp.lt.s32.totalorder %s20, 1
      %s281 = scalar_select %p280, %s20, 1
      %p282 = scmp.lt.s32.totalorder %s279, 15
      %s283 = scalar_select %p282, %s279, 15
      %s284 = smul.addr %s283, 2
      %s285 = smul.addr %s281, 32
      %s286 = sadd.s32 %s284, %s285
      %s287 = smul.addr %s286, 8
      %s288 = scalar_lea.vmem %s0, %s287
      %p289 = pneg %p51
      %p290 = pneg %p48
      %s291 = smul.u32 %s21, 8
      %s292 = ssub.s32 %s291, 1
      %p293 = scmp.gt.s32.totalorder %s292, 0
      %s294 = scalar_select %p293, %s292, 0
      %p295 = scmp.lt.s32.totalorder %s20, 1
      %s296 = scalar_select %p295, %s20, 1
      %p297 = scmp.lt.s32.totalorder %s294, 15
      %s298 = scalar_select %p297, %s294, 15
      %s299 = smul.addr %s298, 2
      %s300 = smul.addr %s296, 32
      %s301 = sadd.s32 %s299, %s300
      %s302 = smul.addr %s301, 8
      %s303 = scalar_lea.vmem %s1, %s302
      %p304 = pneg %p87
      %p305 = pneg %p84
      %s306 = smul.u32 %s21, 8
      %s307 = sadd.s32 %s306, 8
      %p308 = scmp.lt.s32.totalorder %s307, 15
      %s309 = scalar_select %p308, %s307, 15
      %p310 = scmp.lt.s32.totalorder %s20, 1
      %s311 = scalar_select %p310, %s20, 1
      %p312 = scmp.lt.s32.totalorder %s309, 15
      %s313 = scalar_select %p312, %s309, 15
      %s314 = smul.addr %s313, 2
      %s315 = smul.addr %s311, 32
      %s316 = sadd.s32 %s314, %s315
      %s317 = smul.addr %s316, 8
      %s318 = scalar_lea.vmem %s2, %s317
      %p319 = pneg %p123
      %p320 = pneg %p120
      %p321 = pneg %p144
      %p322 = pneg %p141
      %p323 = pneg %p165
      %p324 = pneg %p162
      %p325 = pneg %p193
      %p326 = pneg %p190
      %s327 = smul.u32 8, %s21
      %p328 = scmp.lt.s32.totalorder %s20, 1
      %s329 = scalar_select %p328, %s20, 1
      %p330 = scmp.lt.s32.totalorder %s327, 15
      %s331 = scalar_select %p330, %s327, 15
      %s332 = smul.addr %s331, 4
      %s333 = smul.addr %s329, 64
      %s334 = sadd.s32 %s332, %s333
      %s335 = smul.addr %s334, 8
      %s336 = scalar_lea.vmem %s5, %s335
      %s337 = smul.u32 8, %s21
      %p338 = scmp.lt.s32.totalorder %s20, 1
      %s339 = scalar_select %p338, %s20, 1
      %p340 = scmp.lt.s32.totalorder %s337, 15
      %s341 = scalar_select %p340, %s337, 15
      %s342 = smul.addr %s341, 2
      %s343 = smul.addr %s339, 32
      %s344 = sadd.s32 %s342, %s343
      %s345 = smul.addr %s344, 8
      %s346 = scalar_lea.vmem %s0, %s345
      %s347 = smul.u32 8, %s21
      %s348 = smul.u32 %s21, 8
      %s349 = ssub.s32 %s348, 1
      %p350 = scmp.gt.s32.totalorder %s349, 0
      %s351 = scalar_select %p350, %s349, 0
      %p352 = scmp.lt.s32.totalorder %s20, 1
      %s353 = scalar_select %p352, %s20, 1
      %p354 = scmp.lt.s32.totalorder %s351, 15
      %s355 = scalar_select %p354, %s351, 15
      %s356 = smul.addr %s355, 2
      %s357 = smul.addr %s353, 32
      %s358 = sadd.s32 %s356, %s357
      %s359 = smul.addr %s358, 8
      %s360 = scalar_lea.vmem %s1, %s359
      %s361 = smul.u32 %s21, 8
      %s362 = ssub.s32 %s361, 1
      %p363 = scmp.gt.s32.totalorder %s362, 0
      %s364 = scalar_select %p363, %s362, 0
      %s365 = smul.u32 %s21, 8
      %s366 = sadd.s32 %s365, 8
      %p367 = scmp.lt.s32.totalorder %s366, 15
      %s368 = scalar_select %p367, %s366, 15
      %p369 = scmp.lt.s32.totalorder %s20, 1
      %s370 = scalar_select %p369, %s20, 1
      %p371 = scmp.lt.s32.totalorder %s368, 15
      %s372 = scalar_select %p371, %s368, 15
      %s373 = smul.addr %s372, 2
      %s374 = smul.addr %s370, 32
      %s375 = sadd.s32 %s373, %s374
      %s376 = smul.addr %s375, 8
      %s377 = scalar_lea.vmem %s2, %s376
      %s378 = smul.u32 %s21, 8
      %s379 = sadd.s32 %s378, 8
      %p380 = scmp.lt.s32.totalorder %s379, 15
      %s381 = scalar_select %p380, %s379, 15
      %s382 = smul.u32 8, %s21
      %p383 = scmp.lt.s32.totalorder %s20, 1
      %s384 = scalar_select %p383, %s20, 1
      %p385 = scmp.lt.s32.totalorder %s382, 15
      %s386 = scalar_select %p385, %s382, 15
      %s387 = smul.addr %s386, 4
      %s388 = smul.addr %s384, 64
      %s389 = sadd.s32 %s387, %s388
      %s390 = smul.addr %s389, 8
      %s391 = scalar_lea.vmem %s5, %s390
      %s392 = smul.u32 8, %s21
      %v393 = vld [vmem:[%s346] sm:$0xff]
      %v394 = vld [vmem:[%s346 + $0x8] sm:$0xff]
      %v395 = vld [vmem:[%s346 + $0x10] sm:$0xff]
      %v396 = vld [vmem:[%s346 + $0x18] sm:$0xff]
      %v397 = vld [vmem:[%s346 + $0x20] sm:$0xff]
      %v398 = vld [vmem:[%s346 + $0x28] sm:$0xff]
      %v399 = vld [vmem:[%s346 + $0x30] sm:$0xff]
      %v400 = vld [vmem:[%s346 + $0x38] sm:$0xff]
      %v401 = vld [vmem:[%s346 + $0x40] sm:$0xff]
      %v402 = vld [vmem:[%s346 + $0x48] sm:$0xff]
      %v403 = vld [vmem:[%s346 + $0x50] sm:$0xff]
      %v404 = vld [vmem:[%s346 + $0x58] sm:$0xff]
      %v405 = vld [vmem:[%s346 + $0x60] sm:$0xff]
      %v406 = vld [vmem:[%s346 + $0x68] sm:$0xff]
      %v407 = vld [vmem:[%s346 + $0x70] sm:$0xff]
      %v408 = vld [vmem:[%s346 + $0x78] sm:$0xff]
      %v409 = vld [vmem:[%s360] sm:$0xff]
      %v410 = vld [vmem:[%s360 + $0x8] sm:$0xff]
      %p411 = scmp.gt.s32.totalorder %s21, 0
      %s412 = scalar_select %p411, 1, 0
      %s413 = scvt.s32.f32 %s412
      %v414 = vstv %s413
      %v415 = vmul.f32 %v409, %v414
      %v416 = vmul.f32 %v410, %v414
      %v417 = vld [vmem:[%s377] sm:$0xff]
      %v418 = vld [vmem:[%s377 + $0x8] sm:$0xff]
      %p419 = scmp.lt.s32.totalorder %s21, 1
      %s420 = scalar_select %p419, 1, 0
      %s421 = scvt.s32.f32 %s420
      %v422 = vstv %s421
      %v423 = vmul.f32 %v417, %v422
      %v424 = vmul.f32 %v418, %v422
      %v425 = vlaneseq
      %v426 = vshrl.u32 %v425, 7
      %v427 = vadd.s32 %v426, 8
      %vm428 = vcmp.eq.s32.totalorder %v426, 0
      %vm429 = vcmp.eq.s32.totalorder %v427, 0
      %v430 = vrot.slane %v415, 7
      %v431 = vrot.slane %v393, 7
      %v432 = vrot.slane %v395, 7
      %v433 = vrot.slane %v397, 7
      %v434 = vrot.slane %v399, 7
      %v435 = vrot.slane %v401, 7
      %v436 = vrot.slane %v403, 7
      %v437 = vrot.slane %v405, 7
      %v438 = vrot.slane %v407, 7
      %v439 = vrot.slane %v423, 7
      %v440 = vrot.slane %v416, 7
      %v441 = vrot.slane %v394, 7
      %v442 = vrot.slane %v396, 7
      %v443 = vrot.slane %v398, 7
      %v444 = vrot.slane %v400, 7
      %v445 = vrot.slane %v402, 7
      %v446 = vrot.slane %v404, 7
      %v447 = vrot.slane %v406, 7
      %v448 = vrot.slane %v408, 7
      %v449 = vrot.slane %v424, 7
      %vm450 = vcmp.lt.s32.totalorder %v426, 1
      %v451 = vsel %vm450, %v430, %v440
      %v452 = vsel %vm450, %v431, %v441
      %v453 = vsel %vm450, %v432, %v442
      %v454 = vsel %vm450, %v433, %v443
      %v455 = vsel %vm450, %v434, %v444
      %v456 = vsel %vm450, %v435, %v445
      %v457 = vsel %vm450, %v436, %v446
      %v458 = vsel %vm450, %v437, %v447
      %v459 = vsel %vm450, %v438, %v448
      %v460 = vsel %vm450, %v439, %v449
      %v461 = vsel %vm450, %v440, %v430
      %v462 = vsel %vm450, %v441, %v431
      %v463 = vsel %vm450, %v442, %v432
      %v464 = vsel %vm450, %v443, %v433
      %v465 = vsel %vm450, %v444, %v434
      %v466 = vsel %vm450, %v445, %v435
      %v467 = vsel %vm450, %v446, %v436
      %v468 = vsel %vm450, %v447, %v437
      %v469 = vsel %vm450, %v448, %v438
      %v470 = vsel %vm450, %v449, %v439
      %v471 = vsel %vm428, 0.0, %v461
      %v472 = vsel %vm429, 0.0, %v451
      %v473 = vsel %vm428, 0.0, %v462
      %v474 = vsel %vm429, 0.0, %v452
      %v475 = vsel %vm428, 0.0, %v463
      %v476 = vsel %vm429, 0.0, %v453
      %v477 = vsel %vm428, 0.0, %v464
      %v478 = vsel %vm429, 0.0, %v454
      %v479 = vsel %vm428, 0.0, %v465
      %v480 = vsel %vm429, 0.0, %v455
      %v481 = vsel %vm428, 0.0, %v466
      %v482 = vsel %vm429, 0.0, %v456
      %v483 = vsel %vm428, 0.0, %v467
      %v484 = vsel %vm429, 0.0, %v457
      %v485 = vsel %vm428, 0.0, %v468
      %v486 = vsel %vm429, 0.0, %v458
      %v487 = vsel %vm428, 0.0, %v469
      %v488 = vsel %vm429, 0.0, %v459
      %v489 = vsel %vm428, 0.0, %v470
      %v490 = vsel %vm429, 0.0, %v460
      %vm491 = vcmp.eq.s32.totalorder %v426, 15
      %vm492 = vcmp.eq.s32.totalorder %v427, 15
      %v493 = vrot.slane %v415, 1
      %v494 = vrot.slane %v393, 1
      %v495 = vrot.slane %v395, 1
      %v496 = vrot.slane %v397, 1
      %v497 = vrot.slane %v399, 1
      %v498 = vrot.slane %v401, 1
      %v499 = vrot.slane %v403, 1
      %v500 = vrot.slane %v405, 1
      %v501 = vrot.slane %v407, 1
      %v502 = vrot.slane %v423, 1
      %v503 = vrot.slane %v416, 1
      %v504 = vrot.slane %v394, 1
      %v505 = vrot.slane %v396, 1
      %v506 = vrot.slane %v398, 1
      %v507 = vrot.slane %v400, 1
      %v508 = vrot.slane %v402, 1
      %v509 = vrot.slane %v404, 1
      %v510 = vrot.slane %v406, 1
      %v511 = vrot.slane %v408, 1
      %v512 = vrot.slane %v424, 1
      %vm513 = vcmp.lt.s32.totalorder %v426, 7
      %v514 = vsel %vm513, %v493, %v503
      %v515 = vsel %vm513, %v494, %v504
      %v516 = vsel %vm513, %v495, %v505
      %v517 = vsel %vm513, %v496, %v506
      %v518 = vsel %vm513, %v497, %v507
      %v519 = vsel %vm513, %v498, %v508
      %v520 = vsel %vm513, %v499, %v509
      %v521 = vsel %vm513, %v500, %v510
      %v522 = vsel %vm513, %v501, %v511
      %v523 = vsel %vm513, %v502, %v512
      %v524 = vsel %vm513, %v503, %v493
      %v525 = vsel %vm513, %v504, %v494
      %v526 = vsel %vm513, %v505, %v495
      %v527 = vsel %vm513, %v506, %v496
      %v528 = vsel %vm513, %v507, %v497
      %v529 = vsel %vm513, %v508, %v498
      %v530 = vsel %vm513, %v509, %v499
      %v531 = vsel %vm513, %v510, %v500
      %v532 = vsel %vm513, %v511, %v501
      %v533 = vsel %vm513, %v512, %v502
      %v534 = vsel %vm491, 0.0, %v514
      %v535 = vsel %vm492, 0.0, %v524
      %v536 = vsel %vm491, 0.0, %v515
      %v537 = vsel %vm492, 0.0, %v525
      %v538 = vsel %vm491, 0.0, %v516
      %v539 = vsel %vm492, 0.0, %v526
      %v540 = vsel %vm491, 0.0, %v517
      %v541 = vsel %vm492, 0.0, %v527
      %v542 = vsel %vm491, 0.0, %v518
      %v543 = vsel %vm492, 0.0, %v528
      %v544 = vsel %vm491, 0.0, %v519
      %v545 = vsel %vm492, 0.0, %v529
      %v546 = vsel %vm491, 0.0, %v520
      %v547 = vsel %vm492, 0.0, %v530
      %v548 = vsel %vm491, 0.0, %v521
      %v549 = vsel %vm492, 0.0, %v531
      %v550 = vsel %vm491, 0.0, %v522
      %v551 = vsel %vm492, 0.0, %v532
      %v552 = vsel %vm491, 0.0, %v523
      %v553 = vsel %vm492, 0.0, %v533
      %v554 = vld [vmem:[%s4] sm:$0x1]
      %s555 = scalar_lea.vmem %s3, 60
      %v556 = vld [vmem:[%s555] sm:$0xf]
      %s557 = scalar_lea.vmem %s3, 52
      %v558 = vld [vmem:[%s557] sm:$0xf]
      %vm559 = vcmask 31744
      %v561 = vsel %vm559, %v415, 0
      %v564 = vsel %vm559, %v416, 0
      %v567 = vsel %vm559, %v393, 0
      %v570 = vsel %vm559, %v394, 0
      %v573 = vsel %vm559, %v395, 0
      %v576 = vsel %vm559, %v396, 0
      %v579 = vsel %vm559, %v397, 0
      %v582 = vsel %vm559, %v398, 0
      %v585 = vsel %vm559, %v399, 0
      %v588 = vsel %vm559, %v400, 0
      %v591 = vsel %vm559, %v401, 0
      %v594 = vsel %vm559, %v402, 0
      %v597 = vsel %vm559, %v403, 0
      %v600 = vsel %vm559, %v404, 0
      %v603 = vsel %vm559, %v405, 0
      %v606 = vsel %vm559, %v406, 0
      %vm608 = vcmask 1043456
      %v610 = vsel %vm608, %v558, 0
      %612 = vmatprep.subr.mxu0 0.0
      %613 = vmatpush1.msra.mxu0 %v610
      %614 = vmatprep.subr.mxu0 0.0
      %615 = vmatpush1.msra.mxu0 0.0
      %616 = vmatprep.subr.mxu0 0.0
      %617 = vmatpush1.msra.mxu0 0.0
      %618 = vmatprep.subr.mxu0 0.0
      %619 = vmatpush1.msra.mxu0 0.0
      %620 = vmatprep.subr.mxu0 0.0
      %621 = vmatpush1.msra.mxu0 0.0
      %622 = vmatprep.subr.mxu0 0.0
      %623 = vmatpush1.msra.mxu0 0.0
      %624 = vmatprep.subr.mxu0 0.0
      %625 = vmatpush1.msra.mxu0 0.0
      %626 = vmatprep.subr.mxu0 0.0
      %627 = vmatpush1.msra.mxu0 0.0
      %628 = vmatprep.subr.mxu0 0.0
      %629 = vmatpush1.msra.mxu0 0.0
      %630 = vmatprep.subr.mxu0 0.0
      %631 = vmatpush1.msra.mxu0 0.0
      %632 = vmatprep.subr.mxu0 0.0
      %633 = vmatpush1.msra.mxu0 0.0
      %634 = vmatprep.subr.mxu0 0.0
      %635 = vmatpush1.msra.mxu0 0.0
      %636 = vmatprep.subr.mxu0 0.0
      %637 = vmatpush1.msra.mxu0 0.0
      %638 = vmatprep.subr.mxu0 0.0
      %639 = vmatpush1.msra.mxu0 0.0
      %640 = vmatprep.subr.mxu0 0.0
      %641 = vmatpush1.msra.mxu0 0.0
      %642 = vmatprep.subr.mxu0 0.0
      %643 = vmatpush1.msra.mxu0 0.0
      %644 = vmatprep.subr.mxu0 0.0
      %645 = vmatpush1.msra.mxu0 0.0
      %646 = vmatprep.subr.mxu0 0.0
      %647 = vmatpush1.msra.mxu0 0.0
      %648 = vmatprep.subr.mxu0 0.0
      %649 = vmatpush1.msra.mxu0 0.0
      %650 = vmatprep.subr.mxu0 0.0
      %651 = vmatpush1.msra.mxu0 0.0
      %652 = vmatprep.subr.mxu0 0.0
      %653 = vmatpush1.msra.mxu0 0.0
      %654 = vmatprep.subr.mxu0 0.0
      %655 = vmatpush1.msra.mxu0 0.0
      %656 = vmatprep.subr.mxu0 0.0
      %657 = vmatpush1.msra.mxu0 0.0
      %658 = vmatprep.subr.mxu0 0.0
      %659 = vmatpush1.msra.mxu0 0.0
      %660 = vmatprep.subr.mxu0 0.0
      %661 = vmatpush1.msra.mxu0 0.0
      %662 = vmatprep.subr.mxu0 0.0
      %663 = vmatpush1.msra.mxu0 0.0
      %664 = vmatprep.subr.mxu0 0.0
      %665 = vmatpush1.msra.mxu0 0.0
      %666 = vmatprep.subr.mxu0 0.0
      %667 = vmatpush1.msra.mxu0 0.0
      %668 = vmatprep.subr.mxu0 0.0
      %669 = vmatpush1.msra.mxu0 0.0
      %670 = vmatprep.subr.mxu0 0.0
      %671 = vmatpush1.msra.mxu0 0.0
      %672 = vmatprep.subr.mxu0 0.0
      %673 = vmatpush1.msra.mxu0 0.0
      %674 = vmatprep.subr.mxu0 0.0
      %675 = vmatpush1.msra.mxu0 0.0
      %676 = vmatprep.mubr.f32.mxu0 0.0
      %677 = vmatmul.mubr.f32.gmra.mrb[0].mxu0 %v561
      %v678 = vpop.f32.mrb[0].mxu0
      %v679 = vadd.f32 0.0, %v678
      %v680 = vpop.f32.mrb[0].mxu0
      %681 = vmatprep.mubr.f32.mxu0 0.0
      %682 = vmatmul.mubr.f32.gmra.mrb[0].mxu0 %v564
      %v683 = vpop.f32.mrb[0].mxu0
      %v684 = vadd.f32 0.0, %v683
      %v685 = vpop.f32.mrb[0].mxu0
      %686 = vmatprep.mubr.f32.mxu0 0.0
      %687 = vmatmul.mubr.f32.gmra.mrb[0].mxu0 %v567
      %v688 = vpop.f32.mrb[0].mxu0
      %v689 = vadd.f32 0.0, %v688
      %v690 = vpop.f32.mrb[0].mxu0
      %691 = vmatprep.mubr.f32.mxu0 0.0
      %692 = vmatmul.mubr.f32.gmra.mrb[0].mxu0 %v570
      %v693 = vpop.f32.mrb[0].mxu0
      %v694 = vadd.f32 0.0, %v693
      %v695 = vpop.f32.mrb[0].mxu0
      %696 = vmatprep.mubr.f32.mxu0 0.0
      %697 = vmatmul.mubr.f32.gmra.mrb[0].mxu0 %v573
      %v698 = vpop.f32.mrb[0].mxu0
      %v699 = vadd.f32 0.0, %v698
      %v700 = vpop.f32.mrb[0].mxu0
      %701 = vmatprep.mubr.f32.mxu0 0.0
      %702 = vmatmul.mubr.f32.gmra.mrb[0].mxu0 %v576
      %v703 = vpop.f32.mrb[0].mxu0
      %v704 = vadd.f32 0.0, %v703
      %v705 = vpop.f32.mrb[0].mxu0
      %706 = vmatprep.mubr.f32.mxu0 0.0
      %707 = vmatmul.mubr.f32.gmra.mrb[0].mxu0 %v579
      %v708 = vpop.f32.mrb[0].mxu0
      %v709 = vadd.f32 0.0, %v708
      %v710 = vpop.f32.mrb[0].mxu0
      %711 = vmatprep.mubr.f32.mxu0 0.0
      %712 = vmatmul.mubr.f32.gmra.mrb[0].mxu0 %v582
      %v713 = vpop.f32.mrb[0].mxu0
      %v714 = vadd.f32 0.0, %v713
      %v715 = vpop.f32.mrb[0].mxu0
      %716 = vmatprep.mubr.f32.mxu0 0.0
      %717 = vmatmul.mubr.f32.gmra.mrb[0].mxu0 %v585
      %v718 = vpop.f32.mrb[0].mxu0
      %v719 = vadd.f32 0.0, %v718
      %v720 = vpop.f32.mrb[0].mxu0
      %721 = vmatprep.mubr.f32.mxu0 0.0
      %722 = vmatmul.mubr.f32.gmra.mrb[0].mxu0 %v588
      %v723 = vpop.f32.mrb[0].mxu0
      %v724 = vadd.f32 0.0, %v723
      %v725 = vpop.f32.mrb[0].mxu0
      %726 = vmatprep.mubr.f32.mxu0 0.0
      %727 = vmatmul.mubr.f32.gmra.mrb[0].mxu0 %v591
      %v728 = vpop.f32.mrb[0].mxu0
      %v729 = vadd.f32 0.0, %v728
      %v730 = vpop.f32.mrb[0].mxu0
      %731 = vmatprep.mubr.f32.mxu0 0.0
      %732 = vmatmul.mubr.f32.gmra.mrb[0].mxu0 %v594
      %v733 = vpop.f32.mrb[0].mxu0
      %v734 = vadd.f32 0.0, %v733
      %v735 = vpop.f32.mrb[0].mxu0
      %736 = vmatprep.mubr.f32.mxu0 0.0
      %737 = vmatmul.mubr.f32.gmra.mrb[0].mxu0 %v597
      %v738 = vpop.f32.mrb[0].mxu0
      %v739 = vadd.f32 0.0, %v738
      %v740 = vpop.f32.mrb[0].mxu0
      %741 = vmatprep.mubr.f32.mxu0 0.0
      %742 = vmatmul.mubr.f32.gmra.mrb[0].mxu0 %v600
      %v743 = vpop.f32.mrb[0].mxu0
      %v744 = vadd.f32 0.0, %v743
      %v745 = vpop.f32.mrb[0].mxu0
      %746 = vmatprep.mubr.f32.mxu0 0.0
      %747 = vmatmul.mubr.f32.gmra.mrb[0].mxu0 %v603
      %v748 = vpop.f32.mrb[0].mxu0
      %v749 = vadd.f32 0.0, %v748
      %v750 = vpop.f32.mrb[0].mxu0
      %751 = vmatprep.mubr.f32.mxu0 0.0
      %752 = vmatmul.mubr.f32.gmra.mrb[0].mxu0 %v606
      %v753 = vpop.f32.mrb[0].mxu0
      %v754 = vadd.f32 0.0, %v753
      %v755 = vpop.f32.mrb[0].mxu0
      %756 = vdwg.mxu0
      %v758 = vsel %vm559, %v471, 0
      %v761 = vsel %vm559, %v472, 0
      %v764 = vsel %vm559, %v473, 0
      %v767 = vsel %vm559, %v474, 0
      %v770 = vsel %vm559, %v475, 0
      %v773 = vsel %vm559, %v476, 0
      %v776 = vsel %vm559, %v477, 0
      %v779 = vsel %vm559, %v478, 0
      %v782 = vsel %vm559, %v479, 0
      %v785 = vsel %vm559, %v480, 0
      %v788 = vsel %vm559, %v481, 0
      %v791 = vsel %vm559, %v482, 0
      %v794 = vsel %vm559, %v483, 0
      %v797 = vsel %vm559, %v484, 0
      %v800 = vsel %vm559, %v485, 0
      %v803 = vsel %vm559, %v486, 0
      %v806 = vsel %vm608, %v556, 0
      %808 = vmatprep.subr.mxu0 0.0
      %809 = vmatpush1.msra.mxu0 %v806
      %810 = vmatprep.subr.mxu0 0.0
      %811 = vmatpush1.msra.mxu0 0.0
      %812 = vmatprep.subr.mxu0 0.0
      %813 = vmatpush1.msra.mxu0 0.0
      %814 = vmatprep.subr.mxu0 0.0
      %815 = vmatpush1.msra.mxu0 0.0
      %816 = vmatprep.subr.mxu0 0.0
      %817 = vmatpush1.msra.mxu0 0.0
      %818 = vmatprep.subr.mxu0 0.0
      %819 = vmatpush1.msra.mxu0 0.0
      %820 = vmatprep.subr.mxu0 0.0
      %821 = vmatpush1.msra.mxu0 0.0
      %822 = vmatprep.subr.mxu0 0.0
      %823 = vmatpush1.msra.mxu0 0.0
      %824 = vmatprep.subr.mxu0 0.0
      %825 = vmatpush1.msra.mxu0 0.0
      %826 = vmatprep.subr.mxu0 0.0
      %827 = vmatpush1.msra.mxu0 0.0
      %828 = vmatprep.subr.mxu0 0.0
      %829 = vmatpush1.msra.mxu0 0.0
      %830 = vmatprep.subr.mxu0 0.0
      %831 = vmatpush1.msra.mxu0 0.0
      %832 = vmatprep.subr.mxu0 0.0
      %833 = vmatpush1.msra.mxu0 0.0
      %834 = vmatprep.subr.mxu0 0.0
      %835 = vmatpush1.msra.mxu0 0.0
      %836 = vmatprep.subr.mxu0 0.0
      %837 = vmatpush1.msra.mxu0 0.0
      %838 = vmatprep.subr.mxu0 0.0
      %839 = vmatpush1.msra.mxu0 0.0
      %840 = vmatprep.subr.mxu0 0.0
      %841 = vmatpush1.msra.mxu0 0.0
      %842 = vmatprep.subr.mxu0 0.0
      %843 = vmatpush1.msra.mxu0 0.0
      %844 = vmatprep.subr.mxu0 0.0
      %845 = vmatpush1.msra.mxu0 0.0
      %846 = vmatprep.subr.mxu0 0.0
      %847 = vmatpush1.msra.mxu0 0.0
      %848 = vmatprep.subr.mxu0 0.0
      %849 = vmatpush1.msra.mxu0 0.0
      %850 = vmatprep.subr.mxu0 0.0
      %851 = vmatpush1.msra.mxu0 0.0
      %852 = vmatprep.subr.mxu0 0.0
      %853 = vmatpush1.msra.mxu0 0.0
      %854 = vmatprep.subr.mxu0 0.0
      %855 = vmatpush1.msra.mxu0 0.0
      %856 = vmatprep.subr.mxu0 0.0
      %857 = vmatpush1.msra.mxu0 0.0
      %858 = vmatprep.subr.mxu0 0.0
      %859 = vmatpush1.msra.mxu0 0.0
      %860 = vmatprep.subr.mxu0 0.0
      %861 = vmatpush1.msra.mxu0 0.0
      %862 = vmatprep.subr.mxu0 0.0
      %863 = vmatpush1.msra.mxu0 0.0
      %864 = vmatprep.subr.mxu0 0.0
      %865 = vmatpush1.msra.mxu0 0.0
      %866 = vmatprep.subr.mxu0 0.0
      %867 = vmatpush1.msra.mxu0 0.0
      %868 = vmatprep.subr.mxu0 0.0
      %869 = vmatpush1.msra.mxu0 0.0
      %870 = vmatprep.subr.mxu0 0.0
      %871 = vmatpush1.msra.mxu0 0.0
      %872 = vmatprep.mubr.f32.mxu0 0.0
      %873 = vmatmul.mubr.f32.gmra.mrb[0].mxu0 %v758
      %v874 = vpop.f32.mrb[0].mxu0
      %v875 = vadd.f32 %v679, %v874
      %v876 = vpop.f32.mrb[0].mxu0
      %877 = vmatprep.mubr.f32.mxu0 0.0
      %878 = vmatmul.mubr.f32.gmra.mrb[0].mxu0 %v761
      %v879 = vpop.f32.mrb[0].mxu0
      %v880 = vadd.f32 %v684, %v879
      %v881 = vpop.f32.mrb[0].mxu0
      %882 = vmatprep.mubr.f32.mxu0 0.0
      %883 = vmatmul.mubr.f32.gmra.mrb[0].mxu0 %v764
      %v884 = vpop.f32.mrb[0].mxu0
      %v885 = vadd.f32 %v689, %v884
      %v886 = vpop.f32.mrb[0].mxu0
      %887 = vmatprep.mubr.f32.mxu0 0.0
      %888 = vmatmul.mubr.f32.gmra.mrb[0].mxu0 %v767
      %v889 = vpop.f32.mrb[0].mxu0
      %v890 = vadd.f32 %v694, %v889
      %v891 = vpop.f32.mrb[0].mxu0
      %892 = vmatprep.mubr.f32.mxu0 0.0
      %893 = vmatmul.mubr.f32.gmra.mrb[0].mxu0 %v770
      %v894 = vpop.f32.mrb[0].mxu0
      %v895 = vadd.f32 %v699, %v894
      %v896 = vpop.f32.mrb[0].mxu0
      %897 = vmatprep.mubr.f32.mxu0 0.0
      %898 = vmatmul.mubr.f32.gmra.mrb[0].mxu0 %v773
      %v899 = vpop.f32.mrb[0].mxu0
      %v900 = vadd.f32 %v704, %v899
      %v901 = vpop.f32.mrb[0].mxu0
      %902 = vmatprep.mubr.f32.mxu0 0.0
      %903 = vmatmul.mubr.f32.gmra.mrb[0].mxu0 %v776
      %v904 = vpop.f32.mrb[0].mxu0
      %v905 = vadd.f32 %v709, %v904
      %v906 = vpop.f32.mrb[0].mxu0
      %907 = vmatprep.mubr.f32.mxu0 0.0
      %908 = vmatmul.mubr.f32.gmra.mrb[0].mxu0 %v779
      %v909 = vpop.f32.mrb[0].mxu0
      %v910 = vadd.f32 %v714, %v909
      %v911 = vpop.f32.mrb[0].mxu0
      %912 = vmatprep.mubr.f32.mxu0 0.0
      %913 = vmatmul.mubr.f32.gmra.mrb[0].mxu0 %v782
      %v914 = vpop.f32.mrb[0].mxu0
      %v915 = vadd.f32 %v719, %v914
      %v916 = vpop.f32.mrb[0].mxu0
      %917 = vmatprep.mubr.f32.mxu0 0.0
      %918 = vmatmul.mubr.f32.gmra.mrb[0].mxu0 %v785
      %v919 = vpop.f32.mrb[0].mxu0
      %v920 = vadd.f32 %v724, %v919
      %v921 = vpop.f32.mrb[0].mxu0
      %922 = vmatprep.mubr.f32.mxu0 0.0
      %923 = vmatmul.mubr.f32.gmra.mrb[0].mxu0 %v788
      %v924 = vpop.f32.mrb[0].mxu0
      %v925 = vadd.f32 %v729, %v924
      %v926 = vpop.f32.mrb[0].mxu0
      %927 = vmatprep.mubr.f32.mxu0 0.0
      %928 = vmatmul.mubr.f32.gmra.mrb[0].mxu0 %v791
      %v929 = vpop.f32.mrb[0].mxu0
      %v930 = vadd.f32 %v734, %v929
      %v931 = vpop.f32.mrb[0].mxu0
      %932 = vmatprep.mubr.f32.mxu0 0.0
      %933 = vmatmul.mubr.f32.gmra.mrb[0].mxu0 %v794
      %v934 = vpop.f32.mrb[0].mxu0
      %v935 = vadd.f32 %v739, %v934
      %v936 = vpop.f32.mrb[0].mxu0
      %937 = vmatprep.mubr.f32.mxu0 0.0
      %938 = vmatmul.mubr.f32.gmra.mrb[0].mxu0 %v797
      %v939 = vpop.f32.mrb[0].mxu0
      %v940 = vadd.f32 %v744, %v939
      %v941 = vpop.f32.mrb[0].mxu0
      %942 = vmatprep.mubr.f32.mxu0 0.0
      %943 = vmatmul.mubr.f32.gmra.mrb[0].mxu0 %v800
      %v944 = vpop.f32.mrb[0].mxu0
      %v945 = vadd.f32 %v749, %v944
      %v946 = vpop.f32.mrb[0].mxu0
      %947 = vmatprep.mubr.f32.mxu0 0.0
      %948 = vmatmul.mubr.f32.gmra.mrb[0].mxu0 %v803
      %v949 = vpop.f32.mrb[0].mxu0
      %v950 = vadd.f32 %v754, %v949
      %v951 = vpop.f32.mrb[0].mxu0
      %952 = vdwg.mxu0
      %s953 = scalar_lea.vmem %s3, 28
      %v954 = vld [vmem:[%s953] sm:$0xf]
      %v956 = vsel %vm559, %v487, 0
      %v959 = vsel %vm559, %v488, 0
      %v962 = vsel %vm608, %v954, 0
      %964 = vmatprep.subr.mxu0 0.0
      %965 = vmatpush1.msra.mxu0 %v962
      %966 = vmatprep.subr.mxu0 0.0
      %967 = vmatpush1.msra.mxu0 0.0
      %968 = vmatprep.subr.mxu0 0.0
      %969 = vmatpush1.msra.mxu0 0.0
      %970 = vmatprep.subr.mxu0 0.0
      %971 = vmatpush1.msra.mxu0 0.0
      %972 = vmatprep.subr.mxu0 0.0
      %973 = vmatpush1.msra.mxu0 0.0
      %974 = vmatprep.subr.mxu0 0.0
      %975 = vmatpush1.msra.mxu0 0.0
      %976 = vmatprep.subr.mxu0 0.0
      %977 = vmatpush1.msra.mxu0 0.0
      %978 = vmatprep.subr.mxu0 0.0
      %979 = vmatpush1.msra.mxu0 0.0
      %980 = vmatprep.subr.mxu0 0.0
      %981 = vmatpush1.msra.mxu0 0.0
      %982 = vmatprep.subr.mxu0 0.0
      %983 = vmatpush1.msra.mxu0 0.0
      %984 = vmatprep.subr.mxu0 0.0
      %985 = vmatpush1.msra.mxu0 0.0
      %986 = vmatprep.subr.mxu0 0.0
      %987 = vmatpush1.msra.mxu0 0.0
      %988 = vmatprep.subr.mxu0 0.0
      %989 = vmatpush1.msra.mxu0 0.0
      %990 = vmatprep.subr.mxu0 0.0
      %991 = vmatpush1.msra.mxu0 0.0
      %992 = vmatprep.subr.mxu0 0.0
      %993 = vmatpush1.msra.mxu0 0.0
      %994 = vmatprep.subr.mxu0 0.0
      %995 = vmatpush1.msra.mxu0 0.0
      %996 = vmatprep.subr.mxu0 0.0
      %997 = vmatpush1.msra.mxu0 0.0
      %998 = vmatprep.subr.mxu0 0.0
      %999 = vmatpush1.msra.mxu0 0.0
      %1000 = vmatprep.subr.mxu0 0.0
      %1001 = vmatpush1.msra.mxu0 0.0
      %1002 = vmatprep.subr.mxu0 0.0
      %1003 = vmatpush1.msra.mxu0 0.0
      %1004 = vmatprep.subr.mxu0 0.0
      %1005 = vmatpush1.msra.mxu0 0.0
      %1006 = vmatprep.subr.mxu0 0.0
      %1007 = vmatpush1.msra.mxu0 0.0
      %1008 = vmatprep.subr.mxu0 0.0
      %1009 = vmatpush1.msra.mxu0 0.0
      %1010 = vmatprep.subr.mxu0 0.0
      %1011 = vmatpush1.msra.mxu0 0.0
      %1012 = vmatprep.subr.mxu0 0.0
      %1013 = vmatpush1.msra.mxu0 0.0
      %1014 = vmatprep.subr.mxu0 0.0
      %1015 = vmatpush1.msra.mxu0 0.0
      %1016 = vmatprep.subr.mxu0 0.0
      %1017 = vmatpush1.msra.mxu0 0.0
      %1018 = vmatprep.subr.mxu0 0.0
      %1019 = vmatpush1.msra.mxu0 0.0
      %1020 = vmatprep.subr.mxu0 0.0
      %1021 = vmatpush1.msra.mxu0 0.0
      %1022 = vmatprep.subr.mxu0 0.0
      %1023 = vmatpush1.msra.mxu0 0.0
      %1024 = vmatprep.subr.mxu0 0.0
      %1025 = vmatpush1.msra.mxu0 0.0
      %1026 = vmatprep.subr.mxu0 0.0
      %1027 = vmatpush1.msra.mxu0 0.0
      %1028 = vmatprep.mubr.f32.mxu0 0.0
      %1029 = vmatmul.mubr.f32.gmra.mrb[0].mxu0 %v764
      %v1030 = vpop.f32.mrb[0].mxu0
      %v1031 = vadd.f32 0.0, %v1030
      %v1032 = vpop.f32.mrb[0].mxu0
      %1033 = vmatprep.mubr.f32.mxu0 0.0
      %1034 = vmatmul.mubr.f32.gmra.mrb[0].mxu0 %v767
      %v1035 = vpop.f32.mrb[0].mxu0
      %v1036 = vadd.f32 0.0, %v1035
      %v1037 = vpop.f32.mrb[0].mxu0
      %1038 = vmatprep.mubr.f32.mxu0 0.0
      %1039 = vmatmul.mubr.f32.gmra.mrb[0].mxu0 %v770
      %v1040 = vpop.f32.mrb[0].mxu0
      %v1041 = vadd.f32 0.0, %v1040
      %v1042 = vpop.f32.mrb[0].mxu0
      %1043 = vmatprep.mubr.f32.mxu0 0.0
      %1044 = vmatmul.mubr.f32.gmra.mrb[0].mxu0 %v773
      %v1045 = vpop.f32.mrb[0].mxu0
      %v1046 = vadd.f32 0.0, %v1045
      %v1047 = vpop.f32.mrb[0].mxu0
      %1048 = vmatprep.mubr.f32.mxu0 0.0
      %1049 = vmatmul.mubr.f32.gmra.mrb[0].mxu0 %v776
      %v1050 = vpop.f32.mrb[0].mxu0
      %v1051 = vadd.f32 0.0, %v1050
      %v1052 = vpop.f32.mrb[0].mxu0
      %1053 = vmatprep.mubr.f32.mxu0 0.0
      %1054 = vmatmul.mubr.f32.gmra.mrb[0].mxu0 %v779
      %v1055 = vpop.f32.mrb[0].mxu0
      %v1056 = vadd.f32 0.0, %v1055
      %v1057 = vpop.f32.mrb[0].mxu0
      %1058 = vmatprep.mubr.f32.mxu0 0.0
      %1059 = vmatmul.mubr.f32.gmra.mrb[0].mxu0 %v782
      %v1060 = vpop.f32.mrb[0].mxu0
      %v1061 = vadd.f32 0.0, %v1060
      %v1062 = vpop.f32.mrb[0].mxu0
      %1063 = vmatprep.mubr.f32.mxu0 0.0
      %1064 = vmatmul.mubr.f32.gmra.mrb[0].mxu0 %v785
      %v1065 = vpop.f32.mrb[0].mxu0
      %v1066 = vadd.f32 0.0, %v1065
      %v1067 = vpop.f32.mrb[0].mxu0
      %1068 = vmatprep.mubr.f32.mxu0 0.0
      %1069 = vmatmul.mubr.f32.gmra.mrb[0].mxu0 %v788
      %v1070 = vpop.f32.mrb[0].mxu0
      %v1071 = vadd.f32 0.0, %v1070
      %v1072 = vpop.f32.mrb[0].mxu0
      %1073 = vmatprep.mubr.f32.mxu0 0.0
      %1074 = vmatmul.mubr.f32.gmra.mrb[0].mxu0 %v791
      %v1075 = vpop.f32.mrb[0].mxu0
      %v1076 = vadd.f32 0.0, %v1075
      %v1077 = vpop.f32.mrb[0].mxu0
      %1078 = vmatprep.mubr.f32.mxu0 0.0
      %1079 = vmatmul.mubr.f32.gmra.mrb[0].mxu0 %v794
      %v1080 = vpop.f32.mrb[0].mxu0
      %v1081 = vadd.f32 0.0, %v1080
      %v1082 = vpop.f32.mrb[0].mxu0
      %1083 = vmatprep.mubr.f32.mxu0 0.0
      %1084 = vmatmul.mubr.f32.gmra.mrb[0].mxu0 %v797
      %v1085 = vpop.f32.mrb[0].mxu0
      %v1086 = vadd.f32 0.0, %v1085
      %v1087 = vpop.f32.mrb[0].mxu0
      %1088 = vmatprep.mubr.f32.mxu0 0.0
      %1089 = vmatmul.mubr.f32.gmra.mrb[0].mxu0 %v800
      %v1090 = vpop.f32.mrb[0].mxu0
      %v1091 = vadd.f32 0.0, %v1090
      %v1092 = vpop.f32.mrb[0].mxu0
      %1093 = vmatprep.mubr.f32.mxu0 0.0
      %1094 = vmatmul.mubr.f32.gmra.mrb[0].mxu0 %v803
      %v1095 = vpop.f32.mrb[0].mxu0
      %v1096 = vadd.f32 0.0, %v1095
      %v1097 = vpop.f32.mrb[0].mxu0
      %1098 = vmatprep.mubr.f32.mxu0 0.0
      %1099 = vmatmul.mubr.f32.gmra.mrb[0].mxu0 %v956
      %v1100 = vpop.f32.mrb[0].mxu0
      %v1101 = vadd.f32 0.0, %v1100
      %v1102 = vpop.f32.mrb[0].mxu0
      %1103 = vmatprep.mubr.f32.mxu0 0.0
      %1104 = vmatmul.mubr.f32.gmra.mrb[0].mxu0 %v959
      %v1105 = vpop.f32.mrb[0].mxu0
      %v1106 = vadd.f32 0.0, %v1105
      %v1107 = vpop.f32.mrb[0].mxu0
      %1108 = vdwg.mxu0
      %v1109 = vadd.f32 %v875, %v1031
      %v1110 = vadd.f32 %v880, %v1036
      %v1111 = vadd.f32 %v885, %v1041
      %v1112 = vadd.f32 %v890, %v1046
      %v1113 = vadd.f32 %v895, %v1051
      %v1114 = vadd.f32 %v900, %v1056
      %v1115 = vadd.f32 %v905, %v1061
      %v1116 = vadd.f32 %v910, %v1066
      %v1117 = vadd.f32 %v915, %v1071
      %v1118 = vadd.f32 %v920, %v1076
      %v1119 = vadd.f32 %v925, %v1081
      %v1120 = vadd.f32 %v930, %v1086
      %v1121 = vadd.f32 %v935, %v1091
      %v1122 = vadd.f32 %v940, %v1096
      %v1123 = vadd.f32 %v945, %v1101
      %v1124 = vadd.f32 %v950, %v1106
      %s1125 = scalar_lea.vmem %s3, 20
      %v1126 = vld [vmem:[%s1125] sm:$0xf]
      %v1128 = vsel %vm559, %v407, 0
      %v1131 = vsel %vm559, %v408, 0
      %v1134 = vsel %vm608, %v1126, 0
      %1136 = vmatprep.subr.mxu0 0.0
      %1137 = vmatpush1.msra.mxu0 %v1134
      %1138 = vmatprep.subr.mxu0 0.0
      %1139 = vmatpush1.msra.mxu0 0.0
      %1140 = vmatprep.subr.mxu0 0.0
      %1141 = vmatpush1.msra.mxu0 0.0
      %1142 = vmatprep.subr.mxu0 0.0
      %1143 = vmatpush1.msra.mxu0 0.0
      %1144 = vmatprep.subr.mxu0 0.0
      %1145 = vmatpush1.msra.mxu0 0.0
      %1146 = vmatprep.subr.mxu0 0.0
      %1147 = vmatpush1.msra.mxu0 0.0
      %1148 = vmatprep.subr.mxu0 0.0
      %1149 = vmatpush1.msra.mxu0 0.0
      %1150 = vmatprep.subr.mxu0 0.0
      %1151 = vmatpush1.msra.mxu0 0.0
      %1152 = vmatprep.subr.mxu0 0.0
      %1153 = vmatpush1.msra.mxu0 0.0
      %1154 = vmatprep.subr.mxu0 0.0
      %1155 = vmatpush1.msra.mxu0 0.0
      %1156 = vmatprep.subr.mxu0 0.0
      %1157 = vmatpush1.msra.mxu0 0.0
      %1158 = vmatprep.subr.mxu0 0.0
      %1159 = vmatpush1.msra.mxu0 0.0
      %1160 = vmatprep.subr.mxu0 0.0
      %1161 = vmatpush1.msra.mxu0 0.0
      %1162 = vmatprep.subr.mxu0 0.0
      %1163 = vmatpush1.msra.mxu0 0.0
      %1164 = vmatprep.subr.mxu0 0.0
      %1165 = vmatpush1.msra.mxu0 0.0
      %1166 = vmatprep.subr.mxu0 0.0
      %1167 = vmatpush1.msra.mxu0 0.0
      %1168 = vmatprep.subr.mxu0 0.0
      %1169 = vmatpush1.msra.mxu0 0.0
      %1170 = vmatprep.subr.mxu0 0.0
      %1171 = vmatpush1.msra.mxu0 0.0
      %1172 = vmatprep.subr.mxu0 0.0
      %1173 = vmatpush1.msra.mxu0 0.0
      %1174 = vmatprep.subr.mxu0 0.0
      %1175 = vmatpush1.msra.mxu0 0.0
      %1176 = vmatprep.subr.mxu0 0.0
      %1177 = vmatpush1.msra.mxu0 0.0
      %1178 = vmatprep.subr.mxu0 0.0
      %1179 = vmatpush1.msra.mxu0 0.0
      %1180 = vmatprep.subr.mxu0 0.0
      %1181 = vmatpush1.msra.mxu0 0.0
      %1182 = vmatprep.subr.mxu0 0.0
      %1183 = vmatpush1.msra.mxu0 0.0
      %1184 = vmatprep.subr.mxu0 0.0
      %1185 = vmatpush1.msra.mxu0 0.0
      %1186 = vmatprep.subr.mxu0 0.0
      %1187 = vmatpush1.msra.mxu0 0.0
      %1188 = vmatprep.subr.mxu0 0.0
      %1189 = vmatpush1.msra.mxu0 0.0
      %1190 = vmatprep.subr.mxu0 0.0
      %1191 = vmatpush1.msra.mxu0 0.0
      %1192 = vmatprep.subr.mxu0 0.0
      %1193 = vmatpush1.msra.mxu0 0.0
      %1194 = vmatprep.subr.mxu0 0.0
      %1195 = vmatpush1.msra.mxu0 0.0
      %1196 = vmatprep.subr.mxu0 0.0
      %1197 = vmatpush1.msra.mxu0 0.0
      %1198 = vmatprep.subr.mxu0 0.0
      %1199 = vmatpush1.msra.mxu0 0.0
      %1200 = vmatprep.mubr.f32.mxu0 0.0
      %1201 = vmatmul.mubr.f32.gmra.mrb[0].mxu0 %v567
      %v1202 = vpop.f32.mrb[0].mxu0
      %v1203 = vadd.f32 0.0, %v1202
      %v1204 = vpop.f32.mrb[0].mxu0
      %1205 = vmatprep.mubr.f32.mxu0 0.0
      %1206 = vmatmul.mubr.f32.gmra.mrb[0].mxu0 %v570
      %v1207 = vpop.f32.mrb[0].mxu0
      %v1208 = vadd.f32 0.0, %v1207
      %v1209 = vpop.f32.mrb[0].mxu0
      %1210 = vmatprep.mubr.f32.mxu0 0.0
      %1211 = vmatmul.mubr.f32.gmra.mrb[0].mxu0 %v573
      %v1212 = vpop.f32.mrb[0].mxu0
      %v1213 = vadd.f32 0.0, %v1212
      %v1214 = vpop.f32.mrb[0].mxu0
      %1215 = vmatprep.mubr.f32.mxu0 0.0
      %1216 = vmatmul.mubr.f32.gmra.mrb[0].mxu0 %v576
      %v1217 = vpop.f32.mrb[0].mxu0
      %v1218 = vadd.f32 0.0, %v1217
      %v1219 = vpop.f32.mrb[0].mxu0
      %1220 = vmatprep.mubr.f32.mxu0 0.0
      %1221 = vmatmul.mubr.f32.gmra.mrb[0].mxu0 %v579
      %v1222 = vpop.f32.mrb[0].mxu0
      %v1223 = vadd.f32 0.0, %v1222
      %v1224 = vpop.f32.mrb[0].mxu0
      %1225 = vmatprep.mubr.f32.mxu0 0.0
      %1226 = vmatmul.mubr.f32.gmra.mrb[0].mxu0 %v582
      %v1227 = vpop.f32.mrb[0].mxu0
      %v1228 = vadd.f32 0.0, %v1227
      %v1229 = vpop.f32.mrb[0].mxu0
      %1230 = vmatprep.mubr.f32.mxu0 0.0
      %1231 = vmatmul.mubr.f32.gmra.mrb[0].mxu0 %v585
      %v1232 = vpop.f32.mrb[0].mxu0
      %v1233 = vadd.f32 0.0, %v1232
      %v1234 = vpop.f32.mrb[0].mxu0
      %1235 = vmatprep.mubr.f32.mxu0 0.0
      %1236 = vmatmul.mubr.f32.gmra.mrb[0].mxu0 %v588
      %v1237 = vpop.f32.mrb[0].mxu0
      %v1238 = vadd.f32 0.0, %v1237
      %v1239 = vpop.f32.mrb[0].mxu0
      %1240 = vmatprep.mubr.f32.mxu0 0.0
      %1241 = vmatmul.mubr.f32.gmra.mrb[0].mxu0 %v591
      %v1242 = vpop.f32.mrb[0].mxu0
      %v1243 = vadd.f32 0.0, %v1242
      %v1244 = vpop.f32.mrb[0].mxu0
      %1245 = vmatprep.mubr.f32.mxu0 0.0
      %1246 = vmatmul.mubr.f32.gmra.mrb[0].mxu0 %v594
      %v1247 = vpop.f32.mrb[0].mxu0
      %v1248 = vadd.f32 0.0, %v1247
      %v1249 = vpop.f32.mrb[0].mxu0
      %1250 = vmatprep.mubr.f32.mxu0 0.0
      %1251 = vmatmul.mubr.f32.gmra.mrb[0].mxu0 %v597
      %v1252 = vpop.f32.mrb[0].mxu0
      %v1253 = vadd.f32 0.0, %v1252
      %v1254 = vpop.f32.mrb[0].mxu0
      %1255 = vmatprep.mubr.f32.mxu0 0.0
      %1256 = vmatmul.mubr.f32.gmra.mrb[0].mxu0 %v600
      %v1257 = vpop.f32.mrb[0].mxu0
      %v1258 = vadd.f32 0.0, %v1257
      %v1259 = vpop.f32.mrb[0].mxu0
      %1260 = vmatprep.mubr.f32.mxu0 0.0
      %1261 = vmatmul.mubr.f32.gmra.mrb[0].mxu0 %v603
      %v1262 = vpop.f32.mrb[0].mxu0
      %v1263 = vadd.f32 0.0, %v1262
      %v1264 = vpop.f32.mrb[0].mxu0
      %1265 = vmatprep.mubr.f32.mxu0 0.0
      %1266 = vmatmul.mubr.f32.gmra.mrb[0].mxu0 %v606
      %v1267 = vpop.f32.mrb[0].mxu0
      %v1268 = vadd.f32 0.0, %v1267
      %v1269 = vpop.f32.mrb[0].mxu0
      %1270 = vmatprep.mubr.f32.mxu0 0.0
      %1271 = vmatmul.mubr.f32.gmra.mrb[0].mxu0 %v1128
      %v1272 = vpop.f32.mrb[0].mxu0
      %v1273 = vadd.f32 0.0, %v1272
      %v1274 = vpop.f32.mrb[0].mxu0
      %1275 = vmatprep.mubr.f32.mxu0 0.0
      %1276 = vmatmul.mubr.f32.gmra.mrb[0].mxu0 %v1131
      %v1277 = vpop.f32.mrb[0].mxu0
      %v1278 = vadd.f32 0.0, %v1277
      %v1279 = vpop.f32.mrb[0].mxu0
      %1280 = vdwg.mxu0
      %v1281 = vadd.f32 %v1109, %v1203
      %v1282 = vadd.f32 %v1110, %v1208
      %v1283 = vadd.f32 %v1111, %v1213
      %v1284 = vadd.f32 %v1112, %v1218
      %v1285 = vadd.f32 %v1113, %v1223
      %v1286 = vadd.f32 %v1114, %v1228
      %v1287 = vadd.f32 %v1115, %v1233
      %v1288 = vadd.f32 %v1116, %v1238
      %v1289 = vadd.f32 %v1117, %v1243
      %v1290 = vadd.f32 %v1118, %v1248
      %v1291 = vadd.f32 %v1119, %v1253
      %v1292 = vadd.f32 %v1120, %v1258
      %v1293 = vadd.f32 %v1121, %v1263
      %v1294 = vadd.f32 %v1122, %v1268
      %v1295 = vadd.f32 %v1123, %v1273
      %v1296 = vadd.f32 %v1124, %v1278
      %v1298 = vlaneseq
      %v1299 = vshrl.u32 %v1298, 7
      %v1300 = vsub.s32 0, %v1299
      %v1301 = vrot.slane %v554, %v1300
      %v1303 = vadd.f32 %v1281, %v1301
      %v1304 = vadd.f32 %v1282, %v1301
      %v1305 = vadd.f32 %v1283, %v1301
      %v1306 = vadd.f32 %v1284, %v1301
      %v1307 = vadd.f32 %v1285, %v1301
      %v1308 = vadd.f32 %v1286, %v1301
      %v1309 = vadd.f32 %v1287, %v1301
      %v1310 = vadd.f32 %v1288, %v1301
      %v1311 = vadd.f32 %v1289, %v1301
      %v1312 = vadd.f32 %v1290, %v1301
      %v1313 = vadd.f32 %v1291, %v1301
      %v1314 = vadd.f32 %v1292, %v1301
      %v1315 = vadd.f32 %v1293, %v1301
      %v1316 = vadd.f32 %v1294, %v1301
      %v1317 = vadd.f32 %v1295, %v1301
      %v1318 = vadd.f32 %v1296, %v1301
      %1319 = vst.msk [vmem:[%s391] sm:$0xff] %vm559, %v1303
      %1320 = vst.msk [vmem:[%s391 + $0x8] sm:$0xff] %vm559, %v1304
      %1321 = vst.msk [vmem:[%s391 + $0x20] sm:$0xff] %vm559, %v1305
      %1322 = vst.msk [vmem:[%s391 + $0x28] sm:$0xff] %vm559, %v1306
      %1323 = vst.msk [vmem:[%s391 + $0x40] sm:$0xff] %vm559, %v1307
      %1324 = vst.msk [vmem:[%s391 + $0x48] sm:$0xff] %vm559, %v1308
      %1325 = vst.msk [vmem:[%s391 + $0x60] sm:$0xff] %vm559, %v1309
      %1326 = vst.msk [vmem:[%s391 + $0x68] sm:$0xff] %vm559, %v1310
      %1327 = vst.msk [vmem:[%s391 + $0x80] sm:$0xff] %vm559, %v1311
      %1328 = vst.msk [vmem:[%s391 + $0x88] sm:$0xff] %vm559, %v1312
      %1329 = vst.msk [vmem:[%s391 + $0xa0] sm:$0xff] %vm559, %v1313
      %1330 = vst.msk [vmem:[%s391 + $0xa8] sm:$0xff] %vm559, %v1314
      %1331 = vst.msk [vmem:[%s391 + $0xc0] sm:$0xff] %vm559, %v1315
      %1332 = vst.msk [vmem:[%s391 + $0xc8] sm:$0xff] %vm559, %v1316
      %1333 = vst.msk [vmem:[%s391 + $0xe0] sm:$0xff] %vm559, %v1317
      %1334 = vst.msk [vmem:[%s391 + $0xe8] sm:$0xff] %vm559, %v1318
      %s1335 = scalar_lea.vmem %s3, 56
      %v1336 = vld [vmem:[%s1335] sm:$0xf]
      %s1337 = scalar_lea.vmem %s3, 48
      %v1338 = vld [vmem:[%s1337] sm:$0xf]
      %v1340 = vsel %vm559, %v534, 0
      %v1343 = vsel %vm559, %v535, 0
      %v1346 = vsel %vm559, %v536, 0
      %v1349 = vsel %vm559, %v537, 0
      %v1352 = vsel %vm559, %v538, 0
      %v1355 = vsel %vm559, %v539, 0
      %v1358 = vsel %vm559, %v540, 0
      %v1361 = vsel %vm559, %v541, 0
      %v1364 = vsel %vm559, %v542, 0
      %v1367 = vsel %vm559, %v543, 0
      %v1370 = vsel %vm559, %v544, 0
      %v1373 = vsel %vm559, %v545, 0
      %v1376 = vsel %vm559, %v546, 0
      %v1379 = vsel %vm559, %v547, 0
      %v1382 = vsel %vm559, %v548, 0
      %v1385 = vsel %vm559, %v549, 0
      %v1388 = vsel %vm608, %v1338, 0
      %1390 = vmatprep.subr.mxu0 0.0
      %1391 = vmatpush1.msra.mxu0 %v1388
      %1392 = vmatprep.subr.mxu0 0.0
      %1393 = vmatpush1.msra.mxu0 0.0
      %1394 = vmatprep.subr.mxu0 0.0
      %1395 = vmatpush1.msra.mxu0 0.0
      %1396 = vmatprep.subr.mxu0 0.0
      %1397 = vmatpush1.msra.mxu0 0.0
      %1398 = vmatprep.subr.mxu0 0.0
      %1399 = vmatpush1.msra.mxu0 0.0
      %1400 = vmatprep.subr.mxu0 0.0
      %1401 = vmatpush1.msra.mxu0 0.0
      %1402 = vmatprep.subr.mxu0 0.0
      %1403 = vmatpush1.msra.mxu0 0.0
      %1404 = vmatprep.subr.mxu0 0.0
      %1405 = vmatpush1.msra.mxu0 0.0
      %1406 = vmatprep.subr.mxu0 0.0
      %1407 = vmatpush1.msra.mxu0 0.0
      %1408 = vmatprep.subr.mxu0 0.0
      %1409 = vmatpush1.msra.mxu0 0.0
      %1410 = vmatprep.subr.mxu0 0.0
      %1411 = vmatpush1.msra.mxu0 0.0
      %1412 = vmatprep.subr.mxu0 0.0
      %1413 = vmatpush1.msra.mxu0 0.0
      %1414 = vmatprep.subr.mxu0 0.0
      %1415 = vmatpush1.msra.mxu0 0.0
      %1416 = vmatprep.subr.mxu0 0.0
      %1417 = vmatpush1.msra.mxu0 0.0
      %1418 = vmatprep.subr.mxu0 0.0
      %1419 = vmatpush1.msra.mxu0 0.0
      %1420 = vmatprep.subr.mxu0 0.0
      %1421 = vmatpush1.msra.mxu0 0.0
      %1422 = vmatprep.subr.mxu0 0.0
      %1423 = vmatpush1.msra.mxu0 0.0
      %1424 = vmatprep.subr.mxu0 0.0
      %1425 = vmatpush1.msra.mxu0 0.0
      %1426 = vmatprep.subr.mxu0 0.0
      %1427 = vmatpush1.msra.mxu0 0.0
      %1428 = vmatprep.subr.mxu0 0.0
      %1429 = vmatpush1.msra.mxu0 0.0
      %1430 = vmatprep.subr.mxu0 0.0
      %1431 = vmatpush1.msra.mxu0 0.0
      %1432 = vmatprep.subr.mxu0 0.0
      %1433 = vmatpush1.msra.mxu0 0.0
      %1434 = vmatprep.subr.mxu0 0.0
      %1435 = vmatpush1.msra.mxu0 0.0
      %1436 = vmatprep.subr.mxu0 0.0
      %1437 = vmatpush1.msra.mxu0 0.0
      %1438 = vmatprep.subr.mxu0 0.0
      %1439 = vmatpush1.msra.mxu0 0.0
      %1440 = vmatprep.subr.mxu0 0.0
      %1441 = vmatpush1.msra.mxu0 0.0
      %1442 = vmatprep.subr.mxu0 0.0
      %1443 = vmatpush1.msra.mxu0 0.0
      %1444 = vmatprep.subr.mxu0 0.0
      %1445 = vmatpush1.msra.mxu0 0.0
      %1446 = vmatprep.subr.mxu0 0.0
      %1447 = vmatpush1.msra.mxu0 0.0
      %1448 = vmatprep.subr.mxu0 0.0
      %1449 = vmatpush1.msra.mxu0 0.0
      %1450 = vmatprep.subr.mxu0 0.0
      %1451 = vmatpush1.msra.mxu0 0.0
      %1452 = vmatprep.subr.mxu0 0.0
      %1453 = vmatpush1.msra.mxu0 0.0
      %1454 = vmatprep.mubr.f32.mxu0 0.0
      %1455 = vmatmul.mubr.f32.gmra.mrb[0].mxu0 %v1340
      %v1456 = vpop.f32.mrb[0].mxu0
      %v1457 = vadd.f32 0.0, %v1456
      %v1458 = vpop.f32.mrb[0].mxu0
      %1459 = vmatprep.mubr.f32.mxu0 0.0
      %1460 = vmatmul.mubr.f32.gmra.mrb[0].mxu0 %v1343
      %v1461 = vpop.f32.mrb[0].mxu0
      %v1462 = vadd.f32 0.0, %v1461
      %v1463 = vpop.f32.mrb[0].mxu0
      %1464 = vmatprep.mubr.f32.mxu0 0.0
      %1465 = vmatmul.mubr.f32.gmra.mrb[0].mxu0 %v1346
      %v1466 = vpop.f32.mrb[0].mxu0
      %v1467 = vadd.f32 0.0, %v1466
      %v1468 = vpop.f32.mrb[0].mxu0
      %1469 = vmatprep.mubr.f32.mxu0 0.0
      %1470 = vmatmul.mubr.f32.gmra.mrb[0].mxu0 %v1349
      %v1471 = vpop.f32.mrb[0].mxu0
      %v1472 = vadd.f32 0.0, %v1471
      %v1473 = vpop.f32.mrb[0].mxu0
      %1474 = vmatprep.mubr.f32.mxu0 0.0
      %1475 = vmatmul.mubr.f32.gmra.mrb[0].mxu0 %v1352
      %v1476 = vpop.f32.mrb[0].mxu0
      %v1477 = vadd.f32 0.0, %v1476
      %v1478 = vpop.f32.mrb[0].mxu0
      %1479 = vmatprep.mubr.f32.mxu0 0.0
      %1480 = vmatmul.mubr.f32.gmra.mrb[0].mxu0 %v1355
      %v1481 = vpop.f32.mrb[0].mxu0
      %v1482 = vadd.f32 0.0, %v1481
      %v1483 = vpop.f32.mrb[0].mxu0
      %1484 = vmatprep.mubr.f32.mxu0 0.0
      %1485 = vmatmul.mubr.f32.gmra.mrb[0].mxu0 %v1358
      %v1486 = vpop.f32.mrb[0].mxu0
      %v1487 = vadd.f32 0.0, %v1486
      %v1488 = vpop.f32.mrb[0].mxu0
      %1489 = vmatprep.mubr.f32.mxu0 0.0
      %1490 = vmatmul.mubr.f32.gmra.mrb[0].mxu0 %v1361
      %v1491 = vpop.f32.mrb[0].mxu0
      %v1492 = vadd.f32 0.0, %v1491
      %v1493 = vpop.f32.mrb[0].mxu0
      %1494 = vmatprep.mubr.f32.mxu0 0.0
      %1495 = vmatmul.mubr.f32.gmra.mrb[0].mxu0 %v1364
      %v1496 = vpop.f32.mrb[0].mxu0
      %v1497 = vadd.f32 0.0, %v1496
      %v1498 = vpop.f32.mrb[0].mxu0
      %1499 = vmatprep.mubr.f32.mxu0 0.0
      %1500 = vmatmul.mubr.f32.gmra.mrb[0].mxu0 %v1367
      %v1501 = vpop.f32.mrb[0].mxu0
      %v1502 = vadd.f32 0.0, %v1501
      %v1503 = vpop.f32.mrb[0].mxu0
      %1504 = vmatprep.mubr.f32.mxu0 0.0
      %1505 = vmatmul.mubr.f32.gmra.mrb[0].mxu0 %v1370
      %v1506 = vpop.f32.mrb[0].mxu0
      %v1507 = vadd.f32 0.0, %v1506
      %v1508 = vpop.f32.mrb[0].mxu0
      %1509 = vmatprep.mubr.f32.mxu0 0.0
      %1510 = vmatmul.mubr.f32.gmra.mrb[0].mxu0 %v1373
      %v1511 = vpop.f32.mrb[0].mxu0
      %v1512 = vadd.f32 0.0, %v1511
      %v1513 = vpop.f32.mrb[0].mxu0
      %1514 = vmatprep.mubr.f32.mxu0 0.0
      %1515 = vmatmul.mubr.f32.gmra.mrb[0].mxu0 %v1376
      %v1516 = vpop.f32.mrb[0].mxu0
      %v1517 = vadd.f32 0.0, %v1516
      %v1518 = vpop.f32.mrb[0].mxu0
      %1519 = vmatprep.mubr.f32.mxu0 0.0
      %1520 = vmatmul.mubr.f32.gmra.mrb[0].mxu0 %v1379
      %v1521 = vpop.f32.mrb[0].mxu0
      %v1522 = vadd.f32 0.0, %v1521
      %v1523 = vpop.f32.mrb[0].mxu0
      %1524 = vmatprep.mubr.f32.mxu0 0.0
      %1525 = vmatmul.mubr.f32.gmra.mrb[0].mxu0 %v1382
      %v1526 = vpop.f32.mrb[0].mxu0
      %v1527 = vadd.f32 0.0, %v1526
      %v1528 = vpop.f32.mrb[0].mxu0
      %1529 = vmatprep.mubr.f32.mxu0 0.0
      %1530 = vmatmul.mubr.f32.gmra.mrb[0].mxu0 %v1385
      %v1531 = vpop.f32.mrb[0].mxu0
      %v1532 = vadd.f32 0.0, %v1531
      %v1533 = vpop.f32.mrb[0].mxu0
      %1534 = vdwg.mxu0
      %v1536 = vsel %vm608, %v1336, 0
      %1538 = vmatprep.subr.mxu0 0.0
      %1539 = vmatpush1.msra.mxu0 %v1536
      %1540 = vmatprep.subr.mxu0 0.0
      %1541 = vmatpush1.msra.mxu0 0.0
      %1542 = vmatprep.subr.mxu0 0.0
      %1543 = vmatpush1.msra.mxu0 0.0
      %1544 = vmatprep.subr.mxu0 0.0
      %1545 = vmatpush1.msra.mxu0 0.0
      %1546 = vmatprep.subr.mxu0 0.0
      %1547 = vmatpush1.msra.mxu0 0.0
      %1548 = vmatprep.subr.mxu0 0.0
      %1549 = vmatpush1.msra.mxu0 0.0
      %1550 = vmatprep.subr.mxu0 0.0
      %1551 = vmatpush1.msra.mxu0 0.0
      %1552 = vmatprep.subr.mxu0 0.0
      %1553 = vmatpush1.msra.mxu0 0.0
      %1554 = vmatprep.subr.mxu0 0.0
      %1555 = vmatpush1.msra.mxu0 0.0
      %1556 = vmatprep.subr.mxu0 0.0
      %1557 = vmatpush1.msra.mxu0 0.0
      %1558 = vmatprep.subr.mxu0 0.0
      %1559 = vmatpush1.msra.mxu0 0.0
      %1560 = vmatprep.subr.mxu0 0.0
      %1561 = vmatpush1.msra.mxu0 0.0
      %1562 = vmatprep.subr.mxu0 0.0
      %1563 = vmatpush1.msra.mxu0 0.0
      %1564 = vmatprep.subr.mxu0 0.0
      %1565 = vmatpush1.msra.mxu0 0.0
      %1566 = vmatprep.subr.mxu0 0.0
      %1567 = vmatpush1.msra.mxu0 0.0
      %1568 = vmatprep.subr.mxu0 0.0
      %1569 = vmatpush1.msra.mxu0 0.0
      %1570 = vmatprep.subr.mxu0 0.0
      %1571 = vmatpush1.msra.mxu0 0.0
      %1572 = vmatprep.subr.mxu0 0.0
      %1573 = vmatpush1.msra.mxu0 0.0
      %1574 = vmatprep.subr.mxu0 0.0
      %1575 = vmatpush1.msra.mxu0 0.0
      %1576 = vmatprep.subr.mxu0 0.0
      %1577 = vmatpush1.msra.mxu0 0.0
      %1578 = vmatprep.subr.mxu0 0.0
      %1579 = vmatpush1.msra.mxu0 0.0
      %1580 = vmatprep.subr.mxu0 0.0
      %1581 = vmatpush1.msra.mxu0 0.0
      %1582 = vmatprep.subr.mxu0 0.0
      %1583 = vmatpush1.msra.mxu0 0.0
      %1584 = vmatprep.subr.mxu0 0.0
      %1585 = vmatpush1.msra.mxu0 0.0
      %1586 = vmatprep.subr.mxu0 0.0
      %1587 = vmatpush1.msra.mxu0 0.0
      %1588 = vmatprep.subr.mxu0 0.0
      %1589 = vmatpush1.msra.mxu0 0.0
      %1590 = vmatprep.subr.mxu0 0.0
      %1591 = vmatpush1.msra.mxu0 0.0
      %1592 = vmatprep.subr.mxu0 0.0
      %1593 = vmatpush1.msra.mxu0 0.0
      %1594 = vmatprep.subr.mxu0 0.0
      %1595 = vmatpush1.msra.mxu0 0.0
      %1596 = vmatprep.subr.mxu0 0.0
      %1597 = vmatpush1.msra.mxu0 0.0
      %1598 = vmatprep.subr.mxu0 0.0
      %1599 = vmatpush1.msra.mxu0 0.0
      %1600 = vmatprep.subr.mxu0 0.0
      %1601 = vmatpush1.msra.mxu0 0.0
      %1602 = vmatprep.mubr.f32.mxu0 0.0
      %1603 = vmatmul.mubr.f32.gmra.mrb[0].mxu0 %v561
      %v1604 = vpop.f32.mrb[0].mxu0
      %v1605 = vadd.f32 %v1457, %v1604
      %v1606 = vpop.f32.mrb[0].mxu0
      %1607 = vmatprep.mubr.f32.mxu0 0.0
      %1608 = vmatmul.mubr.f32.gmra.mrb[0].mxu0 %v564
      %v1609 = vpop.f32.mrb[0].mxu0
      %v1610 = vadd.f32 %v1462, %v1609
      %v1611 = vpop.f32.mrb[0].mxu0
      %1612 = vmatprep.mubr.f32.mxu0 0.0
      %1613 = vmatmul.mubr.f32.gmra.mrb[0].mxu0 %v567
      %v1614 = vpop.f32.mrb[0].mxu0
      %v1615 = vadd.f32 %v1467, %v1614
      %v1616 = vpop.f32.mrb[0].mxu0
      %1617 = vmatprep.mubr.f32.mxu0 0.0
      %1618 = vmatmul.mubr.f32.gmra.mrb[0].mxu0 %v570
      %v1619 = vpop.f32.mrb[0].mxu0
      %v1620 = vadd.f32 %v1472, %v1619
      %v1621 = vpop.f32.mrb[0].mxu0
      %1622 = vmatprep.mubr.f32.mxu0 0.0
      %1623 = vmatmul.mubr.f32.gmra.mrb[0].mxu0 %v573
      %v1624 = vpop.f32.mrb[0].mxu0
      %v1625 = vadd.f32 %v1477, %v1624
      %v1626 = vpop.f32.mrb[0].mxu0
      %1627 = vmatprep.mubr.f32.mxu0 0.0
      %1628 = vmatmul.mubr.f32.gmra.mrb[0].mxu0 %v576
      %v1629 = vpop.f32.mrb[0].mxu0
      %v1630 = vadd.f32 %v1482, %v1629
      %v1631 = vpop.f32.mrb[0].mxu0
      %1632 = vmatprep.mubr.f32.mxu0 0.0
      %1633 = vmatmul.mubr.f32.gmra.mrb[0].mxu0 %v579
      %v1634 = vpop.f32.mrb[0].mxu0
      %v1635 = vadd.f32 %v1487, %v1634
      %v1636 = vpop.f32.mrb[0].mxu0
      %1637 = vmatprep.mubr.f32.mxu0 0.0
      %1638 = vmatmul.mubr.f32.gmra.mrb[0].mxu0 %v582
      %v1639 = vpop.f32.mrb[0].mxu0
      %v1640 = vadd.f32 %v1492, %v1639
      %v1641 = vpop.f32.mrb[0].mxu0
      %1642 = vmatprep.mubr.f32.mxu0 0.0
      %1643 = vmatmul.mubr.f32.gmra.mrb[0].mxu0 %v585
      %v1644 = vpop.f32.mrb[0].mxu0
      %v1645 = vadd.f32 %v1497, %v1644
      %v1646 = vpop.f32.mrb[0].mxu0
      %1647 = vmatprep.mubr.f32.mxu0 0.0
      %1648 = vmatmul.mubr.f32.gmra.mrb[0].mxu0 %v588
      %v1649 = vpop.f32.mrb[0].mxu0
      %v1650 = vadd.f32 %v1502, %v1649
      %v1651 = vpop.f32.mrb[0].mxu0
      %1652 = vmatprep.mubr.f32.mxu0 0.0
      %1653 = vmatmul.mubr.f32.gmra.mrb[0].mxu0 %v591
      %v1654 = vpop.f32.mrb[0].mxu0
      %v1655 = vadd.f32 %v1507, %v1654
      %v1656 = vpop.f32.mrb[0].mxu0
      %1657 = vmatprep.mubr.f32.mxu0 0.0
      %1658 = vmatmul.mubr.f32.gmra.mrb[0].mxu0 %v594
      %v1659 = vpop.f32.mrb[0].mxu0
      %v1660 = vadd.f32 %v1512, %v1659
      %v1661 = vpop.f32.mrb[0].mxu0
      %1662 = vmatprep.mubr.f32.mxu0 0.0
      %1663 = vmatmul.mubr.f32.gmra.mrb[0].mxu0 %v597
      %v1664 = vpop.f32.mrb[0].mxu0
      %v1665 = vadd.f32 %v1517, %v1664
      %v1666 = vpop.f32.mrb[0].mxu0
      %1667 = vmatprep.mubr.f32.mxu0 0.0
      %1668 = vmatmul.mubr.f32.gmra.mrb[0].mxu0 %v600
      %v1669 = vpop.f32.mrb[0].mxu0
      %v1670 = vadd.f32 %v1522, %v1669
      %v1671 = vpop.f32.mrb[0].mxu0
      %1672 = vmatprep.mubr.f32.mxu0 0.0
      %1673 = vmatmul.mubr.f32.gmra.mrb[0].mxu0 %v603
      %v1674 = vpop.f32.mrb[0].mxu0
      %v1675 = vadd.f32 %v1527, %v1674
      %v1676 = vpop.f32.mrb[0].mxu0
      %1677 = vmatprep.mubr.f32.mxu0 0.0
      %1678 = vmatmul.mubr.f32.gmra.mrb[0].mxu0 %v606
      %v1679 = vpop.f32.mrb[0].mxu0
      %v1680 = vadd.f32 %v1532, %v1679
      %v1681 = vpop.f32.mrb[0].mxu0
      %1682 = vdwg.mxu0
      %s1683 = scalar_lea.vmem %s3, 24
      %v1684 = vld [vmem:[%s1683] sm:$0xf]
      %v1686 = vsel %vm608, %v1684, 0
      %1688 = vmatprep.subr.mxu0 0.0
      %1689 = vmatpush1.msra.mxu0 %v1686
      %1690 = vmatprep.subr.mxu0 0.0
      %1691 = vmatpush1.msra.mxu0 0.0
      %1692 = vmatprep.subr.mxu0 0.0
      %1693 = vmatpush1.msra.mxu0 0.0
      %1694 = vmatprep.subr.mxu0 0.0
      %1695 = vmatpush1.msra.mxu0 0.0
      %1696 = vmatprep.subr.mxu0 0.0
      %1697 = vmatpush1.msra.mxu0 0.0
      %1698 = vmatprep.subr.mxu0 0.0
      %1699 = vmatpush1.msra.mxu0 0.0
      %1700 = vmatprep.subr.mxu0 0.0
      %1701 = vmatpush1.msra.mxu0 0.0
      %1702 = vmatprep.subr.mxu0 0.0
      %1703 = vmatpush1.msra.mxu0 0.0
      %1704 = vmatprep.subr.mxu0 0.0
      %1705 = vmatpush1.msra.mxu0 0.0
      %1706 = vmatprep.subr.mxu0 0.0
      %1707 = vmatpush1.msra.mxu0 0.0
      %1708 = vmatprep.subr.mxu0 0.0
      %1709 = vmatpush1.msra.mxu0 0.0
      %1710 = vmatprep.subr.mxu0 0.0
      %1711 = vmatpush1.msra.mxu0 0.0
      %1712 = vmatprep.subr.mxu0 0.0
      %1713 = vmatpush1.msra.mxu0 0.0
      %1714 = vmatprep.subr.mxu0 0.0
      %1715 = vmatpush1.msra.mxu0 0.0
      %1716 = vmatprep.subr.mxu0 0.0
      %1717 = vmatpush1.msra.mxu0 0.0
      %1718 = vmatprep.subr.mxu0 0.0
      %1719 = vmatpush1.msra.mxu0 0.0
      %1720 = vmatprep.subr.mxu0 0.0
      %1721 = vmatpush1.msra.mxu0 0.0
      %1722 = vmatprep.subr.mxu0 0.0
      %1723 = vmatpush1.msra.mxu0 0.0
      %1724 = vmatprep.subr.mxu0 0.0
      %1725 = vmatpush1.msra.mxu0 0.0
      %1726 = vmatprep.subr.mxu0 0.0
      %1727 = vmatpush1.msra.mxu0 0.0
      %1728 = vmatprep.subr.mxu0 0.0
      %1729 = vmatpush1.msra.mxu0 0.0
      %1730 = vmatprep.subr.mxu0 0.0
      %1731 = vmatpush1.msra.mxu0 0.0
      %1732 = vmatprep.subr.mxu0 0.0
      %1733 = vmatpush1.msra.mxu0 0.0
      %1734 = vmatprep.subr.mxu0 0.0
      %1735 = vmatpush1.msra.mxu0 0.0
      %1736 = vmatprep.subr.mxu0 0.0
      %1737 = vmatpush1.msra.mxu0 0.0
      %1738 = vmatprep.subr.mxu0 0.0
      %1739 = vmatpush1.msra.mxu0 0.0
      %1740 = vmatprep.subr.mxu0 0.0
      %1741 = vmatpush1.msra.mxu0 0.0
      %1742 = vmatprep.subr.mxu0 0.0
      %1743 = vmatpush1.msra.mxu0 0.0
      %1744 = vmatprep.subr.mxu0 0.0
      %1745 = vmatpush1.msra.mxu0 0.0
      %1746 = vmatprep.subr.mxu0 0.0
      %1747 = vmatpush1.msra.mxu0 0.0
      %1748 = vmatprep.subr.mxu0 0.0
      %1749 = vmatpush1.msra.mxu0 0.0
      %1750 = vmatprep.subr.mxu0 0.0
      %1751 = vmatpush1.msra.mxu0 0.0
      %1752 = vmatprep.mubr.f32.mxu0 0.0
      %1753 = vmatmul.mubr.f32.gmra.mrb[0].mxu0 %v567
      %v1754 = vpop.f32.mrb[0].mxu0
      %v1755 = vadd.f32 0.0, %v1754
      %v1756 = vpop.f32.mrb[0].mxu0
      %1757 = vmatprep.mubr.f32.mxu0 0.0
      %1758 = vmatmul.mubr.f32.gmra.mrb[0].mxu0 %v570
      %v1759 = vpop.f32.mrb[0].mxu0
      %v1760 = vadd.f32 0.0, %v1759
      %v1761 = vpop.f32.mrb[0].mxu0
      %1762 = vmatprep.mubr.f32.mxu0 0.0
      %1763 = vmatmul.mubr.f32.gmra.mrb[0].mxu0 %v573
      %v1764 = vpop.f32.mrb[0].mxu0
      %v1765 = vadd.f32 0.0, %v1764
      %v1766 = vpop.f32.mrb[0].mxu0
      %1767 = vmatprep.mubr.f32.mxu0 0.0
      %1768 = vmatmul.mubr.f32.gmra.mrb[0].mxu0 %v576
      %v1769 = vpop.f32.mrb[0].mxu0
      %v1770 = vadd.f32 0.0, %v1769
      %v1771 = vpop.f32.mrb[0].mxu0
      %1772 = vmatprep.mubr.f32.mxu0 0.0
      %1773 = vmatmul.mubr.f32.gmra.mrb[0].mxu0 %v579
      %v1774 = vpop.f32.mrb[0].mxu0
      %v1775 = vadd.f32 0.0, %v1774
      %v1776 = vpop.f32.mrb[0].mxu0
      %1777 = vmatprep.mubr.f32.mxu0 0.0
      %1778 = vmatmul.mubr.f32.gmra.mrb[0].mxu0 %v582
      %v1779 = vpop.f32.mrb[0].mxu0
      %v1780 = vadd.f32 0.0, %v1779
      %v1781 = vpop.f32.mrb[0].mxu0
      %1782 = vmatprep.mubr.f32.mxu0 0.0
      %1783 = vmatmul.mubr.f32.gmra.mrb[0].mxu0 %v585
      %v1784 = vpop.f32.mrb[0].mxu0
      %v1785 = vadd.f32 0.0, %v1784
      %v1786 = vpop.f32.mrb[0].mxu0
      %1787 = vmatprep.mubr.f32.mxu0 0.0
      %1788 = vmatmul.mubr.f32.gmra.mrb[0].mxu0 %v588
      %v1789 = vpop.f32.mrb[0].mxu0
      %v1790 = vadd.f32 0.0, %v1789
      %v1791 = vpop.f32.mrb[0].mxu0
      %1792 = vmatprep.mubr.f32.mxu0 0.0
      %1793 = vmatmul.mubr.f32.gmra.mrb[0].mxu0 %v591
      %v1794 = vpop.f32.mrb[0].mxu0
      %v1795 = vadd.f32 0.0, %v1794
      %v1796 = vpop.f32.mrb[0].mxu0
      %1797 = vmatprep.mubr.f32.mxu0 0.0
      %1798 = vmatmul.mubr.f32.gmra.mrb[0].mxu0 %v594
      %v1799 = vpop.f32.mrb[0].mxu0
      %v1800 = vadd.f32 0.0, %v1799
      %v1801 = vpop.f32.mrb[0].mxu0
      %1802 = vmatprep.mubr.f32.mxu0 0.0
      %1803 = vmatmul.mubr.f32.gmra.mrb[0].mxu0 %v597
      %v1804 = vpop.f32.mrb[0].mxu0
      %v1805 = vadd.f32 0.0, %v1804
      %v1806 = vpop.f32.mrb[0].mxu0
      %1807 = vmatprep.mubr.f32.mxu0 0.0
      %1808 = vmatmul.mubr.f32.gmra.mrb[0].mxu0 %v600
      %v1809 = vpop.f32.mrb[0].mxu0
      %v1810 = vadd.f32 0.0, %v1809
      %v1811 = vpop.f32.mrb[0].mxu0
      %1812 = vmatprep.mubr.f32.mxu0 0.0
      %1813 = vmatmul.mubr.f32.gmra.mrb[0].mxu0 %v603
      %v1814 = vpop.f32.mrb[0].mxu0
      %v1815 = vadd.f32 0.0, %v1814
      %v1816 = vpop.f32.mrb[0].mxu0
      %1817 = vmatprep.mubr.f32.mxu0 0.0
      %1818 = vmatmul.mubr.f32.gmra.mrb[0].mxu0 %v606
      %v1819 = vpop.f32.mrb[0].mxu0
      %v1820 = vadd.f32 0.0, %v1819
      %v1821 = vpop.f32.mrb[0].mxu0
      %1822 = vmatprep.mubr.f32.mxu0 0.0
      %1823 = vmatmul.mubr.f32.gmra.mrb[0].mxu0 %v1128
      %v1824 = vpop.f32.mrb[0].mxu0
      %v1825 = vadd.f32 0.0, %v1824
      %v1826 = vpop.f32.mrb[0].mxu0
      %1827 = vmatprep.mubr.f32.mxu0 0.0
      %1828 = vmatmul.mubr.f32.gmra.mrb[0].mxu0 %v1131
      %v1829 = vpop.f32.mrb[0].mxu0
      %v1830 = vadd.f32 0.0, %v1829
      %v1831 = vpop.f32.mrb[0].mxu0
      %1832 = vdwg.mxu0
      %v1833 = vadd.f32 %v1605, %v1755
      %v1834 = vadd.f32 %v1610, %v1760
      %v1835 = vadd.f32 %v1615, %v1765
      %v1836 = vadd.f32 %v1620, %v1770
      %v1837 = vadd.f32 %v1625, %v1775
      %v1838 = vadd.f32 %v1630, %v1780
      %v1839 = vadd.f32 %v1635, %v1785
      %v1840 = vadd.f32 %v1640, %v1790
      %v1841 = vadd.f32 %v1645, %v1795
      %v1842 = vadd.f32 %v1650, %v1800
      %v1843 = vadd.f32 %v1655, %v1805
      %v1844 = vadd.f32 %v1660, %v1810
      %v1845 = vadd.f32 %v1665, %v1815
      %v1846 = vadd.f32 %v1670, %v1820
      %v1847 = vadd.f32 %v1675, %v1825
      %v1848 = vadd.f32 %v1680, %v1830
      %s1849 = scalar_lea.vmem %s3, 16
      %v1850 = vld [vmem:[%s1849] sm:$0xf]
      %v1852 = vsel %vm559, %v550, 0
      %v1855 = vsel %vm559, %v551, 0
      %v1858 = vsel %vm608, %v1850, 0
      %1860 = vmatprep.subr.mxu0 0.0
      %1861 = vmatpush1.msra.mxu0 %v1858
      %1862 = vmatprep.subr.mxu0 0.0
      %1863 = vmatpush1.msra.mxu0 0.0
      %1864 = vmatprep.subr.mxu0 0.0
      %1865 = vmatpush1.msra.mxu0 0.0
      %1866 = vmatprep.subr.mxu0 0.0
      %1867 = vmatpush1.msra.mxu0 0.0
      %1868 = vmatprep.subr.mxu0 0.0
      %1869 = vmatpush1.msra.mxu0 0.0
      %1870 = vmatprep.subr.mxu0 0.0
      %1871 = vmatpush1.msra.mxu0 0.0
      %1872 = vmatprep.subr.mxu0 0.0
      %1873 = vmatpush1.msra.mxu0 0.0
      %1874 = vmatprep.subr.mxu0 0.0
      %1875 = vmatpush1.msra.mxu0 0.0
      %1876 = vmatprep.subr.mxu0 0.0
      %1877 = vmatpush1.msra.mxu0 0.0
      %1878 = vmatprep.subr.mxu0 0.0
      %1879 = vmatpush1.msra.mxu0 0.0
      %1880 = vmatprep.subr.mxu0 0.0
      %1881 = vmatpush1.msra.mxu0 0.0
      %1882 = vmatprep.subr.mxu0 0.0
      %1883 = vmatpush1.msra.mxu0 0.0
      %1884 = vmatprep.subr.mxu0 0.0
      %1885 = vmatpush1.msra.mxu0 0.0
      %1886 = vmatprep.subr.mxu0 0.0
      %1887 = vmatpush1.msra.mxu0 0.0
      %1888 = vmatprep.subr.mxu0 0.0
      %1889 = vmatpush1.msra.mxu0 0.0
      %1890 = vmatprep.subr.mxu0 0.0
      %1891 = vmatpush1.msra.mxu0 0.0
      %1892 = vmatprep.subr.mxu0 0.0
      %1893 = vmatpush1.msra.mxu0 0.0
      %1894 = vmatprep.subr.mxu0 0.0
      %1895 = vmatpush1.msra.mxu0 0.0
      %1896 = vmatprep.subr.mxu0 0.0
      %1897 = vmatpush1.msra.mxu0 0.0
      %1898 = vmatprep.subr.mxu0 0.0
      %1899 = vmatpush1.msra.mxu0 0.0
      %1900 = vmatprep.subr.mxu0 0.0
      %1901 = vmatpush1.msra.mxu0 0.0
      %1902 = vmatprep.subr.mxu0 0.0
      %1903 = vmatpush1.msra.mxu0 0.0
      %1904 = vmatprep.subr.mxu0 0.0
      %1905 = vmatpush1.msra.mxu0 0.0
      %1906 = vmatprep.subr.mxu0 0.0
      %1907 = vmatpush1.msra.mxu0 0.0
      %1908 = vmatprep.subr.mxu0 0.0
      %1909 = vmatpush1.msra.mxu0 0.0
      %1910 = vmatprep.subr.mxu0 0.0
      %1911 = vmatpush1.msra.mxu0 0.0
      %1912 = vmatprep.subr.mxu0 0.0
      %1913 = vmatpush1.msra.mxu0 0.0
      %1914 = vmatprep.subr.mxu0 0.0
      %1915 = vmatpush1.msra.mxu0 0.0
      %1916 = vmatprep.subr.mxu0 0.0
      %1917 = vmatpush1.msra.mxu0 0.0
      %1918 = vmatprep.subr.mxu0 0.0
      %1919 = vmatpush1.msra.mxu0 0.0
      %1920 = vmatprep.subr.mxu0 0.0
      %1921 = vmatpush1.msra.mxu0 0.0
      %1922 = vmatprep.subr.mxu0 0.0
      %1923 = vmatpush1.msra.mxu0 0.0
      %1924 = vmatprep.mubr.f32.mxu0 0.0
      %1925 = vmatmul.mubr.f32.gmra.mrb[0].mxu0 %v1346
      %v1926 = vpop.f32.mrb[0].mxu0
      %v1927 = vadd.f32 0.0, %v1926
      %v1928 = vpop.f32.mrb[0].mxu0
      %1929 = vmatprep.mubr.f32.mxu0 0.0
      %1930 = vmatmul.mubr.f32.gmra.mrb[0].mxu0 %v1349
      %v1931 = vpop.f32.mrb[0].mxu0
      %v1932 = vadd.f32 0.0, %v1931
      %v1933 = vpop.f32.mrb[0].mxu0
      %1934 = vmatprep.mubr.f32.mxu0 0.0
      %1935 = vmatmul.mubr.f32.gmra.mrb[0].mxu0 %v1352
      %v1936 = vpop.f32.mrb[0].mxu0
      %v1937 = vadd.f32 0.0, %v1936
      %v1938 = vpop.f32.mrb[0].mxu0
      %1939 = vmatprep.mubr.f32.mxu0 0.0
      %1940 = vmatmul.mubr.f32.gmra.mrb[0].mxu0 %v1355
      %v1941 = vpop.f32.mrb[0].mxu0
      %v1942 = vadd.f32 0.0, %v1941
      %v1943 = vpop.f32.mrb[0].mxu0
      %1944 = vmatprep.mubr.f32.mxu0 0.0
      %1945 = vmatmul.mubr.f32.gmra.mrb[0].mxu0 %v1358
      %v1946 = vpop.f32.mrb[0].mxu0
      %v1947 = vadd.f32 0.0, %v1946
      %v1948 = vpop.f32.mrb[0].mxu0
      %1949 = vmatprep.mubr.f32.mxu0 0.0
      %1950 = vmatmul.mubr.f32.gmra.mrb[0].mxu0 %v1361
      %v1951 = vpop.f32.mrb[0].mxu0
      %v1952 = vadd.f32 0.0, %v1951
      %v1953 = vpop.f32.mrb[0].mxu0
      %1954 = vmatprep.mubr.f32.mxu0 0.0
      %1955 = vmatmul.mubr.f32.gmra.mrb[0].mxu0 %v1364
      %v1956 = vpop.f32.mrb[0].mxu0
      %v1957 = vadd.f32 0.0, %v1956
      %v1958 = vpop.f32.mrb[0].mxu0
      %1959 = vmatprep.mubr.f32.mxu0 0.0
      %1960 = vmatmul.mubr.f32.gmra.mrb[0].mxu0 %v1367
      %v1961 = vpop.f32.mrb[0].mxu0
      %v1962 = vadd.f32 0.0, %v1961
      %v1963 = vpop.f32.mrb[0].mxu0
      %1964 = vmatprep.mubr.f32.mxu0 0.0
      %1965 = vmatmul.mubr.f32.gmra.mrb[0].mxu0 %v1370
      %v1966 = vpop.f32.mrb[0].mxu0
      %v1967 = vadd.f32 0.0, %v1966
      %v1968 = vpop.f32.mrb[0].mxu0
      %1969 = vmatprep.mubr.f32.mxu0 0.0
      %1970 = vmatmul.mubr.f32.gmra.mrb[0].mxu0 %v1373
      %v1971 = vpop.f32.mrb[0].mxu0
      %v1972 = vadd.f32 0.0, %v1971
      %v1973 = vpop.f32.mrb[0].mxu0
      %1974 = vmatprep.mubr.f32.mxu0 0.0
      %1975 = vmatmul.mubr.f32.gmra.mrb[0].mxu0 %v1376
      %v1976 = vpop.f32.mrb[0].mxu0
      %v1977 = vadd.f32 0.0, %v1976
      %v1978 = vpop.f32.mrb[0].mxu0
      %1979 = vmatprep.mubr.f32.mxu0 0.0
      %1980 = vmatmul.mubr.f32.gmra.mrb[0].mxu0 %v1379
      %v1981 = vpop.f32.mrb[0].mxu0
      %v1982 = vadd.f32 0.0, %v1981
      %v1983 = vpop.f32.mrb[0].mxu0
      %1984 = vmatprep.mubr.f32.mxu0 0.0
      %1985 = vmatmul.mubr.f32.gmra.mrb[0].mxu0 %v1382
      %v1986 = vpop.f32.mrb[0].mxu0
      %v1987 = vadd.f32 0.0, %v1986
      %v1988 = vpop.f32.mrb[0].mxu0
      %1989 = vmatprep.mubr.f32.mxu0 0.0
      %1990 = vmatmul.mubr.f32.gmra.mrb[0].mxu0 %v1385
      %v1991 = vpop.f32.mrb[0].mxu0
      %v1992 = vadd.f32 0.0, %v1991
      %v1993 = vpop.f32.mrb[0].mxu0
      %1994 = vmatprep.mubr.f32.mxu0 0.0
      %1995 = vmatmul.mubr.f32.gmra.mrb[0].mxu0 %v1852
      %v1996 = vpop.f32.mrb[0].mxu0
      %v1997 = vadd.f32 0.0, %v1996
      %v1998 = vpop.f32.mrb[0].mxu0
      %1999 = vmatprep.mubr.f32.mxu0 0.0
      %2000 = vmatmul.mubr.f32.gmra.mrb[0].mxu0 %v1855
      %v2001 = vpop.f32.mrb[0].mxu0
      %v2002 = vadd.f32 0.0, %v2001
      %v2003 = vpop.f32.mrb[0].mxu0
      %2004 = vdwg.mxu0
      %v2005 = vadd.f32 %v1833, %v1927
      %v2006 = vadd.f32 %v1834, %v1932
      %v2007 = vadd.f32 %v1835, %v1937
      %v2008 = vadd.f32 %v1836, %v1942
      %v2009 = vadd.f32 %v1837, %v1947
      %v2010 = vadd.f32 %v1838, %v1952
      %v2011 = vadd.f32 %v1839, %v1957
      %v2012 = vadd.f32 %v1840, %v1962
      %v2013 = vadd.f32 %v1841, %v1967
      %v2014 = vadd.f32 %v1842, %v1972
      %v2015 = vadd.f32 %v1843, %v1977
      %v2016 = vadd.f32 %v1844, %v1982
      %v2017 = vadd.f32 %v1845, %v1987
      %v2018 = vadd.f32 %v1846, %v1992
      %v2019 = vadd.f32 %v1847, %v1997
      %v2020 = vadd.f32 %v1848, %v2002
      %v2021 = vadd.f32 %v2005, %v1301
      %v2022 = vadd.f32 %v2006, %v1301
      %v2023 = vadd.f32 %v2007, %v1301
      %v2024 = vadd.f32 %v2008, %v1301
      %v2025 = vadd.f32 %v2009, %v1301
      %v2026 = vadd.f32 %v2010, %v1301
      %v2027 = vadd.f32 %v2011, %v1301
      %v2028 = vadd.f32 %v2012, %v1301
      %v2029 = vadd.f32 %v2013, %v1301
      %v2030 = vadd.f32 %v2014, %v1301
      %v2031 = vadd.f32 %v2015, %v1301
      %v2032 = vadd.f32 %v2016, %v1301
      %v2033 = vadd.f32 %v2017, %v1301
      %v2034 = vadd.f32 %v2018, %v1301
      %v2035 = vadd.f32 %v2019, %v1301
      %v2036 = vadd.f32 %v2020, %v1301
      %2053 = vrot.lane.b32.xlu0 %v2021, 4
      %v2054 = vpop.permute.xlu0 %2053
      %2055 = vrot.lane.b32.xlu0 %v2022, 4
      %v2056 = vpop.permute.xlu0 %2055
      %2057 = vrot.lane.b32.xlu0 %v2023, 4
      %v2058 = vpop.permute.xlu0 %2057
      %2059 = vrot.lane.b32.xlu0 %v2024, 4
      %v2060 = vpop.permute.xlu0 %2059
      %2061 = vrot.lane.b32.xlu0 %v2025, 4
      %v2062 = vpop.permute.xlu0 %2061
      %2063 = vrot.lane.b32.xlu0 %v2026, 4
      %v2064 = vpop.permute.xlu0 %2063
      %2065 = vrot.lane.b32.xlu0 %v2027, 4
      %v2066 = vpop.permute.xlu0 %2065
      %2067 = vrot.lane.b32.xlu0 %v2028, 4
      %v2068 = vpop.permute.xlu0 %2067
      %2069 = vrot.lane.b32.xlu0 %v2029, 4
      %v2070 = vpop.permute.xlu0 %2069
      %2071 = vrot.lane.b32.xlu0 %v2030, 4
      %v2072 = vpop.permute.xlu0 %2071
      %2073 = vrot.lane.b32.xlu0 %v2031, 4
      %v2074 = vpop.permute.xlu0 %2073
      %2075 = vrot.lane.b32.xlu0 %v2032, 4
      %v2076 = vpop.permute.xlu0 %2075
      %2077 = vrot.lane.b32.xlu0 %v2033, 4
      %v2078 = vpop.permute.xlu0 %2077
      %2079 = vrot.lane.b32.xlu0 %v2034, 4
      %v2080 = vpop.permute.xlu0 %2079
      %2081 = vrot.lane.b32.xlu0 %v2035, 4
      %v2082 = vpop.permute.xlu0 %2081
      %2083 = vrot.lane.b32.xlu0 %v2036, 4
      %v2084 = vpop.permute.xlu0 %2083
      %vm2101 = vcmask 64544
      %2102 = vst.msk [vmem:[%s391] sm:$0xff] %vm2101, %v2054
      %2103 = vst.msk [vmem:[%s391 + $0x8] sm:$0xff] %vm2101, %v2056
      %2104 = vst.msk [vmem:[%s391 + $0x20] sm:$0xff] %vm2101, %v2058
      %2105 = vst.msk [vmem:[%s391 + $0x28] sm:$0xff] %vm2101, %v2060
      %2106 = vst.msk [vmem:[%s391 + $0x40] sm:$0xff] %vm2101, %v2062
      %2107 = vst.msk [vmem:[%s391 + $0x48] sm:$0xff] %vm2101, %v2064
      %2108 = vst.msk [vmem:[%s391 + $0x60] sm:$0xff] %vm2101, %v2066
      %2109 = vst.msk [vmem:[%s391 + $0x68] sm:$0xff] %vm2101, %v2068
      %2110 = vst.msk [vmem:[%s391 + $0x80] sm:$0xff] %vm2101, %v2070
      %2111 = vst.msk [vmem:[%s391 + $0x88] sm:$0xff] %vm2101, %v2072
      %2112 = vst.msk [vmem:[%s391 + $0xa0] sm:$0xff] %vm2101, %v2074
      %2113 = vst.msk [vmem:[%s391 + $0xa8] sm:$0xff] %vm2101, %v2076
      %2114 = vst.msk [vmem:[%s391 + $0xc0] sm:$0xff] %vm2101, %v2078
      %2115 = vst.msk [vmem:[%s391 + $0xc8] sm:$0xff] %vm2101, %v2080
      %2116 = vst.msk [vmem:[%s391 + $0xe0] sm:$0xff] %vm2101, %v2082
      %2117 = vst.msk [vmem:[%s391 + $0xe8] sm:$0xff] %vm2101, %v2084
      %s2118 = scalar_lea.vmem %s3, 44
      %v2119 = vld [vmem:[%s2118] sm:$0xf]
      %s2120 = scalar_lea.vmem %s3, 36
      %v2121 = vld [vmem:[%s2120] sm:$0xf]
      %v2123 = vsel %vm608, %v2121, 0
      %2125 = vmatprep.subr.mxu0 0.0
      %2126 = vmatpush1.msra.mxu0 %v2123
      %2127 = vmatprep.subr.mxu0 0.0
      %2128 = vmatpush1.msra.mxu0 0.0
      %2129 = vmatprep.subr.mxu0 0.0
      %2130 = vmatpush1.msra.mxu0 0.0
      %2131 = vmatprep.subr.mxu0 0.0
      %2132 = vmatpush1.msra.mxu0 0.0
      %2133 = vmatprep.subr.mxu0 0.0
      %2134 = vmatpush1.msra.mxu0 0.0
      %2135 = vmatprep.subr.mxu0 0.0
      %2136 = vmatpush1.msra.mxu0 0.0
      %2137 = vmatprep.subr.mxu0 0.0
      %2138 = vmatpush1.msra.mxu0 0.0
      %2139 = vmatprep.subr.mxu0 0.0
      %2140 = vmatpush1.msra.mxu0 0.0
      %2141 = vmatprep.subr.mxu0 0.0
      %2142 = vmatpush1.msra.mxu0 0.0
      %2143 = vmatprep.subr.mxu0 0.0
      %2144 = vmatpush1.msra.mxu0 0.0
      %2145 = vmatprep.subr.mxu0 0.0
      %2146 = vmatpush1.msra.mxu0 0.0
      %2147 = vmatprep.subr.mxu0 0.0
      %2148 = vmatpush1.msra.mxu0 0.0
      %2149 = vmatprep.subr.mxu0 0.0
      %2150 = vmatpush1.msra.mxu0 0.0
      %2151 = vmatprep.subr.mxu0 0.0
      %2152 = vmatpush1.msra.mxu0 0.0
      %2153 = vmatprep.subr.mxu0 0.0
      %2154 = vmatpush1.msra.mxu0 0.0
      %2155 = vmatprep.subr.mxu0 0.0
      %2156 = vmatpush1.msra.mxu0 0.0
      %2157 = vmatprep.subr.mxu0 0.0
      %2158 = vmatpush1.msra.mxu0 0.0
      %2159 = vmatprep.subr.mxu0 0.0
      %2160 = vmatpush1.msra.mxu0 0.0
      %2161 = vmatprep.subr.mxu0 0.0
      %2162 = vmatpush1.msra.mxu0 0.0
      %2163 = vmatprep.subr.mxu0 0.0
      %2164 = vmatpush1.msra.mxu0 0.0
      %2165 = vmatprep.subr.mxu0 0.0
      %2166 = vmatpush1.msra.mxu0 0.0
      %2167 = vmatprep.subr.mxu0 0.0
      %2168 = vmatpush1.msra.mxu0 0.0
      %2169 = vmatprep.subr.mxu0 0.0
      %2170 = vmatpush1.msra.mxu0 0.0
      %2171 = vmatprep.subr.mxu0 0.0
      %2172 = vmatpush1.msra.mxu0 0.0
      %2173 = vmatprep.subr.mxu0 0.0
      %2174 = vmatpush1.msra.mxu0 0.0
      %2175 = vmatprep.subr.mxu0 0.0
      %2176 = vmatpush1.msra.mxu0 0.0
      %2177 = vmatprep.subr.mxu0 0.0
      %2178 = vmatpush1.msra.mxu0 0.0
      %2179 = vmatprep.subr.mxu0 0.0
      %2180 = vmatpush1.msra.mxu0 0.0
      %2181 = vmatprep.subr.mxu0 0.0
      %2182 = vmatpush1.msra.mxu0 0.0
      %2183 = vmatprep.subr.mxu0 0.0
      %2184 = vmatpush1.msra.mxu0 0.0
      %2185 = vmatprep.subr.mxu0 0.0
      %2186 = vmatpush1.msra.mxu0 0.0
      %2187 = vmatprep.subr.mxu0 0.0
      %2188 = vmatpush1.msra.mxu0 0.0
      %2189 = vmatprep.mubr.f32.mxu0 0.0
      %2190 = vmatmul.mubr.f32.gmra.mrb[0].mxu0 %v567
      %v2191 = vpop.f32.mrb[0].mxu0
      %v2192 = vadd.f32 0.0, %v2191
      %v2193 = vpop.f32.mrb[0].mxu0
      %2194 = vmatprep.mubr.f32.mxu0 0.0
      %2195 = vmatmul.mubr.f32.gmra.mrb[0].mxu0 %v570
      %v2196 = vpop.f32.mrb[0].mxu0
      %v2197 = vadd.f32 0.0, %v2196
      %v2198 = vpop.f32.mrb[0].mxu0
      %2199 = vmatprep.mubr.f32.mxu0 0.0
      %2200 = vmatmul.mubr.f32.gmra.mrb[0].mxu0 %v573
      %v2201 = vpop.f32.mrb[0].mxu0
      %v2202 = vadd.f32 0.0, %v2201
      %v2203 = vpop.f32.mrb[0].mxu0
      %2204 = vmatprep.mubr.f32.mxu0 0.0
      %2205 = vmatmul.mubr.f32.gmra.mrb[0].mxu0 %v576
      %v2206 = vpop.f32.mrb[0].mxu0
      %v2207 = vadd.f32 0.0, %v2206
      %v2208 = vpop.f32.mrb[0].mxu0
      %2209 = vmatprep.mubr.f32.mxu0 0.0
      %2210 = vmatmul.mubr.f32.gmra.mrb[0].mxu0 %v579
      %v2211 = vpop.f32.mrb[0].mxu0
      %v2212 = vadd.f32 0.0, %v2211
      %v2213 = vpop.f32.mrb[0].mxu0
      %2214 = vmatprep.mubr.f32.mxu0 0.0
      %2215 = vmatmul.mubr.f32.gmra.mrb[0].mxu0 %v582
      %v2216 = vpop.f32.mrb[0].mxu0
      %v2217 = vadd.f32 0.0, %v2216
      %v2218 = vpop.f32.mrb[0].mxu0
      %2219 = vmatprep.mubr.f32.mxu0 0.0
      %2220 = vmatmul.mubr.f32.gmra.mrb[0].mxu0 %v585
      %v2221 = vpop.f32.mrb[0].mxu0
      %v2222 = vadd.f32 0.0, %v2221
      %v2223 = vpop.f32.mrb[0].mxu0
      %2224 = vmatprep.mubr.f32.mxu0 0.0
      %2225 = vmatmul.mubr.f32.gmra.mrb[0].mxu0 %v588
      %v2226 = vpop.f32.mrb[0].mxu0
      %v2227 = vadd.f32 0.0, %v2226
      %v2228 = vpop.f32.mrb[0].mxu0
      %2229 = vmatprep.mubr.f32.mxu0 0.0
      %2230 = vmatmul.mubr.f32.gmra.mrb[0].mxu0 %v591
      %v2231 = vpop.f32.mrb[0].mxu0
      %v2232 = vadd.f32 0.0, %v2231
      %v2233 = vpop.f32.mrb[0].mxu0
      %2234 = vmatprep.mubr.f32.mxu0 0.0
      %2235 = vmatmul.mubr.f32.gmra.mrb[0].mxu0 %v594
      %v2236 = vpop.f32.mrb[0].mxu0
      %v2237 = vadd.f32 0.0, %v2236
      %v2238 = vpop.f32.mrb[0].mxu0
      %2239 = vmatprep.mubr.f32.mxu0 0.0
      %2240 = vmatmul.mubr.f32.gmra.mrb[0].mxu0 %v597
      %v2241 = vpop.f32.mrb[0].mxu0
      %v2242 = vadd.f32 0.0, %v2241
      %v2243 = vpop.f32.mrb[0].mxu0
      %2244 = vmatprep.mubr.f32.mxu0 0.0
      %2245 = vmatmul.mubr.f32.gmra.mrb[0].mxu0 %v600
      %v2246 = vpop.f32.mrb[0].mxu0
      %v2247 = vadd.f32 0.0, %v2246
      %v2248 = vpop.f32.mrb[0].mxu0
      %2249 = vmatprep.mubr.f32.mxu0 0.0
      %2250 = vmatmul.mubr.f32.gmra.mrb[0].mxu0 %v603
      %v2251 = vpop.f32.mrb[0].mxu0
      %v2252 = vadd.f32 0.0, %v2251
      %v2253 = vpop.f32.mrb[0].mxu0
      %2254 = vmatprep.mubr.f32.mxu0 0.0
      %2255 = vmatmul.mubr.f32.gmra.mrb[0].mxu0 %v606
      %v2256 = vpop.f32.mrb[0].mxu0
      %v2257 = vadd.f32 0.0, %v2256
      %v2258 = vpop.f32.mrb[0].mxu0
      %2259 = vmatprep.mubr.f32.mxu0 0.0
      %2260 = vmatmul.mubr.f32.gmra.mrb[0].mxu0 %v1128
      %v2261 = vpop.f32.mrb[0].mxu0
      %v2262 = vadd.f32 0.0, %v2261
      %v2263 = vpop.f32.mrb[0].mxu0
      %2264 = vmatprep.mubr.f32.mxu0 0.0
      %2265 = vmatmul.mubr.f32.gmra.mrb[0].mxu0 %v1131
      %v2266 = vpop.f32.mrb[0].mxu0
      %v2267 = vadd.f32 0.0, %v2266
      %v2268 = vpop.f32.mrb[0].mxu0
      %2269 = vdwg.mxu0
      %v2271 = vsel %vm608, %v2119, 0
      %2273 = vmatprep.subr.mxu0 0.0
      %2274 = vmatpush1.msra.mxu0 %v2271
      %2275 = vmatprep.subr.mxu0 0.0
      %2276 = vmatpush1.msra.mxu0 0.0
      %2277 = vmatprep.subr.mxu0 0.0
      %2278 = vmatpush1.msra.mxu0 0.0
      %2279 = vmatprep.subr.mxu0 0.0
      %2280 = vmatpush1.msra.mxu0 0.0
      %2281 = vmatprep.subr.mxu0 0.0
      %2282 = vmatpush1.msra.mxu0 0.0
      %2283 = vmatprep.subr.mxu0 0.0
      %2284 = vmatpush1.msra.mxu0 0.0
      %2285 = vmatprep.subr.mxu0 0.0
      %2286 = vmatpush1.msra.mxu0 0.0
      %2287 = vmatprep.subr.mxu0 0.0
      %2288 = vmatpush1.msra.mxu0 0.0
      %2289 = vmatprep.subr.mxu0 0.0
      %2290 = vmatpush1.msra.mxu0 0.0
      %2291 = vmatprep.subr.mxu0 0.0
      %2292 = vmatpush1.msra.mxu0 0.0
      %2293 = vmatprep.subr.mxu0 0.0
      %2294 = vmatpush1.msra.mxu0 0.0
      %2295 = vmatprep.subr.mxu0 0.0
      %2296 = vmatpush1.msra.mxu0 0.0
      %2297 = vmatprep.subr.mxu0 0.0
      %2298 = vmatpush1.msra.mxu0 0.0
      %2299 = vmatprep.subr.mxu0 0.0
      %2300 = vmatpush1.msra.mxu0 0.0
      %2301 = vmatprep.subr.mxu0 0.0
      %2302 = vmatpush1.msra.mxu0 0.0
      %2303 = vmatprep.subr.mxu0 0.0
      %2304 = vmatpush1.msra.mxu0 0.0
      %2305 = vmatprep.subr.mxu0 0.0
      %2306 = vmatpush1.msra.mxu0 0.0
      %2307 = vmatprep.subr.mxu0 0.0
      %2308 = vmatpush1.msra.mxu0 0.0
      %2309 = vmatprep.subr.mxu0 0.0
      %2310 = vmatpush1.msra.mxu0 0.0
      %2311 = vmatprep.subr.mxu0 0.0
      %2312 = vmatpush1.msra.mxu0 0.0
      %2313 = vmatprep.subr.mxu0 0.0
      %2314 = vmatpush1.msra.mxu0 0.0
      %2315 = vmatprep.subr.mxu0 0.0
      %2316 = vmatpush1.msra.mxu0 0.0
      %2317 = vmatprep.subr.mxu0 0.0
      %2318 = vmatpush1.msra.mxu0 0.0
      %2319 = vmatprep.subr.mxu0 0.0
      %2320 = vmatpush1.msra.mxu0 0.0
      %2321 = vmatprep.subr.mxu0 0.0
      %2322 = vmatpush1.msra.mxu0 0.0
      %2323 = vmatprep.subr.mxu0 0.0
      %2324 = vmatpush1.msra.mxu0 0.0
      %2325 = vmatprep.subr.mxu0 0.0
      %2326 = vmatpush1.msra.mxu0 0.0
      %2327 = vmatprep.subr.mxu0 0.0
      %2328 = vmatpush1.msra.mxu0 0.0
      %2329 = vmatprep.subr.mxu0 0.0
      %2330 = vmatpush1.msra.mxu0 0.0
      %2331 = vmatprep.subr.mxu0 0.0
      %2332 = vmatpush1.msra.mxu0 0.0
      %2333 = vmatprep.subr.mxu0 0.0
      %2334 = vmatpush1.msra.mxu0 0.0
      %2335 = vmatprep.subr.mxu0 0.0
      %2336 = vmatpush1.msra.mxu0 0.0
      %2337 = vmatprep.mubr.f32.mxu0 0.0
      %2338 = vmatmul.mubr.f32.gmra.mrb[0].mxu0 %v764
      %v2339 = vpop.f32.mrb[0].mxu0
      %v2340 = vadd.f32 %v2192, %v2339
      %v2341 = vpop.f32.mrb[0].mxu0
      %2342 = vmatprep.mubr.f32.mxu0 0.0
      %2343 = vmatmul.mubr.f32.gmra.mrb[0].mxu0 %v767
      %v2344 = vpop.f32.mrb[0].mxu0
      %v2345 = vadd.f32 %v2197, %v2344
      %v2346 = vpop.f32.mrb[0].mxu0
      %2347 = vmatprep.mubr.f32.mxu0 0.0
      %2348 = vmatmul.mubr.f32.gmra.mrb[0].mxu0 %v770
      %v2349 = vpop.f32.mrb[0].mxu0
      %v2350 = vadd.f32 %v2202, %v2349
      %v2351 = vpop.f32.mrb[0].mxu0
      %2352 = vmatprep.mubr.f32.mxu0 0.0
      %2353 = vmatmul.mubr.f32.gmra.mrb[0].mxu0 %v773
      %v2354 = vpop.f32.mrb[0].mxu0
      %v2355 = vadd.f32 %v2207, %v2354
      %v2356 = vpop.f32.mrb[0].mxu0
      %2357 = vmatprep.mubr.f32.mxu0 0.0
      %2358 = vmatmul.mubr.f32.gmra.mrb[0].mxu0 %v776
      %v2359 = vpop.f32.mrb[0].mxu0
      %v2360 = vadd.f32 %v2212, %v2359
      %v2361 = vpop.f32.mrb[0].mxu0
      %2362 = vmatprep.mubr.f32.mxu0 0.0
      %2363 = vmatmul.mubr.f32.gmra.mrb[0].mxu0 %v779
      %v2364 = vpop.f32.mrb[0].mxu0
      %v2365 = vadd.f32 %v2217, %v2364
      %v2366 = vpop.f32.mrb[0].mxu0
      %2367 = vmatprep.mubr.f32.mxu0 0.0
      %2368 = vmatmul.mubr.f32.gmra.mrb[0].mxu0 %v782
      %v2369 = vpop.f32.mrb[0].mxu0
      %v2370 = vadd.f32 %v2222, %v2369
      %v2371 = vpop.f32.mrb[0].mxu0
      %2372 = vmatprep.mubr.f32.mxu0 0.0
      %2373 = vmatmul.mubr.f32.gmra.mrb[0].mxu0 %v785
      %v2374 = vpop.f32.mrb[0].mxu0
      %v2375 = vadd.f32 %v2227, %v2374
      %v2376 = vpop.f32.mrb[0].mxu0
      %2377 = vmatprep.mubr.f32.mxu0 0.0
      %2378 = vmatmul.mubr.f32.gmra.mrb[0].mxu0 %v788
      %v2379 = vpop.f32.mrb[0].mxu0
      %v2380 = vadd.f32 %v2232, %v2379
      %v2381 = vpop.f32.mrb[0].mxu0
      %2382 = vmatprep.mubr.f32.mxu0 0.0
      %2383 = vmatmul.mubr.f32.gmra.mrb[0].mxu0 %v791
      %v2384 = vpop.f32.mrb[0].mxu0
      %v2385 = vadd.f32 %v2237, %v2384
      %v2386 = vpop.f32.mrb[0].mxu0
      %2387 = vmatprep.mubr.f32.mxu0 0.0
      %2388 = vmatmul.mubr.f32.gmra.mrb[0].mxu0 %v794
      %v2389 = vpop.f32.mrb[0].mxu0
      %v2390 = vadd.f32 %v2242, %v2389
      %v2391 = vpop.f32.mrb[0].mxu0
      %2392 = vmatprep.mubr.f32.mxu0 0.0
      %2393 = vmatmul.mubr.f32.gmra.mrb[0].mxu0 %v797
      %v2394 = vpop.f32.mrb[0].mxu0
      %v2395 = vadd.f32 %v2247, %v2394
      %v2396 = vpop.f32.mrb[0].mxu0
      %2397 = vmatprep.mubr.f32.mxu0 0.0
      %2398 = vmatmul.mubr.f32.gmra.mrb[0].mxu0 %v800
      %v2399 = vpop.f32.mrb[0].mxu0
      %v2400 = vadd.f32 %v2252, %v2399
      %v2401 = vpop.f32.mrb[0].mxu0
      %2402 = vmatprep.mubr.f32.mxu0 0.0
      %2403 = vmatmul.mubr.f32.gmra.mrb[0].mxu0 %v803
      %v2404 = vpop.f32.mrb[0].mxu0
      %v2405 = vadd.f32 %v2257, %v2404
      %v2406 = vpop.f32.mrb[0].mxu0
      %2407 = vmatprep.mubr.f32.mxu0 0.0
      %2408 = vmatmul.mubr.f32.gmra.mrb[0].mxu0 %v956
      %v2409 = vpop.f32.mrb[0].mxu0
      %v2410 = vadd.f32 %v2262, %v2409
      %v2411 = vpop.f32.mrb[0].mxu0
      %2412 = vmatprep.mubr.f32.mxu0 0.0
      %2413 = vmatmul.mubr.f32.gmra.mrb[0].mxu0 %v959
      %v2414 = vpop.f32.mrb[0].mxu0
      %v2415 = vadd.f32 %v2267, %v2414
      %v2416 = vpop.f32.mrb[0].mxu0
      %2417 = vdwg.mxu0
      %s2418 = scalar_lea.vmem %s3, 12
      %v2419 = vld [vmem:[%s2418] sm:$0xf]
      %v2421 = vsel %vm559, %v489, 0
      %v2424 = vsel %vm559, %v490, 0
      %v2427 = vsel %vm608, %v2419, 0
      %2429 = vmatprep.subr.mxu0 0.0
      %2430 = vmatpush1.msra.mxu0 %v2427
      %2431 = vmatprep.subr.mxu0 0.0
      %2432 = vmatpush1.msra.mxu0 0.0
      %2433 = vmatprep.subr.mxu0 0.0
      %2434 = vmatpush1.msra.mxu0 0.0
      %2435 = vmatprep.subr.mxu0 0.0
      %2436 = vmatpush1.msra.mxu0 0.0
      %2437 = vmatprep.subr.mxu0 0.0
      %2438 = vmatpush1.msra.mxu0 0.0
      %2439 = vmatprep.subr.mxu0 0.0
      %2440 = vmatpush1.msra.mxu0 0.0
      %2441 = vmatprep.subr.mxu0 0.0
      %2442 = vmatpush1.msra.mxu0 0.0
      %2443 = vmatprep.subr.mxu0 0.0
      %2444 = vmatpush1.msra.mxu0 0.0
      %2445 = vmatprep.subr.mxu0 0.0
      %2446 = vmatpush1.msra.mxu0 0.0
      %2447 = vmatprep.subr.mxu0 0.0
      %2448 = vmatpush1.msra.mxu0 0.0
      %2449 = vmatprep.subr.mxu0 0.0
      %2450 = vmatpush1.msra.mxu0 0.0
      %2451 = vmatprep.subr.mxu0 0.0
      %2452 = vmatpush1.msra.mxu0 0.0
      %2453 = vmatprep.subr.mxu0 0.0
      %2454 = vmatpush1.msra.mxu0 0.0
      %2455 = vmatprep.subr.mxu0 0.0
      %2456 = vmatpush1.msra.mxu0 0.0
      %2457 = vmatprep.subr.mxu0 0.0
      %2458 = vmatpush1.msra.mxu0 0.0
      %2459 = vmatprep.subr.mxu0 0.0
      %2460 = vmatpush1.msra.mxu0 0.0
      %2461 = vmatprep.subr.mxu0 0.0
      %2462 = vmatpush1.msra.mxu0 0.0
      %2463 = vmatprep.subr.mxu0 0.0
      %2464 = vmatpush1.msra.mxu0 0.0
      %2465 = vmatprep.subr.mxu0 0.0
      %2466 = vmatpush1.msra.mxu0 0.0
      %2467 = vmatprep.subr.mxu0 0.0
      %2468 = vmatpush1.msra.mxu0 0.0
      %2469 = vmatprep.subr.mxu0 0.0
      %2470 = vmatpush1.msra.mxu0 0.0
      %2471 = vmatprep.subr.mxu0 0.0
      %2472 = vmatpush1.msra.mxu0 0.0
      %2473 = vmatprep.subr.mxu0 0.0
      %2474 = vmatpush1.msra.mxu0 0.0
      %2475 = vmatprep.subr.mxu0 0.0
      %2476 = vmatpush1.msra.mxu0 0.0
      %2477 = vmatprep.subr.mxu0 0.0
      %2478 = vmatpush1.msra.mxu0 0.0
      %2479 = vmatprep.subr.mxu0 0.0
      %2480 = vmatpush1.msra.mxu0 0.0
      %2481 = vmatprep.subr.mxu0 0.0
      %2482 = vmatpush1.msra.mxu0 0.0
      %2483 = vmatprep.subr.mxu0 0.0
      %2484 = vmatpush1.msra.mxu0 0.0
      %2485 = vmatprep.subr.mxu0 0.0
      %2486 = vmatpush1.msra.mxu0 0.0
      %2487 = vmatprep.subr.mxu0 0.0
      %2488 = vmatpush1.msra.mxu0 0.0
      %2489 = vmatprep.subr.mxu0 0.0
      %2490 = vmatpush1.msra.mxu0 0.0
      %2491 = vmatprep.subr.mxu0 0.0
      %2492 = vmatpush1.msra.mxu0 0.0
      %2493 = vmatprep.mubr.f32.mxu0 0.0
      %2494 = vmatmul.mubr.f32.gmra.mrb[0].mxu0 %v770
      %v2495 = vpop.f32.mrb[0].mxu0
      %v2496 = vadd.f32 0.0, %v2495
      %v2497 = vpop.f32.mrb[0].mxu0
      %2498 = vmatprep.mubr.f32.mxu0 0.0
      %2499 = vmatmul.mubr.f32.gmra.mrb[0].mxu0 %v773
      %v2500 = vpop.f32.mrb[0].mxu0
      %v2501 = vadd.f32 0.0, %v2500
      %v2502 = vpop.f32.mrb[0].mxu0
      %2503 = vmatprep.mubr.f32.mxu0 0.0
      %2504 = vmatmul.mubr.f32.gmra.mrb[0].mxu0 %v776
      %v2505 = vpop.f32.mrb[0].mxu0
      %v2506 = vadd.f32 0.0, %v2505
      %v2507 = vpop.f32.mrb[0].mxu0
      %2508 = vmatprep.mubr.f32.mxu0 0.0
      %2509 = vmatmul.mubr.f32.gmra.mrb[0].mxu0 %v779
      %v2510 = vpop.f32.mrb[0].mxu0
      %v2511 = vadd.f32 0.0, %v2510
      %v2512 = vpop.f32.mrb[0].mxu0
      %2513 = vmatprep.mubr.f32.mxu0 0.0
      %2514 = vmatmul.mubr.f32.gmra.mrb[0].mxu0 %v782
      %v2515 = vpop.f32.mrb[0].mxu0
      %v2516 = vadd.f32 0.0, %v2515
      %v2517 = vpop.f32.mrb[0].mxu0
      %2518 = vmatprep.mubr.f32.mxu0 0.0
      %2519 = vmatmul.mubr.f32.gmra.mrb[0].mxu0 %v785
      %v2520 = vpop.f32.mrb[0].mxu0
      %v2521 = vadd.f32 0.0, %v2520
      %v2522 = vpop.f32.mrb[0].mxu0
      %2523 = vmatprep.mubr.f32.mxu0 0.0
      %2524 = vmatmul.mubr.f32.gmra.mrb[0].mxu0 %v788
      %v2525 = vpop.f32.mrb[0].mxu0
      %v2526 = vadd.f32 0.0, %v2525
      %v2527 = vpop.f32.mrb[0].mxu0
      %2528 = vmatprep.mubr.f32.mxu0 0.0
      %2529 = vmatmul.mubr.f32.gmra.mrb[0].mxu0 %v791
      %v2530 = vpop.f32.mrb[0].mxu0
      %v2531 = vadd.f32 0.0, %v2530
      %v2532 = vpop.f32.mrb[0].mxu0
      %2533 = vmatprep.mubr.f32.mxu0 0.0
      %2534 = vmatmul.mubr.f32.gmra.mrb[0].mxu0 %v794
      %v2535 = vpop.f32.mrb[0].mxu0
      %v2536 = vadd.f32 0.0, %v2535
      %v2537 = vpop.f32.mrb[0].mxu0
      %2538 = vmatprep.mubr.f32.mxu0 0.0
      %2539 = vmatmul.mubr.f32.gmra.mrb[0].mxu0 %v797
      %v2540 = vpop.f32.mrb[0].mxu0
      %v2541 = vadd.f32 0.0, %v2540
      %v2542 = vpop.f32.mrb[0].mxu0
      %2543 = vmatprep.mubr.f32.mxu0 0.0
      %2544 = vmatmul.mubr.f32.gmra.mrb[0].mxu0 %v800
      %v2545 = vpop.f32.mrb[0].mxu0
      %v2546 = vadd.f32 0.0, %v2545
      %v2547 = vpop.f32.mrb[0].mxu0
      %2548 = vmatprep.mubr.f32.mxu0 0.0
      %2549 = vmatmul.mubr.f32.gmra.mrb[0].mxu0 %v803
      %v2550 = vpop.f32.mrb[0].mxu0
      %v2551 = vadd.f32 0.0, %v2550
      %v2552 = vpop.f32.mrb[0].mxu0
      %2553 = vmatprep.mubr.f32.mxu0 0.0
      %2554 = vmatmul.mubr.f32.gmra.mrb[0].mxu0 %v956
      %v2555 = vpop.f32.mrb[0].mxu0
      %v2556 = vadd.f32 0.0, %v2555
      %v2557 = vpop.f32.mrb[0].mxu0
      %2558 = vmatprep.mubr.f32.mxu0 0.0
      %2559 = vmatmul.mubr.f32.gmra.mrb[0].mxu0 %v959
      %v2560 = vpop.f32.mrb[0].mxu0
      %v2561 = vadd.f32 0.0, %v2560
      %v2562 = vpop.f32.mrb[0].mxu0
      %2563 = vmatprep.mubr.f32.mxu0 0.0
      %2564 = vmatmul.mubr.f32.gmra.mrb[0].mxu0 %v2421
      %v2565 = vpop.f32.mrb[0].mxu0
      %v2566 = vadd.f32 0.0, %v2565
      %v2567 = vpop.f32.mrb[0].mxu0
      %2568 = vmatprep.mubr.f32.mxu0 0.0
      %2569 = vmatmul.mubr.f32.gmra.mrb[0].mxu0 %v2424
      %v2570 = vpop.f32.mrb[0].mxu0
      %v2571 = vadd.f32 0.0, %v2570
      %v2572 = vpop.f32.mrb[0].mxu0
      %2573 = vdwg.mxu0
      %v2574 = vadd.f32 %v2340, %v2496
      %v2575 = vadd.f32 %v2345, %v2501
      %v2576 = vadd.f32 %v2350, %v2506
      %v2577 = vadd.f32 %v2355, %v2511
      %v2578 = vadd.f32 %v2360, %v2516
      %v2579 = vadd.f32 %v2365, %v2521
      %v2580 = vadd.f32 %v2370, %v2526
      %v2581 = vadd.f32 %v2375, %v2531
      %v2582 = vadd.f32 %v2380, %v2536
      %v2583 = vadd.f32 %v2385, %v2541
      %v2584 = vadd.f32 %v2390, %v2546
      %v2585 = vadd.f32 %v2395, %v2551
      %v2586 = vadd.f32 %v2400, %v2556
      %v2587 = vadd.f32 %v2405, %v2561
      %v2588 = vadd.f32 %v2410, %v2566
      %v2589 = vadd.f32 %v2415, %v2571
      %s2590 = scalar_lea.vmem %s3, 4
      %v2591 = vld [vmem:[%s2590] sm:$0xf]
      %v2593 = vsel %vm559, %v423, 0
      %v2596 = vsel %vm559, %v424, 0
      %v2599 = vsel %vm608, %v2591, 0
      %2601 = vmatprep.subr.mxu0 0.0
      %2602 = vmatpush1.msra.mxu0 %v2599
      %2603 = vmatprep.subr.mxu0 0.0
      %2604 = vmatpush1.msra.mxu0 0.0
      %2605 = vmatprep.subr.mxu0 0.0
      %2606 = vmatpush1.msra.mxu0 0.0
      %2607 = vmatprep.subr.mxu0 0.0
      %2608 = vmatpush1.msra.mxu0 0.0
      %2609 = vmatprep.subr.mxu0 0.0
      %2610 = vmatpush1.msra.mxu0 0.0
      %2611 = vmatprep.subr.mxu0 0.0
      %2612 = vmatpush1.msra.mxu0 0.0
      %2613 = vmatprep.subr.mxu0 0.0
      %2614 = vmatpush1.msra.mxu0 0.0
      %2615 = vmatprep.subr.mxu0 0.0
      %2616 = vmatpush1.msra.mxu0 0.0
      %2617 = vmatprep.subr.mxu0 0.0
      %2618 = vmatpush1.msra.mxu0 0.0
      %2619 = vmatprep.subr.mxu0 0.0
      %2620 = vmatpush1.msra.mxu0 0.0
      %2621 = vmatprep.subr.mxu0 0.0
      %2622 = vmatpush1.msra.mxu0 0.0
      %2623 = vmatprep.subr.mxu0 0.0
      %2624 = vmatpush1.msra.mxu0 0.0
      %2625 = vmatprep.subr.mxu0 0.0
      %2626 = vmatpush1.msra.mxu0 0.0
      %2627 = vmatprep.subr.mxu0 0.0
      %2628 = vmatpush1.msra.mxu0 0.0
      %2629 = vmatprep.subr.mxu0 0.0
      %2630 = vmatpush1.msra.mxu0 0.0
      %2631 = vmatprep.subr.mxu0 0.0
      %2632 = vmatpush1.msra.mxu0 0.0
      %2633 = vmatprep.subr.mxu0 0.0
      %2634 = vmatpush1.msra.mxu0 0.0
      %2635 = vmatprep.subr.mxu0 0.0
      %2636 = vmatpush1.msra.mxu0 0.0
      %2637 = vmatprep.subr.mxu0 0.0
      %2638 = vmatpush1.msra.mxu0 0.0
      %2639 = vmatprep.subr.mxu0 0.0
      %2640 = vmatpush1.msra.mxu0 0.0
      %2641 = vmatprep.subr.mxu0 0.0
      %2642 = vmatpush1.msra.mxu0 0.0
      %2643 = vmatprep.subr.mxu0 0.0
      %2644 = vmatpush1.msra.mxu0 0.0
      %2645 = vmatprep.subr.mxu0 0.0
      %2646 = vmatpush1.msra.mxu0 0.0
      %2647 = vmatprep.subr.mxu0 0.0
      %2648 = vmatpush1.msra.mxu0 0.0
      %2649 = vmatprep.subr.mxu0 0.0
      %2650 = vmatpush1.msra.mxu0 0.0
      %2651 = vmatprep.subr.mxu0 0.0
      %2652 = vmatpush1.msra.mxu0 0.0
      %2653 = vmatprep.subr.mxu0 0.0
      %2654 = vmatpush1.msra.mxu0 0.0
      %2655 = vmatprep.subr.mxu0 0.0
      %2656 = vmatpush1.msra.mxu0 0.0
      %2657 = vmatprep.subr.mxu0 0.0
      %2658 = vmatpush1.msra.mxu0 0.0
      %2659 = vmatprep.subr.mxu0 0.0
      %2660 = vmatpush1.msra.mxu0 0.0
      %2661 = vmatprep.subr.mxu0 0.0
      %2662 = vmatpush1.msra.mxu0 0.0
      %2663 = vmatprep.subr.mxu0 0.0
      %2664 = vmatpush1.msra.mxu0 0.0
      %2665 = vmatprep.mubr.f32.mxu0 0.0
      %2666 = vmatmul.mubr.f32.gmra.mrb[0].mxu0 %v573
      %v2667 = vpop.f32.mrb[0].mxu0
      %v2668 = vadd.f32 0.0, %v2667
      %v2669 = vpop.f32.mrb[0].mxu0
      %2670 = vmatprep.mubr.f32.mxu0 0.0
      %2671 = vmatmul.mubr.f32.gmra.mrb[0].mxu0 %v576
      %v2672 = vpop.f32.mrb[0].mxu0
      %v2673 = vadd.f32 0.0, %v2672
      %v2674 = vpop.f32.mrb[0].mxu0
      %2675 = vmatprep.mubr.f32.mxu0 0.0
      %2676 = vmatmul.mubr.f32.gmra.mrb[0].mxu0 %v579
      %v2677 = vpop.f32.mrb[0].mxu0
      %v2678 = vadd.f32 0.0, %v2677
      %v2679 = vpop.f32.mrb[0].mxu0
      %2680 = vmatprep.mubr.f32.mxu0 0.0
      %2681 = vmatmul.mubr.f32.gmra.mrb[0].mxu0 %v582
      %v2682 = vpop.f32.mrb[0].mxu0
      %v2683 = vadd.f32 0.0, %v2682
      %v2684 = vpop.f32.mrb[0].mxu0
      %2685 = vmatprep.mubr.f32.mxu0 0.0
      %2686 = vmatmul.mubr.f32.gmra.mrb[0].mxu0 %v585
      %v2687 = vpop.f32.mrb[0].mxu0
      %v2688 = vadd.f32 0.0, %v2687
      %v2689 = vpop.f32.mrb[0].mxu0
      %2690 = vmatprep.mubr.f32.mxu0 0.0
      %2691 = vmatmul.mubr.f32.gmra.mrb[0].mxu0 %v588
      %v2692 = vpop.f32.mrb[0].mxu0
      %v2693 = vadd.f32 0.0, %v2692
      %v2694 = vpop.f32.mrb[0].mxu0
      %2695 = vmatprep.mubr.f32.mxu0 0.0
      %2696 = vmatmul.mubr.f32.gmra.mrb[0].mxu0 %v591
      %v2697 = vpop.f32.mrb[0].mxu0
      %v2698 = vadd.f32 0.0, %v2697
      %v2699 = vpop.f32.mrb[0].mxu0
      %2700 = vmatprep.mubr.f32.mxu0 0.0
      %2701 = vmatmul.mubr.f32.gmra.mrb[0].mxu0 %v594
      %v2702 = vpop.f32.mrb[0].mxu0
      %v2703 = vadd.f32 0.0, %v2702
      %v2704 = vpop.f32.mrb[0].mxu0
      %2705 = vmatprep.mubr.f32.mxu0 0.0
      %2706 = vmatmul.mubr.f32.gmra.mrb[0].mxu0 %v597
      %v2707 = vpop.f32.mrb[0].mxu0
      %v2708 = vadd.f32 0.0, %v2707
      %v2709 = vpop.f32.mrb[0].mxu0
      %2710 = vmatprep.mubr.f32.mxu0 0.0
      %2711 = vmatmul.mubr.f32.gmra.mrb[0].mxu0 %v600
      %v2712 = vpop.f32.mrb[0].mxu0
      %v2713 = vadd.f32 0.0, %v2712
      %v2714 = vpop.f32.mrb[0].mxu0
      %2715 = vmatprep.mubr.f32.mxu0 0.0
      %2716 = vmatmul.mubr.f32.gmra.mrb[0].mxu0 %v603
      %v2717 = vpop.f32.mrb[0].mxu0
      %v2718 = vadd.f32 0.0, %v2717
      %v2719 = vpop.f32.mrb[0].mxu0
      %2720 = vmatprep.mubr.f32.mxu0 0.0
      %2721 = vmatmul.mubr.f32.gmra.mrb[0].mxu0 %v606
      %v2722 = vpop.f32.mrb[0].mxu0
      %v2723 = vadd.f32 0.0, %v2722
      %v2724 = vpop.f32.mrb[0].mxu0
      %2725 = vmatprep.mubr.f32.mxu0 0.0
      %2726 = vmatmul.mubr.f32.gmra.mrb[0].mxu0 %v1128
      %v2727 = vpop.f32.mrb[0].mxu0
      %v2728 = vadd.f32 0.0, %v2727
      %v2729 = vpop.f32.mrb[0].mxu0
      %2730 = vmatprep.mubr.f32.mxu0 0.0
      %2731 = vmatmul.mubr.f32.gmra.mrb[0].mxu0 %v1131
      %v2732 = vpop.f32.mrb[0].mxu0
      %v2733 = vadd.f32 0.0, %v2732
      %v2734 = vpop.f32.mrb[0].mxu0
      %2735 = vmatprep.mubr.f32.mxu0 0.0
      %2736 = vmatmul.mubr.f32.gmra.mrb[0].mxu0 %v2593
      %v2737 = vpop.f32.mrb[0].mxu0
      %v2738 = vadd.f32 0.0, %v2737
      %v2739 = vpop.f32.mrb[0].mxu0
      %2740 = vmatprep.mubr.f32.mxu0 0.0
      %2741 = vmatmul.mubr.f32.gmra.mrb[0].mxu0 %v2596
      %v2742 = vpop.f32.mrb[0].mxu0
      %v2743 = vadd.f32 0.0, %v2742
      %v2744 = vpop.f32.mrb[0].mxu0
      %2745 = vdwg.mxu0
      %v2746 = vadd.f32 %v2574, %v2668
      %v2747 = vadd.f32 %v2575, %v2673
      %v2748 = vadd.f32 %v2576, %v2678
      %v2749 = vadd.f32 %v2577, %v2683
      %v2750 = vadd.f32 %v2578, %v2688
      %v2751 = vadd.f32 %v2579, %v2693
      %v2752 = vadd.f32 %v2580, %v2698
      %v2753 = vadd.f32 %v2581, %v2703
      %v2754 = vadd.f32 %v2582, %v2708
      %v2755 = vadd.f32 %v2583, %v2713
      %v2756 = vadd.f32 %v2584, %v2718
      %v2757 = vadd.f32 %v2585, %v2723
      %v2758 = vadd.f32 %v2586, %v2728
      %v2759 = vadd.f32 %v2587, %v2733
      %v2760 = vadd.f32 %v2588, %v2738
      %v2761 = vadd.f32 %v2589, %v2743
      %v2762 = vadd.f32 %v2746, %v1301
      %v2763 = vadd.f32 %v2747, %v1301
      %v2764 = vadd.f32 %v2748, %v1301
      %v2765 = vadd.f32 %v2749, %v1301
      %v2766 = vadd.f32 %v2750, %v1301
      %v2767 = vadd.f32 %v2751, %v1301
      %v2768 = vadd.f32 %v2752, %v1301
      %v2769 = vadd.f32 %v2753, %v1301
      %v2770 = vadd.f32 %v2754, %v1301
      %v2771 = vadd.f32 %v2755, %v1301
      %v2772 = vadd.f32 %v2756, %v1301
      %v2773 = vadd.f32 %v2757, %v1301
      %v2774 = vadd.f32 %v2758, %v1301
      %v2775 = vadd.f32 %v2759, %v1301
      %v2776 = vadd.f32 %v2760, %v1301
      %v2777 = vadd.f32 %v2761, %v1301
      %s2778 = scalar_lea.vmem %s391, 16
      %2779 = vst.msk [vmem:[%s2778] sm:$0xff] %vm559, %v2762
      %2780 = vst.msk [vmem:[%s2778 + $0x8] sm:$0xff] %vm559, %v2763
      %2781 = vst.msk [vmem:[%s2778 + $0x20] sm:$0xff] %vm559, %v2764
      %2782 = vst.msk [vmem:[%s2778 + $0x28] sm:$0xff] %vm559, %v2765
      %2783 = vst.msk [vmem:[%s2778 + $0x40] sm:$0xff] %vm559, %v2766
      %2784 = vst.msk [vmem:[%s2778 + $0x48] sm:$0xff] %vm559, %v2767
      %2785 = vst.msk [vmem:[%s2778 + $0x60] sm:$0xff] %vm559, %v2768
      %2786 = vst.msk [vmem:[%s2778 + $0x68] sm:$0xff] %vm559, %v2769
      %2787 = vst.msk [vmem:[%s2778 + $0x80] sm:$0xff] %vm559, %v2770
      %2788 = vst.msk [vmem:[%s2778 + $0x88] sm:$0xff] %vm559, %v2771
      %2789 = vst.msk [vmem:[%s2778 + $0xa0] sm:$0xff] %vm559, %v2772
      %2790 = vst.msk [vmem:[%s2778 + $0xa8] sm:$0xff] %vm559, %v2773
      %2791 = vst.msk [vmem:[%s2778 + $0xc0] sm:$0xff] %vm559, %v2774
      %2792 = vst.msk [vmem:[%s2778 + $0xc8] sm:$0xff] %vm559, %v2775
      %2793 = vst.msk [vmem:[%s2778 + $0xe0] sm:$0xff] %vm559, %v2776
      %2794 = vst.msk [vmem:[%s2778 + $0xe8] sm:$0xff] %vm559, %v2777
      %s2795 = scalar_lea.vmem %s3, 40
      %v2796 = vld [vmem:[%s2795] sm:$0xf]
      %s2797 = scalar_lea.vmem %s3, 32
      %v2798 = vld [vmem:[%s2797] sm:$0xf]
      %v2800 = vsel %vm608, %v2798, 0
      %2802 = vmatprep.subr.mxu0 0.0
      %2803 = vmatpush1.msra.mxu0 %v2800
      %2804 = vmatprep.subr.mxu0 0.0
      %2805 = vmatpush1.msra.mxu0 0.0
      %2806 = vmatprep.subr.mxu0 0.0
      %2807 = vmatpush1.msra.mxu0 0.0
      %2808 = vmatprep.subr.mxu0 0.0
      %2809 = vmatpush1.msra.mxu0 0.0
      %2810 = vmatprep.subr.mxu0 0.0
      %2811 = vmatpush1.msra.mxu0 0.0
      %2812 = vmatprep.subr.mxu0 0.0
      %2813 = vmatpush1.msra.mxu0 0.0
      %2814 = vmatprep.subr.mxu0 0.0
      %2815 = vmatpush1.msra.mxu0 0.0
      %2816 = vmatprep.subr.mxu0 0.0
      %2817 = vmatpush1.msra.mxu0 0.0
      %2818 = vmatprep.subr.mxu0 0.0
      %2819 = vmatpush1.msra.mxu0 0.0
      %2820 = vmatprep.subr.mxu0 0.0
      %2821 = vmatpush1.msra.mxu0 0.0
      %2822 = vmatprep.subr.mxu0 0.0
      %2823 = vmatpush1.msra.mxu0 0.0
      %2824 = vmatprep.subr.mxu0 0.0
      %2825 = vmatpush1.msra.mxu0 0.0
      %2826 = vmatprep.subr.mxu0 0.0
      %2827 = vmatpush1.msra.mxu0 0.0
      %2828 = vmatprep.subr.mxu0 0.0
      %2829 = vmatpush1.msra.mxu0 0.0
      %2830 = vmatprep.subr.mxu0 0.0
      %2831 = vmatpush1.msra.mxu0 0.0
      %2832 = vmatprep.subr.mxu0 0.0
      %2833 = vmatpush1.msra.mxu0 0.0
      %2834 = vmatprep.subr.mxu0 0.0
      %2835 = vmatpush1.msra.mxu0 0.0
      %2836 = vmatprep.subr.mxu0 0.0
      %2837 = vmatpush1.msra.mxu0 0.0
      %2838 = vmatprep.subr.mxu0 0.0
      %2839 = vmatpush1.msra.mxu0 0.0
      %2840 = vmatprep.subr.mxu0 0.0
      %2841 = vmatpush1.msra.mxu0 0.0
      %2842 = vmatprep.subr.mxu0 0.0
      %2843 = vmatpush1.msra.mxu0 0.0
      %2844 = vmatprep.subr.mxu0 0.0
      %2845 = vmatpush1.msra.mxu0 0.0
      %2846 = vmatprep.subr.mxu0 0.0
      %2847 = vmatpush1.msra.mxu0 0.0
      %2848 = vmatprep.subr.mxu0 0.0
      %2849 = vmatpush1.msra.mxu0 0.0
      %2850 = vmatprep.subr.mxu0 0.0
      %2851 = vmatpush1.msra.mxu0 0.0
      %2852 = vmatprep.subr.mxu0 0.0
      %2853 = vmatpush1.msra.mxu0 0.0
      %2854 = vmatprep.subr.mxu0 0.0
      %2855 = vmatpush1.msra.mxu0 0.0
      %2856 = vmatprep.subr.mxu0 0.0
      %2857 = vmatpush1.msra.mxu0 0.0
      %2858 = vmatprep.subr.mxu0 0.0
      %2859 = vmatpush1.msra.mxu0 0.0
      %2860 = vmatprep.subr.mxu0 0.0
      %2861 = vmatpush1.msra.mxu0 0.0
      %2862 = vmatprep.subr.mxu0 0.0
      %2863 = vmatpush1.msra.mxu0 0.0
      %2864 = vmatprep.subr.mxu0 0.0
      %2865 = vmatpush1.msra.mxu0 0.0
      %2866 = vmatprep.mubr.f32.mxu0 0.0
      %2867 = vmatmul.mubr.f32.gmra.mrb[0].mxu0 %v1346
      %v2868 = vpop.f32.mrb[0].mxu0
      %v2869 = vadd.f32 0.0, %v2868
      %v2870 = vpop.f32.mrb[0].mxu0
      %2871 = vmatprep.mubr.f32.mxu0 0.0
      %2872 = vmatmul.mubr.f32.gmra.mrb[0].mxu0 %v1349
      %v2873 = vpop.f32.mrb[0].mxu0
      %v2874 = vadd.f32 0.0, %v2873
      %v2875 = vpop.f32.mrb[0].mxu0
      %2876 = vmatprep.mubr.f32.mxu0 0.0
      %2877 = vmatmul.mubr.f32.gmra.mrb[0].mxu0 %v1352
      %v2878 = vpop.f32.mrb[0].mxu0
      %v2879 = vadd.f32 0.0, %v2878
      %v2880 = vpop.f32.mrb[0].mxu0
      %2881 = vmatprep.mubr.f32.mxu0 0.0
      %2882 = vmatmul.mubr.f32.gmra.mrb[0].mxu0 %v1355
      %v2883 = vpop.f32.mrb[0].mxu0
      %v2884 = vadd.f32 0.0, %v2883
      %v2885 = vpop.f32.mrb[0].mxu0
      %2886 = vmatprep.mubr.f32.mxu0 0.0
      %2887 = vmatmul.mubr.f32.gmra.mrb[0].mxu0 %v1358
      %v2888 = vpop.f32.mrb[0].mxu0
      %v2889 = vadd.f32 0.0, %v2888
      %v2890 = vpop.f32.mrb[0].mxu0
      %2891 = vmatprep.mubr.f32.mxu0 0.0
      %2892 = vmatmul.mubr.f32.gmra.mrb[0].mxu0 %v1361
      %v2893 = vpop.f32.mrb[0].mxu0
      %v2894 = vadd.f32 0.0, %v2893
      %v2895 = vpop.f32.mrb[0].mxu0
      %2896 = vmatprep.mubr.f32.mxu0 0.0
      %2897 = vmatmul.mubr.f32.gmra.mrb[0].mxu0 %v1364
      %v2898 = vpop.f32.mrb[0].mxu0
      %v2899 = vadd.f32 0.0, %v2898
      %v2900 = vpop.f32.mrb[0].mxu0
      %2901 = vmatprep.mubr.f32.mxu0 0.0
      %2902 = vmatmul.mubr.f32.gmra.mrb[0].mxu0 %v1367
      %v2903 = vpop.f32.mrb[0].mxu0
      %v2904 = vadd.f32 0.0, %v2903
      %v2905 = vpop.f32.mrb[0].mxu0
      %2906 = vmatprep.mubr.f32.mxu0 0.0
      %2907 = vmatmul.mubr.f32.gmra.mrb[0].mxu0 %v1370
      %v2908 = vpop.f32.mrb[0].mxu0
      %v2909 = vadd.f32 0.0, %v2908
      %v2910 = vpop.f32.mrb[0].mxu0
      %2911 = vmatprep.mubr.f32.mxu0 0.0
      %2912 = vmatmul.mubr.f32.gmra.mrb[0].mxu0 %v1373
      %v2913 = vpop.f32.mrb[0].mxu0
      %v2914 = vadd.f32 0.0, %v2913
      %v2915 = vpop.f32.mrb[0].mxu0
      %2916 = vmatprep.mubr.f32.mxu0 0.0
      %2917 = vmatmul.mubr.f32.gmra.mrb[0].mxu0 %v1376
      %v2918 = vpop.f32.mrb[0].mxu0
      %v2919 = vadd.f32 0.0, %v2918
      %v2920 = vpop.f32.mrb[0].mxu0
      %2921 = vmatprep.mubr.f32.mxu0 0.0
      %2922 = vmatmul.mubr.f32.gmra.mrb[0].mxu0 %v1379
      %v2923 = vpop.f32.mrb[0].mxu0
      %v2924 = vadd.f32 0.0, %v2923
      %v2925 = vpop.f32.mrb[0].mxu0
      %2926 = vmatprep.mubr.f32.mxu0 0.0
      %2927 = vmatmul.mubr.f32.gmra.mrb[0].mxu0 %v1382
      %v2928 = vpop.f32.mrb[0].mxu0
      %v2929 = vadd.f32 0.0, %v2928
      %v2930 = vpop.f32.mrb[0].mxu0
      %2931 = vmatprep.mubr.f32.mxu0 0.0
      %2932 = vmatmul.mubr.f32.gmra.mrb[0].mxu0 %v1385
      %v2933 = vpop.f32.mrb[0].mxu0
      %v2934 = vadd.f32 0.0, %v2933
      %v2935 = vpop.f32.mrb[0].mxu0
      %2936 = vmatprep.mubr.f32.mxu0 0.0
      %2937 = vmatmul.mubr.f32.gmra.mrb[0].mxu0 %v1852
      %v2938 = vpop.f32.mrb[0].mxu0
      %v2939 = vadd.f32 0.0, %v2938
      %v2940 = vpop.f32.mrb[0].mxu0
      %2941 = vmatprep.mubr.f32.mxu0 0.0
      %2942 = vmatmul.mubr.f32.gmra.mrb[0].mxu0 %v1855
      %v2943 = vpop.f32.mrb[0].mxu0
      %v2944 = vadd.f32 0.0, %v2943
      %v2945 = vpop.f32.mrb[0].mxu0
      %2946 = vdwg.mxu0
      %v2948 = vsel %vm608, %v2796, 0
      %2950 = vmatprep.subr.mxu0 0.0
      %2951 = vmatpush1.msra.mxu0 %v2948
      %2952 = vmatprep.subr.mxu0 0.0
      %2953 = vmatpush1.msra.mxu0 0.0
      %2954 = vmatprep.subr.mxu0 0.0
      %2955 = vmatpush1.msra.mxu0 0.0
      %2956 = vmatprep.subr.mxu0 0.0
      %2957 = vmatpush1.msra.mxu0 0.0
      %2958 = vmatprep.subr.mxu0 0.0
      %2959 = vmatpush1.msra.mxu0 0.0
      %2960 = vmatprep.subr.mxu0 0.0
      %2961 = vmatpush1.msra.mxu0 0.0
      %2962 = vmatprep.subr.mxu0 0.0
      %2963 = vmatpush1.msra.mxu0 0.0
      %2964 = vmatprep.subr.mxu0 0.0
      %2965 = vmatpush1.msra.mxu0 0.0
      %2966 = vmatprep.subr.mxu0 0.0
      %2967 = vmatpush1.msra.mxu0 0.0
      %2968 = vmatprep.subr.mxu0 0.0
      %2969 = vmatpush1.msra.mxu0 0.0
      %2970 = vmatprep.subr.mxu0 0.0
      %2971 = vmatpush1.msra.mxu0 0.0
      %2972 = vmatprep.subr.mxu0 0.0
      %2973 = vmatpush1.msra.mxu0 0.0
      %2974 = vmatprep.subr.mxu0 0.0
      %2975 = vmatpush1.msra.mxu0 0.0
      %2976 = vmatprep.subr.mxu0 0.0
      %2977 = vmatpush1.msra.mxu0 0.0
      %2978 = vmatprep.subr.mxu0 0.0
      %2979 = vmatpush1.msra.mxu0 0.0
      %2980 = vmatprep.subr.mxu0 0.0
      %2981 = vmatpush1.msra.mxu0 0.0
      %2982 = vmatprep.subr.mxu0 0.0
      %2983 = vmatpush1.msra.mxu0 0.0
      %2984 = vmatprep.subr.mxu0 0.0
      %2985 = vmatpush1.msra.mxu0 0.0
      %2986 = vmatprep.subr.mxu0 0.0
      %2987 = vmatpush1.msra.mxu0 0.0
      %2988 = vmatprep.subr.mxu0 0.0
      %2989 = vmatpush1.msra.mxu0 0.0
      %2990 = vmatprep.subr.mxu0 0.0
      %2991 = vmatpush1.msra.mxu0 0.0
      %2992 = vmatprep.subr.mxu0 0.0
      %2993 = vmatpush1.msra.mxu0 0.0
      %2994 = vmatprep.subr.mxu0 0.0
      %2995 = vmatpush1.msra.mxu0 0.0
      %2996 = vmatprep.subr.mxu0 0.0
      %2997 = vmatpush1.msra.mxu0 0.0
      %2998 = vmatprep.subr.mxu0 0.0
      %2999 = vmatpush1.msra.mxu0 0.0
      %3000 = vmatprep.subr.mxu0 0.0
      %3001 = vmatpush1.msra.mxu0 0.0
      %3002 = vmatprep.subr.mxu0 0.0
      %3003 = vmatpush1.msra.mxu0 0.0
      %3004 = vmatprep.subr.mxu0 0.0
      %3005 = vmatpush1.msra.mxu0 0.0
      %3006 = vmatprep.subr.mxu0 0.0
      %3007 = vmatpush1.msra.mxu0 0.0
      %3008 = vmatprep.subr.mxu0 0.0
      %3009 = vmatpush1.msra.mxu0 0.0
      %3010 = vmatprep.subr.mxu0 0.0
      %3011 = vmatpush1.msra.mxu0 0.0
      %3012 = vmatprep.subr.mxu0 0.0
      %3013 = vmatpush1.msra.mxu0 0.0
      %3014 = vmatprep.mubr.f32.mxu0 0.0
      %3015 = vmatmul.mubr.f32.gmra.mrb[0].mxu0 %v567
      %v3016 = vpop.f32.mrb[0].mxu0
      %v3017 = vadd.f32 %v2869, %v3016
      %v3018 = vpop.f32.mrb[0].mxu0
      %3019 = vmatprep.mubr.f32.mxu0 0.0
      %3020 = vmatmul.mubr.f32.gmra.mrb[0].mxu0 %v570
      %v3021 = vpop.f32.mrb[0].mxu0
      %v3022 = vadd.f32 %v2874, %v3021
      %v3023 = vpop.f32.mrb[0].mxu0
      %3024 = vmatprep.mubr.f32.mxu0 0.0
      %3025 = vmatmul.mubr.f32.gmra.mrb[0].mxu0 %v573
      %v3026 = vpop.f32.mrb[0].mxu0
      %v3027 = vadd.f32 %v2879, %v3026
      %v3028 = vpop.f32.mrb[0].mxu0
      %3029 = vmatprep.mubr.f32.mxu0 0.0
      %3030 = vmatmul.mubr.f32.gmra.mrb[0].mxu0 %v576
      %v3031 = vpop.f32.mrb[0].mxu0
      %v3032 = vadd.f32 %v2884, %v3031
      %v3033 = vpop.f32.mrb[0].mxu0
      %3034 = vmatprep.mubr.f32.mxu0 0.0
      %3035 = vmatmul.mubr.f32.gmra.mrb[0].mxu0 %v579
      %v3036 = vpop.f32.mrb[0].mxu0
      %v3037 = vadd.f32 %v2889, %v3036
      %v3038 = vpop.f32.mrb[0].mxu0
      %3039 = vmatprep.mubr.f32.mxu0 0.0
      %3040 = vmatmul.mubr.f32.gmra.mrb[0].mxu0 %v582
      %v3041 = vpop.f32.mrb[0].mxu0
      %v3042 = vadd.f32 %v2894, %v3041
      %v3043 = vpop.f32.mrb[0].mxu0
      %3044 = vmatprep.mubr.f32.mxu0 0.0
      %3045 = vmatmul.mubr.f32.gmra.mrb[0].mxu0 %v585
      %v3046 = vpop.f32.mrb[0].mxu0
      %v3047 = vadd.f32 %v2899, %v3046
      %v3048 = vpop.f32.mrb[0].mxu0
      %3049 = vmatprep.mubr.f32.mxu0 0.0
      %3050 = vmatmul.mubr.f32.gmra.mrb[0].mxu0 %v588
      %v3051 = vpop.f32.mrb[0].mxu0
      %v3052 = vadd.f32 %v2904, %v3051
      %v3053 = vpop.f32.mrb[0].mxu0
      %3054 = vmatprep.mubr.f32.mxu0 0.0
      %3055 = vmatmul.mubr.f32.gmra.mrb[0].mxu0 %v591
      %v3056 = vpop.f32.mrb[0].mxu0
      %v3057 = vadd.f32 %v2909, %v3056
      %v3058 = vpop.f32.mrb[0].mxu0
      %3059 = vmatprep.mubr.f32.mxu0 0.0
      %3060 = vmatmul.mubr.f32.gmra.mrb[0].mxu0 %v594
      %v3061 = vpop.f32.mrb[0].mxu0
      %v3062 = vadd.f32 %v2914, %v3061
      %v3063 = vpop.f32.mrb[0].mxu0
      %3064 = vmatprep.mubr.f32.mxu0 0.0
      %3065 = vmatmul.mubr.f32.gmra.mrb[0].mxu0 %v597
      %v3066 = vpop.f32.mrb[0].mxu0
      %v3067 = vadd.f32 %v2919, %v3066
      %v3068 = vpop.f32.mrb[0].mxu0
      %3069 = vmatprep.mubr.f32.mxu0 0.0
      %3070 = vmatmul.mubr.f32.gmra.mrb[0].mxu0 %v600
      %v3071 = vpop.f32.mrb[0].mxu0
      %v3072 = vadd.f32 %v2924, %v3071
      %v3073 = vpop.f32.mrb[0].mxu0
      %3074 = vmatprep.mubr.f32.mxu0 0.0
      %3075 = vmatmul.mubr.f32.gmra.mrb[0].mxu0 %v603
      %v3076 = vpop.f32.mrb[0].mxu0
      %v3077 = vadd.f32 %v2929, %v3076
      %v3078 = vpop.f32.mrb[0].mxu0
      %3079 = vmatprep.mubr.f32.mxu0 0.0
      %3080 = vmatmul.mubr.f32.gmra.mrb[0].mxu0 %v606
      %v3081 = vpop.f32.mrb[0].mxu0
      %v3082 = vadd.f32 %v2934, %v3081
      %v3083 = vpop.f32.mrb[0].mxu0
      %3084 = vmatprep.mubr.f32.mxu0 0.0
      %3085 = vmatmul.mubr.f32.gmra.mrb[0].mxu0 %v1128
      %v3086 = vpop.f32.mrb[0].mxu0
      %v3087 = vadd.f32 %v2939, %v3086
      %v3088 = vpop.f32.mrb[0].mxu0
      %3089 = vmatprep.mubr.f32.mxu0 0.0
      %3090 = vmatmul.mubr.f32.gmra.mrb[0].mxu0 %v1131
      %v3091 = vpop.f32.mrb[0].mxu0
      %v3092 = vadd.f32 %v2944, %v3091
      %v3093 = vpop.f32.mrb[0].mxu0
      %3094 = vdwg.mxu0
      %s3095 = scalar_lea.vmem %s3, 8
      %v3096 = vld [vmem:[%s3095] sm:$0xf]
      %v3098 = vsel %vm608, %v3096, 0
      %3100 = vmatprep.subr.mxu0 0.0
      %3101 = vmatpush1.msra.mxu0 %v3098
      %3102 = vmatprep.subr.mxu0 0.0
      %3103 = vmatpush1.msra.mxu0 0.0
      %3104 = vmatprep.subr.mxu0 0.0
      %3105 = vmatpush1.msra.mxu0 0.0
      %3106 = vmatprep.subr.mxu0 0.0
      %3107 = vmatpush1.msra.mxu0 0.0
      %3108 = vmatprep.subr.mxu0 0.0
      %3109 = vmatpush1.msra.mxu0 0.0
      %3110 = vmatprep.subr.mxu0 0.0
      %3111 = vmatpush1.msra.mxu0 0.0
      %3112 = vmatprep.subr.mxu0 0.0
      %3113 = vmatpush1.msra.mxu0 0.0
      %3114 = vmatprep.subr.mxu0 0.0
      %3115 = vmatpush1.msra.mxu0 0.0
      %3116 = vmatprep.subr.mxu0 0.0
      %3117 = vmatpush1.msra.mxu0 0.0
      %3118 = vmatprep.subr.mxu0 0.0
      %3119 = vmatpush1.msra.mxu0 0.0
      %3120 = vmatprep.subr.mxu0 0.0
      %3121 = vmatpush1.msra.mxu0 0.0
      %3122 = vmatprep.subr.mxu0 0.0
      %3123 = vmatpush1.msra.mxu0 0.0
      %3124 = vmatprep.subr.mxu0 0.0
      %3125 = vmatpush1.msra.mxu0 0.0
      %3126 = vmatprep.subr.mxu0 0.0
      %3127 = vmatpush1.msra.mxu0 0.0
      %3128 = vmatprep.subr.mxu0 0.0
      %3129 = vmatpush1.msra.mxu0 0.0
      %3130 = vmatprep.subr.mxu0 0.0
      %3131 = vmatpush1.msra.mxu0 0.0
      %3132 = vmatprep.subr.mxu0 0.0
      %3133 = vmatpush1.msra.mxu0 0.0
      %3134 = vmatprep.subr.mxu0 0.0
      %3135 = vmatpush1.msra.mxu0 0.0
      %3136 = vmatprep.subr.mxu0 0.0
      %3137 = vmatpush1.msra.mxu0 0.0
      %3138 = vmatprep.subr.mxu0 0.0
      %3139 = vmatpush1.msra.mxu0 0.0
      %3140 = vmatprep.subr.mxu0 0.0
      %3141 = vmatpush1.msra.mxu0 0.0
      %3142 = vmatprep.subr.mxu0 0.0
      %3143 = vmatpush1.msra.mxu0 0.0
      %3144 = vmatprep.subr.mxu0 0.0
      %3145 = vmatpush1.msra.mxu0 0.0
      %3146 = vmatprep.subr.mxu0 0.0
      %3147 = vmatpush1.msra.mxu0 0.0
      %3148 = vmatprep.subr.mxu0 0.0
      %3149 = vmatpush1.msra.mxu0 0.0
      %3150 = vmatprep.subr.mxu0 0.0
      %3151 = vmatpush1.msra.mxu0 0.0
      %3152 = vmatprep.subr.mxu0 0.0
      %3153 = vmatpush1.msra.mxu0 0.0
      %3154 = vmatprep.subr.mxu0 0.0
      %3155 = vmatpush1.msra.mxu0 0.0
      %3156 = vmatprep.subr.mxu0 0.0
      %3157 = vmatpush1.msra.mxu0 0.0
      %3158 = vmatprep.subr.mxu0 0.0
      %3159 = vmatpush1.msra.mxu0 0.0
      %3160 = vmatprep.subr.mxu0 0.0
      %3161 = vmatpush1.msra.mxu0 0.0
      %3162 = vmatprep.subr.mxu0 0.0
      %3163 = vmatpush1.msra.mxu0 0.0
      %3164 = vmatprep.mubr.f32.mxu0 0.0
      %3165 = vmatmul.mubr.f32.gmra.mrb[0].mxu0 %v573
      %v3166 = vpop.f32.mrb[0].mxu0
      %v3167 = vadd.f32 0.0, %v3166
      %v3168 = vpop.f32.mrb[0].mxu0
      %3169 = vmatprep.mubr.f32.mxu0 0.0
      %3170 = vmatmul.mubr.f32.gmra.mrb[0].mxu0 %v576
      %v3171 = vpop.f32.mrb[0].mxu0
      %v3172 = vadd.f32 0.0, %v3171
      %v3173 = vpop.f32.mrb[0].mxu0
      %3174 = vmatprep.mubr.f32.mxu0 0.0
      %3175 = vmatmul.mubr.f32.gmra.mrb[0].mxu0 %v579
      %v3176 = vpop.f32.mrb[0].mxu0
      %v3177 = vadd.f32 0.0, %v3176
      %v3178 = vpop.f32.mrb[0].mxu0
      %3179 = vmatprep.mubr.f32.mxu0 0.0
      %3180 = vmatmul.mubr.f32.gmra.mrb[0].mxu0 %v582
      %v3181 = vpop.f32.mrb[0].mxu0
      %v3182 = vadd.f32 0.0, %v3181
      %v3183 = vpop.f32.mrb[0].mxu0
      %3184 = vmatprep.mubr.f32.mxu0 0.0
      %3185 = vmatmul.mubr.f32.gmra.mrb[0].mxu0 %v585
      %v3186 = vpop.f32.mrb[0].mxu0
      %v3187 = vadd.f32 0.0, %v3186
      %v3188 = vpop.f32.mrb[0].mxu0
      %3189 = vmatprep.mubr.f32.mxu0 0.0
      %3190 = vmatmul.mubr.f32.gmra.mrb[0].mxu0 %v588
      %v3191 = vpop.f32.mrb[0].mxu0
      %v3192 = vadd.f32 0.0, %v3191
      %v3193 = vpop.f32.mrb[0].mxu0
      %3194 = vmatprep.mubr.f32.mxu0 0.0
      %3195 = vmatmul.mubr.f32.gmra.mrb[0].mxu0 %v591
      %v3196 = vpop.f32.mrb[0].mxu0
      %v3197 = vadd.f32 0.0, %v3196
      %v3198 = vpop.f32.mrb[0].mxu0
      %3199 = vmatprep.mubr.f32.mxu0 0.0
      %3200 = vmatmul.mubr.f32.gmra.mrb[0].mxu0 %v594
      %v3201 = vpop.f32.mrb[0].mxu0
      %v3202 = vadd.f32 0.0, %v3201
      %v3203 = vpop.f32.mrb[0].mxu0
      %3204 = vmatprep.mubr.f32.mxu0 0.0
      %3205 = vmatmul.mubr.f32.gmra.mrb[0].mxu0 %v597
      %v3206 = vpop.f32.mrb[0].mxu0
      %v3207 = vadd.f32 0.0, %v3206
      %v3208 = vpop.f32.mrb[0].mxu0
      %3209 = vmatprep.mubr.f32.mxu0 0.0
      %3210 = vmatmul.mubr.f32.gmra.mrb[0].mxu0 %v600
      %v3211 = vpop.f32.mrb[0].mxu0
      %v3212 = vadd.f32 0.0, %v3211
      %v3213 = vpop.f32.mrb[0].mxu0
      %3214 = vmatprep.mubr.f32.mxu0 0.0
      %3215 = vmatmul.mubr.f32.gmra.mrb[0].mxu0 %v603
      %v3216 = vpop.f32.mrb[0].mxu0
      %v3217 = vadd.f32 0.0, %v3216
      %v3218 = vpop.f32.mrb[0].mxu0
      %3219 = vmatprep.mubr.f32.mxu0 0.0
      %3220 = vmatmul.mubr.f32.gmra.mrb[0].mxu0 %v606
      %v3221 = vpop.f32.mrb[0].mxu0
      %v3222 = vadd.f32 0.0, %v3221
      %v3223 = vpop.f32.mrb[0].mxu0
      %3224 = vmatprep.mubr.f32.mxu0 0.0
      %3225 = vmatmul.mubr.f32.gmra.mrb[0].mxu0 %v1128
      %v3226 = vpop.f32.mrb[0].mxu0
      %v3227 = vadd.f32 0.0, %v3226
      %v3228 = vpop.f32.mrb[0].mxu0
      %3229 = vmatprep.mubr.f32.mxu0 0.0
      %3230 = vmatmul.mubr.f32.gmra.mrb[0].mxu0 %v1131
      %v3231 = vpop.f32.mrb[0].mxu0
      %v3232 = vadd.f32 0.0, %v3231
      %v3233 = vpop.f32.mrb[0].mxu0
      %3234 = vmatprep.mubr.f32.mxu0 0.0
      %3235 = vmatmul.mubr.f32.gmra.mrb[0].mxu0 %v2593
      %v3236 = vpop.f32.mrb[0].mxu0
      %v3237 = vadd.f32 0.0, %v3236
      %v3238 = vpop.f32.mrb[0].mxu0
      %3239 = vmatprep.mubr.f32.mxu0 0.0
      %3240 = vmatmul.mubr.f32.gmra.mrb[0].mxu0 %v2596
      %v3241 = vpop.f32.mrb[0].mxu0
      %v3242 = vadd.f32 0.0, %v3241
      %v3243 = vpop.f32.mrb[0].mxu0
      %3244 = vdwg.mxu0
      %v3245 = vadd.f32 %v3017, %v3167
      %v3246 = vadd.f32 %v3022, %v3172
      %v3247 = vadd.f32 %v3027, %v3177
      %v3248 = vadd.f32 %v3032, %v3182
      %v3249 = vadd.f32 %v3037, %v3187
      %v3250 = vadd.f32 %v3042, %v3192
      %v3251 = vadd.f32 %v3047, %v3197
      %v3252 = vadd.f32 %v3052, %v3202
      %v3253 = vadd.f32 %v3057, %v3207
      %v3254 = vadd.f32 %v3062, %v3212
      %v3255 = vadd.f32 %v3067, %v3217
      %v3256 = vadd.f32 %v3072, %v3222
      %v3257 = vadd.f32 %v3077, %v3227
      %v3258 = vadd.f32 %v3082, %v3232
      %v3259 = vadd.f32 %v3087, %v3237
      %v3260 = vadd.f32 %v3092, %v3242
      %v3261 = vld [vmem:[%s3] sm:$0xf]
      %v3263 = vsel %vm559, %v552, 0
      %v3266 = vsel %vm559, %v553, 0
      %v3269 = vsel %vm608, %v3261, 0
      %3271 = vmatprep.subr.mxu0 0.0
      %3272 = vmatpush1.msra.mxu0 %v3269
      %3273 = vmatprep.subr.mxu0 0.0
      %3274 = vmatpush1.msra.mxu0 0.0
      %3275 = vmatprep.subr.mxu0 0.0
      %3276 = vmatpush1.msra.mxu0 0.0
      %3277 = vmatprep.subr.mxu0 0.0
      %3278 = vmatpush1.msra.mxu0 0.0
      %3279 = vmatprep.subr.mxu0 0.0
      %3280 = vmatpush1.msra.mxu0 0.0
      %3281 = vmatprep.subr.mxu0 0.0
      %3282 = vmatpush1.msra.mxu0 0.0
      %3283 = vmatprep.subr.mxu0 0.0
      %3284 = vmatpush1.msra.mxu0 0.0
      %3285 = vmatprep.subr.mxu0 0.0
      %3286 = vmatpush1.msra.mxu0 0.0
      %3287 = vmatprep.subr.mxu0 0.0
      %3288 = vmatpush1.msra.mxu0 0.0
      %3289 = vmatprep.subr.mxu0 0.0
      %3290 = vmatpush1.msra.mxu0 0.0
      %3291 = vmatprep.subr.mxu0 0.0
      %3292 = vmatpush1.msra.mxu0 0.0
      %3293 = vmatprep.subr.mxu0 0.0
      %3294 = vmatpush1.msra.mxu0 0.0
      %3295 = vmatprep.subr.mxu0 0.0
      %3296 = vmatpush1.msra.mxu0 0.0
      %3297 = vmatprep.subr.mxu0 0.0
      %3298 = vmatpush1.msra.mxu0 0.0
      %3299 = vmatprep.subr.mxu0 0.0
      %3300 = vmatpush1.msra.mxu0 0.0
      %3301 = vmatprep.subr.mxu0 0.0
      %3302 = vmatpush1.msra.mxu0 0.0
      %3303 = vmatprep.subr.mxu0 0.0
      %3304 = vmatpush1.msra.mxu0 0.0
      %3305 = vmatprep.subr.mxu0 0.0
      %3306 = vmatpush1.msra.mxu0 0.0
      %3307 = vmatprep.subr.mxu0 0.0
      %3308 = vmatpush1.msra.mxu0 0.0
      %3309 = vmatprep.subr.mxu0 0.0
      %3310 = vmatpush1.msra.mxu0 0.0
      %3311 = vmatprep.subr.mxu0 0.0
      %3312 = vmatpush1.msra.mxu0 0.0
      %3313 = vmatprep.subr.mxu0 0.0
      %3314 = vmatpush1.msra.mxu0 0.0
      %3315 = vmatprep.subr.mxu0 0.0
      %3316 = vmatpush1.msra.mxu0 0.0
      %3317 = vmatprep.subr.mxu0 0.0
      %3318 = vmatpush1.msra.mxu0 0.0
      %3319 = vmatprep.subr.mxu0 0.0
      %3320 = vmatpush1.msra.mxu0 0.0
      %3321 = vmatprep.subr.mxu0 0.0
      %3322 = vmatpush1.msra.mxu0 0.0
      %3323 = vmatprep.subr.mxu0 0.0
      %3324 = vmatpush1.msra.mxu0 0.0
      %3325 = vmatprep.subr.mxu0 0.0
      %3326 = vmatpush1.msra.mxu0 0.0
      %3327 = vmatprep.subr.mxu0 0.0
      %3328 = vmatpush1.msra.mxu0 0.0
      %3329 = vmatprep.subr.mxu0 0.0
      %3330 = vmatpush1.msra.mxu0 0.0
      %3331 = vmatprep.subr.mxu0 0.0
      %3332 = vmatpush1.msra.mxu0 0.0
      %3333 = vmatprep.subr.mxu0 0.0
      %3334 = vmatpush1.msra.mxu0 0.0
      %3335 = vmatprep.mubr.f32.mxu0 0.0
      %3336 = vmatmul.mubr.f32.gmra.mrb[0].mxu0 %v1352
      %v3337 = vpop.f32.mrb[0].mxu0
      %v3338 = vadd.f32 0.0, %v3337
      %v3339 = vpop.f32.mrb[0].mxu0
      %3340 = vmatprep.mubr.f32.mxu0 0.0
      %3341 = vmatmul.mubr.f32.gmra.mrb[0].mxu0 %v1355
      %v3342 = vpop.f32.mrb[0].mxu0
      %v3343 = vadd.f32 0.0, %v3342
      %v3344 = vpop.f32.mrb[0].mxu0
      %3345 = vmatprep.mubr.f32.mxu0 0.0
      %3346 = vmatmul.mubr.f32.gmra.mrb[0].mxu0 %v1358
      %v3347 = vpop.f32.mrb[0].mxu0
      %v3348 = vadd.f32 0.0, %v3347
      %v3349 = vpop.f32.mrb[0].mxu0
      %3350 = vmatprep.mubr.f32.mxu0 0.0
      %3351 = vmatmul.mubr.f32.gmra.mrb[0].mxu0 %v1361
      %v3352 = vpop.f32.mrb[0].mxu0
      %v3353 = vadd.f32 0.0, %v3352
      %v3354 = vpop.f32.mrb[0].mxu0
      %3355 = vmatprep.mubr.f32.mxu0 0.0
      %3356 = vmatmul.mubr.f32.gmra.mrb[0].mxu0 %v1364
      %v3357 = vpop.f32.mrb[0].mxu0
      %v3358 = vadd.f32 0.0, %v3357
      %v3359 = vpop.f32.mrb[0].mxu0
      %3360 = vmatprep.mubr.f32.mxu0 0.0
      %3361 = vmatmul.mubr.f32.gmra.mrb[0].mxu0 %v1367
      %v3362 = vpop.f32.mrb[0].mxu0
      %v3363 = vadd.f32 0.0, %v3362
      %v3364 = vpop.f32.mrb[0].mxu0
      %3365 = vmatprep.mubr.f32.mxu0 0.0
      %3366 = vmatmul.mubr.f32.gmra.mrb[0].mxu0 %v1370
      %v3367 = vpop.f32.mrb[0].mxu0
      %v3368 = vadd.f32 0.0, %v3367
      %v3369 = vpop.f32.mrb[0].mxu0
      %3370 = vmatprep.mubr.f32.mxu0 0.0
      %3371 = vmatmul.mubr.f32.gmra.mrb[0].mxu0 %v1373
      %v3372 = vpop.f32.mrb[0].mxu0
      %v3373 = vadd.f32 0.0, %v3372
      %v3374 = vpop.f32.mrb[0].mxu0
      %3375 = vmatprep.mubr.f32.mxu0 0.0
      %3376 = vmatmul.mubr.f32.gmra.mrb[0].mxu0 %v1376
      %v3377 = vpop.f32.mrb[0].mxu0
      %v3378 = vadd.f32 0.0, %v3377
      %v3379 = vpop.f32.mrb[0].mxu0
      %3380 = vmatprep.mubr.f32.mxu0 0.0
      %3381 = vmatmul.mubr.f32.gmra.mrb[0].mxu0 %v1379
      %v3382 = vpop.f32.mrb[0].mxu0
      %v3383 = vadd.f32 0.0, %v3382
      %v3384 = vpop.f32.mrb[0].mxu0
      %3385 = vmatprep.mubr.f32.mxu0 0.0
      %3386 = vmatmul.mubr.f32.gmra.mrb[0].mxu0 %v1382
      %v3387 = vpop.f32.mrb[0].mxu0
      %v3388 = vadd.f32 0.0, %v3387
      %v3389 = vpop.f32.mrb[0].mxu0
      %3390 = vmatprep.mubr.f32.mxu0 0.0
      %3391 = vmatmul.mubr.f32.gmra.mrb[0].mxu0 %v1385
      %v3392 = vpop.f32.mrb[0].mxu0
      %v3393 = vadd.f32 0.0, %v3392
      %v3394 = vpop.f32.mrb[0].mxu0
      %3395 = vmatprep.mubr.f32.mxu0 0.0
      %3396 = vmatmul.mubr.f32.gmra.mrb[0].mxu0 %v1852
      %v3397 = vpop.f32.mrb[0].mxu0
      %v3398 = vadd.f32 0.0, %v3397
      %v3399 = vpop.f32.mrb[0].mxu0
      %3400 = vmatprep.mubr.f32.mxu0 0.0
      %3401 = vmatmul.mubr.f32.gmra.mrb[0].mxu0 %v1855
      %v3402 = vpop.f32.mrb[0].mxu0
      %v3403 = vadd.f32 0.0, %v3402
      %v3404 = vpop.f32.mrb[0].mxu0
      %3405 = vmatprep.mubr.f32.mxu0 0.0
      %3406 = vmatmul.mubr.f32.gmra.mrb[0].mxu0 %v3263
      %v3407 = vpop.f32.mrb[0].mxu0
      %v3408 = vadd.f32 0.0, %v3407
      %v3409 = vpop.f32.mrb[0].mxu0
      %3410 = vmatprep.mubr.f32.mxu0 0.0
      %3411 = vmatmul.mubr.f32.gmra.mrb[0].mxu0 %v3266
      %v3412 = vpop.f32.mrb[0].mxu0
      %v3413 = vadd.f32 0.0, %v3412
      %v3414 = vpop.f32.mrb[0].mxu0
      %3415 = vdwg.mxu0
      %v3416 = vadd.f32 %v3245, %v3338
      %v3417 = vadd.f32 %v3246, %v3343
      %v3418 = vadd.f32 %v3247, %v3348
      %v3419 = vadd.f32 %v3248, %v3353
      %v3420 = vadd.f32 %v3249, %v3358
      %v3421 = vadd.f32 %v3250, %v3363
      %v3422 = vadd.f32 %v3251, %v3368
      %v3423 = vadd.f32 %v3252, %v3373
      %v3424 = vadd.f32 %v3253, %v3378
      %v3425 = vadd.f32 %v3254, %v3383
      %v3426 = vadd.f32 %v3255, %v3388
      %v3427 = vadd.f32 %v3256, %v3393
      %v3428 = vadd.f32 %v3257, %v3398
      %v3429 = vadd.f32 %v3258, %v3403
      %v3430 = vadd.f32 %v3259, %v3408
      %v3431 = vadd.f32 %v3260, %v3413
      %v3432 = vadd.f32 %v3416, %v1301
      %v3433 = vadd.f32 %v3417, %v1301
      %v3434 = vadd.f32 %v3418, %v1301
      %v3435 = vadd.f32 %v3419, %v1301
      %v3436 = vadd.f32 %v3420, %v1301
      %v3437 = vadd.f32 %v3421, %v1301
      %v3438 = vadd.f32 %v3422, %v1301
      %v3439 = vadd.f32 %v3423, %v1301
      %v3440 = vadd.f32 %v3424, %v1301
      %v3441 = vadd.f32 %v3425, %v1301
      %v3442 = vadd.f32 %v3426, %v1301
      %v3443 = vadd.f32 %v3427, %v1301
      %v3444 = vadd.f32 %v3428, %v1301
      %v3445 = vadd.f32 %v3429, %v1301
      %v3446 = vadd.f32 %v3430, %v1301
      %v3447 = vadd.f32 %v3431, %v1301
      %3464 = vrot.lane.b32.xlu0 %v3432, 4
      %v3465 = vpop.permute.xlu0 %3464
      %3466 = vrot.lane.b32.xlu0 %v3433, 4
      %v3467 = vpop.permute.xlu0 %3466
      %3468 = vrot.lane.b32.xlu0 %v3434, 4
      %v3469 = vpop.permute.xlu0 %3468
      %3470 = vrot.lane.b32.xlu0 %v3435, 4
      %v3471 = vpop.permute.xlu0 %3470
      %3472 = vrot.lane.b32.xlu0 %v3436, 4
      %v3473 = vpop.permute.xlu0 %3472
      %3474 = vrot.lane.b32.xlu0 %v3437, 4
      %v3475 = vpop.permute.xlu0 %3474
      %3476 = vrot.lane.b32.xlu0 %v3438, 4
      %v3477 = vpop.permute.xlu0 %3476
      %3478 = vrot.lane.b32.xlu0 %v3439, 4
      %v3479 = vpop.permute.xlu0 %3478
      %3480 = vrot.lane.b32.xlu0 %v3440, 4
      %v3481 = vpop.permute.xlu0 %3480
      %3482 = vrot.lane.b32.xlu0 %v3441, 4
      %v3483 = vpop.permute.xlu0 %3482
      %3484 = vrot.lane.b32.xlu0 %v3442, 4
      %v3485 = vpop.permute.xlu0 %3484
      %3486 = vrot.lane.b32.xlu0 %v3443, 4
      %v3487 = vpop.permute.xlu0 %3486
      %3488 = vrot.lane.b32.xlu0 %v3444, 4
      %v3489 = vpop.permute.xlu0 %3488
      %3490 = vrot.lane.b32.xlu0 %v3445, 4
      %v3491 = vpop.permute.xlu0 %3490
      %3492 = vrot.lane.b32.xlu0 %v3446, 4
      %v3493 = vpop.permute.xlu0 %3492
      %3494 = vrot.lane.b32.xlu0 %v3447, 4
      %v3495 = vpop.permute.xlu0 %3494
      %3512 = vst.msk [vmem:[%s2778] sm:$0xff] %vm2101, %v3465
      %3513 = vst.msk [vmem:[%s2778 + $0x8] sm:$0xff] %vm2101, %v3467
      %3514 = vst.msk [vmem:[%s2778 + $0x20] sm:$0xff] %vm2101, %v3469
      %3515 = vst.msk [vmem:[%s2778 + $0x28] sm:$0xff] %vm2101, %v3471
      %3516 = vst.msk [vmem:[%s2778 + $0x40] sm:$0xff] %vm2101, %v3473
      %3517 = vst.msk [vmem:[%s2778 + $0x48] sm:$0xff] %vm2101, %v3475
      %3518 = vst.msk [vmem:[%s2778 + $0x60] sm:$0xff] %vm2101, %v3477
      %3519 = vst.msk [vmem:[%s2778 + $0x68] sm:$0xff] %vm2101, %v3479
      %3520 = vst.msk [vmem:[%s2778 + $0x80] sm:$0xff] %vm2101, %v3481
      %3521 = vst.msk [vmem:[%s2778 + $0x88] sm:$0xff] %vm2101, %v3483
      %3522 = vst.msk [vmem:[%s2778 + $0xa0] sm:$0xff] %vm2101, %v3485
      %3523 = vst.msk [vmem:[%s2778 + $0xa8] sm:$0xff] %vm2101, %v3487
      %3524 = vst.msk [vmem:[%s2778 + $0xc0] sm:$0xff] %vm2101, %v3489
      %3525 = vst.msk [vmem:[%s2778 + $0xc8] sm:$0xff] %vm2101, %v3491
      %3526 = vst.msk [vmem:[%s2778 + $0xe0] sm:$0xff] %vm2101, %v3493
      %3527 = vst.msk [vmem:[%s2778 + $0xe8] sm:$0xff] %vm2101, %v3495
      %s3528 = smul.u32 8, %s21
      %p3529 = scmp.lt.s32.totalorder %s20, 1
      %s3530 = scalar_select %p3529, %s20, 1
      %p3531 = scmp.lt.s32.totalorder %s3528, 15
      %s3532 = scalar_select %p3531, %s3528, 15
      %s3533 = smul.addr %s3532, 4
      %s3534 = smul.addr %s3530, 64
      %s3535 = sadd.s32 %s3533, %s3534
      %s3536 = smul.addr %s3535, 8
      %s3537 = scalar_lea.vmem %s5, %s3536
      // Predicated region
      $region41: #{tpu_custom_call.1} parent=39 // pred_check
        %p3538 = pneg %p190
      $region42: #{tpu_custom_call.1} parent=39 // pred_check_branch
        %3540 = sbr.rel (%p3538) target = $region44
      $region43: #{tpu_custom_call.1} parent=39 // pred_region
        %s3541 = smul.u32 8, %s21
      $region44: #{tpu_custom_call.1} parent=39 // pred_fallthru
        _
    $region40: #{tpu_custom_call.1} parent=5 // pred_fallthru
      _
    %p3542 = scmp.le.s32.totalorder 2, %s11
    // Predicated region
    $region45: #{tpu_custom_call.1} parent=5 // pred_check
      %p3543 = pneg %p3542
    $region46: #{tpu_custom_call.1} parent=5 // pred_check_branch
      %3545 = sbr.rel (%p3543) target = $region48
    $region47: #{tpu_custom_call.1} parent=5 // pred_region
      %s3546 = ssub.s32 %s11, 2
      // Predicated region
      $region49: #{tpu_custom_call.1} parent=47 // pred_check
        %p3547 = pneg %p196
      $region50: #{tpu_custom_call.1} parent=47 // pred_check_branch
        %3549 = sbr.rel (%p3547) target = $region52
      $region51: #{tpu_custom_call.1} parent=47 // pred_region
        %s3550 = smul.u32 8, %s23
        %p3551 = scmp.lt.s32.totalorder %s22, 1
        %s3552 = scalar_select %p3551, %s22, 1
        %p3553 = scmp.lt.s32.totalorder %s3550, 15
        %s3554 = scalar_select %p3553, %s3550, 15
        %s3555 = smul.addr %s3554, 4
        %s3556 = smul.addr %s3552, 64
        %s3557 = sadd.s32 %s3555, %s3556
        %s3558 = smul.addr %s3557, 8
        %s3559 = scalar_lea.vmem %s5, %s3558
      $region52: #{tpu_custom_call.1} parent=47 // pred_fallthru
        _
    $region48: #{tpu_custom_call.1} parent=5 // pred_fallthru
      _
  $region6: #{tpu_custom_call.1} parent=0 // loop_footer
    %s15 = sadd.s32 1, %s11
  $region7: #{tpu_custom_call.1} parent=0 // loop_footer_branch
    %10 = sbr.rel target = $region3
  $region8: #{tpu_custom_call.1} parent=0 // loop_exit
    _

</llo_original>
